<compile_context>
chip_gen: v5e
topology: v5e:2x2
jax: 0.10.0
libtpu: 0.0.40
codegen_flags: <defaults>
</compile_context>

<pallas_src>
import functools
import math

import jax
import jax.numpy as jnp
from jax import lax
from jax.experimental import pallas as pl
from jax.experimental.pallas import tpu as pltpu

# ---- model hyper-parameters (match Block(dim) with MoHAttention defaults) ----
DIM = 64
NUM_HEADS = 8            # MoHAttention default (Block does not override it)
HEAD_DIM = DIM // NUM_HEADS
SHARED_HEAD = 2
ROUTED_HEAD = 6
MLP_RATIO = 4.0
MLP_HIDDEN = int(DIM * MLP_RATIO)
LN_EPS = 1e-5
SCALE = HEAD_DIM ** -0.5

# fused (qkv + gating) weight column layout, padded to a lane multiple
G_ROUT = 3 * DIM                        # 192 : routed-gate logits (wg),   width 6
G_W0 = G_ROUT + ROUTED_HEAD             # 198 : shared/routed mix (wg_0),  width 2
G_SH = G_W0 + 2                         # 200 : shared-gate logits (wg_1), width 2
FUSED_WIDTH = 256                       # 202 padded to 2 * 128 lanes


def _softmax_f32(x):
    x = x.astype(jnp.float32)
    m = jnp.max(x, axis=-1, keepdims=True)
    e = jnp.exp(x - m)
    return e * pl.reciprocal(jnp.sum(e, axis=-1, keepdims=True), approx=True)


def _layernorm(x, gamma, beta):
    mu = jnp.mean(x, axis=-1, keepdims=True)
    var = jnp.mean(jnp.square(x - mu), axis=-1, keepdims=True)
    return (x - mu) * lax.rsqrt(var + LN_EPS) * gamma + beta


def _gelu_exact(x):
    # PyTorch nn.GELU default: 0.5 * x * (1 + erf(x / sqrt(2)))
    return 0.5 * x * (1.0 + lax.erf(x * (1.0 / math.sqrt(2.0))))


def block_kernel(x_ref,
                 ln1g_ref, ln1b_ref, ln2g_ref, ln2b_ref,
                 fw_ref,                       # fused qkv + gating weight (bf16)
                 projw_ref, projb_ref,         # 2*proj_w (bf16), 2*proj_b (f32)
                 fc1w_ref, fc1b_ref, fc2w_ref, fc2b_ref,
                 out_ref, attn_ref, *, seq_len):
    H, HD, C = NUM_HEADS, HEAD_DIM, DIM
    N = seq_len
    R = x_ref.shape[0]                 # rows in this grid step (= Bt * N)
    Bt = R // N
    bf16 = jnp.bfloat16

    x = x_ref[...]                                                # (R, C) f32

    # ---------------- norm1 ----------------
    xn = _layernorm(x, ln1g_ref[...], ln1b_ref[...])              # (R, C) == `_x`

    # ------- fused QKV + gating projection (one big MXU matmul, bf16) -------
    fused = jnp.dot(xn.astype(bf16), fw_ref[...],
                    preferred_element_type=jnp.float32)           # (R, 256) f32
    fused3 = fused.reshape(Bt, N, FUSED_WIDTH)                    # leading split only

    # ---------------- MoH gating (f32) ----------------
    eps = jnp.finfo(jnp.float32).eps
    # routed gates: softmax over 6 experts; topk with k == num_experts selects
    # every expert, so the one-hot mask is all ones (renorm kept for fidelity).
    g_rout = _softmax_f32(fused3[:, :, G_ROUT:G_ROUT + ROUTED_HEAD])      # (Bt,N,6)
    denom = jnp.maximum(jnp.sum(g_rout, axis=-1, keepdims=True), eps)
    g_rout = g_rout * pl.reciprocal(denom, approx=True) * float(ROUTED_HEAD)

    w0 = _softmax_f32(fused3[:, :, G_W0:G_W0 + 2]) * 2.0                   # (Bt,N,2)
    g_sh = _softmax_f32(fused3[:, :, G_SH:G_SH + SHARED_HEAD]) * float(SHARED_HEAD)

    g_sh = w0[:, :, 0:1] * g_sh
    g_rout = w0[:, :, 1:2] * g_rout
    gates = jnp.concatenate([g_sh, g_rout], axis=-1)              # (Bt, N, H)

    # ---------------- attention (per head, batched over Bt) ----------------
    # q columns were pre-scaled by `scale` host-side.
    qkv3 = fused3[:, :, :3 * C]                                   # (Bt, N, 3C)
    attn_blocks = []
    head_outs = []
    for h in range(H):
        q_h = qkv3[:, :, h * HD:(h + 1) * HD].astype(bf16)                # (Bt,N,HD)
        k_h = qkv3[:, :, C + h * HD:C + (h + 1) * HD].astype(bf16)
        v_h = qkv3[:, :, 2 * C + h * HD:2 * C + (h + 1) * HD].astype(bf16)
        s = jnp.einsum('bnd,bmd->bnm', q_h, k_h,
                       preferred_element_type=jnp.float32)                # (Bt,N,N)
        p = _softmax_f32(s)
        attn_blocks.append(p)
        o = jnp.einsum('bnm,bmd->bnd', p.astype(bf16), v_h,
                       preferred_element_type=jnp.float32)                # (Bt,N,HD)
        head_outs.append(o * gates[:, :, h:h + 1])                # per-head gate

    # one lane-dense store of all attention maps: (R, H*N) == (R, 128)
    attn_ref[...] = jnp.concatenate(attn_blocks, axis=-1).reshape(R, H * N)

    xo = jnp.concatenate(head_outs, axis=-1).reshape(R, C)        # (R, C)

    # output projection; 2x from `x = x + drop_path(x)` folded into proj_w/b
    y = jnp.dot(xo.astype(bf16), projw_ref[...],
                preferred_element_type=jnp.float32) + projb_ref[...]      # (R, C)

    # ---------------- norm2 + MLP + residual ----------------
    yn = _layernorm(y, ln2g_ref[...], ln2b_ref[...])
    h1 = jnp.dot(yn.astype(bf16), fc1w_ref[...],
                 preferred_element_type=jnp.float32) + fc1b_ref[...]
    h1 = _gelu_exact(h1)
    mlp = jnp.dot(h1.astype(bf16), fc2w_ref[...],
                  preferred_element_type=jnp.float32) + fc2b_ref[...]
    out_ref[...] = y + mlp


def _pick_batch_tile(B, N, target_rows=256):
    bt = max(1, min(B, target_rows // max(N, 1)))
    while B % bt != 0:
        bt -= 1
    return bt


def block_forward(x, params):
    B, N, C = x.shape
    H = NUM_HEADS
    bt = _pick_batch_tile(B, N)
    rt = bt * N                               # rows per grid step
    grid = (B // bt,)

    x2 = x.reshape(B * N, C)

    def rep(shape):
        nd = len(shape)
        return pl.BlockSpec(shape, lambda i, _nd=nd: (0,) * _nd)

    in_specs = [
        pl.BlockSpec((rt, C), lambda i: (i, 0)),          # x (flattened rows)
        rep((1, C)), rep((1, C)), rep((1, C)), rep((1, C)),   # ln1 g/b, ln2 g/b
        rep((C, FUSED_WIDTH)),                            # fused qkv + gates (bf16)
        rep((C, C)), rep((1, C)),                         # 2*proj w (bf16), 2*proj b
        rep((C, MLP_HIDDEN)), rep((1, MLP_HIDDEN)),       # fc1 w (bf16), b
        rep((MLP_HIDDEN, C)), rep((1, C)),                # fc2 w (bf16), b
    ]
    out_specs = (pl.BlockSpec((rt, C), lambda i: (i, 0)),
                 pl.BlockSpec((rt, H * N), lambda i: (i, 0)))
    out_shape = (jax.ShapeDtypeStruct((B * N, C), jnp.float32),
                 jax.ShapeDtypeStruct((B * N, H * N), jnp.float32))

    out2, attn2 = pl.pallas_call(
        functools.partial(block_kernel, seq_len=N),
        grid=grid,
        in_specs=in_specs,
        out_specs=out_specs,
        out_shape=out_shape,
        compiler_params=pltpu.CompilerParams(
            dimension_semantics=("parallel",)),
    )(x2, *params)

    out = out2.reshape(B, N, C)
    # recover the PyTorch (B, H, N, N) attention-map layout from the
    # lane-dense (B*N, H*N) slab written by the kernel.
    attn = attn2.reshape(B, N, H, N).transpose(0, 2, 1, 3)
    return out, attn


def init_params(key):
    """Create PyTorch-equivalent raw weights, then fold/fuse them for the kernel."""
    ks = jax.random.split(key, 8)
    std = 0.02
    C, H, HD, HID = DIM, NUM_HEADS, HEAD_DIM, MLP_HIDDEN

    ln1_g = jnp.ones((1, C), jnp.float32)
    ln1_b = jnp.zeros((1, C), jnp.float32)
    ln2_g = jnp.ones((1, C), jnp.float32)
    ln2_b = jnp.zeros((1, C), jnp.float32)
    qkv_w = jax.random.normal(ks[0], (C, 3 * H * HD), jnp.float32) * std
    wg_w = jax.random.normal(ks[1], (C, H - SHARED_HEAD), jnp.float32) * std
    wg0_w = jax.random.normal(ks[2], (C, 2), jnp.float32) * std
    wg1_w = jax.random.normal(ks[3], (C, SHARED_HEAD), jnp.float32) * std
    proj_w = jax.random.normal(ks[4], (H * HD, C), jnp.float32) * std
    proj_b = jnp.zeros((1, C), jnp.float32)
    fc1_w = jax.random.normal(ks[5], (C, HID), jnp.float32) * std
    fc1_b = jnp.zeros((1, HID), jnp.float32)
    fc2_w = jax.random.normal(ks[6], (HID, C), jnp.float32) * std
    fc2_b = jnp.zeros((1, C), jnp.float32)

    # ---- fold q-scale into the qkv weight (q = first C output columns) ----
    qkv_scaled = qkv_w.at[:, :C].multiply(SCALE)

    # ---- fuse qkv + wg + wg_0 + wg_1 into one lane-padded (C, 256) weight ----
    fused_w = jnp.zeros((C, FUSED_WIDTH), jnp.float32)
    fused_w = fused_w.at[:, 0:3 * C].set(qkv_scaled)
    fused_w = fused_w.at[:, G_ROUT:G_ROUT + ROUTED_HEAD].set(wg_w)
    fused_w = fused_w.at[:, G_W0:G_W0 + 2].set(wg0_w)
    fused_w = fused_w.at[:, G_SH:G_SH + SHARED_HEAD].set(wg1_w)

    # ---- fold drop_path doubling (x = x + drop_path(x)) into proj ----
    proj_w2 = 2.0 * proj_w
    proj_b2 = 2.0 * proj_b

    mm = jnp.bfloat16     # MXU operands in bf16; biases / LN params stay f32
    return (ln1_g, ln1_b, ln2_g, ln2_b,
            fused_w.astype(mm),
            proj_w2.astype(mm), proj_b2,
            fc1_w.astype(mm), fc1_b,
            fc2_w.astype(mm), fc2_b)


if __name__ == "__main__":
    key = jax.random.PRNGKey(0)
    k_x, k_p = jax.random.split(key)
    B, N = 2, 16
    x = jax.random.normal(k_x, (B, N, DIM), jnp.float32)
    params = init_params(k_p)

    out, attn = block_forward(x, params)
    jax.block_until_ready(out)
    jax.block_until_ready(attn)
    assert out.shape == (B, N, DIM)
    assert attn.shape == (B, NUM_HEADS, N, N)
    print("KERNEL_OK")
</pallas_src>

<mosaic_0001>
module attributes {stable_mosaic.version = 11 : i64} {
  func.func @block_kernel(%arg0: i32, %arg1: memref<32x64xf32, #tpu.memory_space<vmem>>, %arg2: memref<1x64xf32, #tpu.memory_space<vmem>>, %arg3: memref<1x64xf32, #tpu.memory_space<vmem>>, %arg4: memref<1x64xf32, #tpu.memory_space<vmem>>, %arg5: memref<1x64xf32, #tpu.memory_space<vmem>>, %arg6: memref<64x256xbf16, #tpu.memory_space<vmem>>, %arg7: memref<64x64xbf16, #tpu.memory_space<vmem>>, %arg8: memref<1x64xf32, #tpu.memory_space<vmem>>, %arg9: memref<64x256xbf16, #tpu.memory_space<vmem>>, %arg10: memref<1x256xf32, #tpu.memory_space<vmem>>, %arg11: memref<256x64xbf16, #tpu.memory_space<vmem>>, %arg12: memref<1x64xf32, #tpu.memory_space<vmem>>, %arg13: memref<32x64xf32, #tpu.memory_space<vmem>>, %arg14: memref<32x128xf32, #tpu.memory_space<vmem>>) attributes {dimension_semantics = [#tpu.dimension_semantics<parallel>], iteration_bounds = array<i64: 1>, scalar_prefetch = 0 : i64, scratch_operands = 0 : i64, tpu.core_type = #tpu.core_type<tc>, window_params = [{transform_indices = @transform_0, window_bounds = array<i64: 32, 64>}, {pipeline_mode = #tpu.pipeline_mode<synchronous>, transform_indices = @transform_1, window_bounds = array<i64: 1, 64>}, {pipeline_mode = #tpu.pipeline_mode<synchronous>, transform_indices = @transform_2, window_bounds = array<i64: 1, 64>}, {pipeline_mode = #tpu.pipeline_mode<synchronous>, transform_indices = @transform_3, window_bounds = array<i64: 1, 64>}, {pipeline_mode = #tpu.pipeline_mode<synchronous>, transform_indices = @transform_4, window_bounds = array<i64: 1, 64>}, {pipeline_mode = #tpu.pipeline_mode<synchronous>, transform_indices = @transform_5, window_bounds = array<i64: 64, 256>}, {pipeline_mode = #tpu.pipeline_mode<synchronous>, transform_indices = @transform_6, window_bounds = array<i64: 64, 64>}, {pipeline_mode = #tpu.pipeline_mode<synchronous>, transform_indices = @transform_7, window_bounds = array<i64: 1, 64>}, {pipeline_mode = #tpu.pipeline_mode<synchronous>, transform_indices = @transform_8, window_bounds = array<i64: 64, 256>}, {pipeline_mode = #tpu.pipeline_mode<synchronous>, transform_indices = @transform_9, window_bounds = array<i64: 1, 256>}, {pipeline_mode = #tpu.pipeline_mode<synchronous>, transform_indices = @transform_10, window_bounds = array<i64: 256, 64>}, {pipeline_mode = #tpu.pipeline_mode<synchronous>, transform_indices = @transform_11, window_bounds = array<i64: 1, 64>}, {transform_indices = @transform_12, window_bounds = array<i64: 32, 64>}, {transform_indices = @transform_13, window_bounds = array<i64: 32, 128>}]} {
    %c0 = arith.constant 0 : index
    %c0_0 = arith.constant 0 : index
    %0 = vector.load %arg1[%c0, %c0_0] : memref<32x64xf32, #tpu.memory_space<vmem>>, vector<32x64xf32>
    %c0_1 = arith.constant 0 : index
    %c0_2 = arith.constant 0 : index
    %1 = vector.load %arg2[%c0_1, %c0_2] : memref<1x64xf32, #tpu.memory_space<vmem>>, vector<1x64xf32>
    %c0_3 = arith.constant 0 : index
    %c0_4 = arith.constant 0 : index
    %2 = vector.load %arg3[%c0_3, %c0_4] : memref<1x64xf32, #tpu.memory_space<vmem>>, vector<1x64xf32>
    %cst = arith.constant dense<0.000000e+00> : vector<32xf32>
    %3 = vector.multi_reduction <add>, %0, %cst [1] : vector<32x64xf32> to vector<32xf32>
    %4 = vector.shape_cast %3 : vector<32xf32> to vector<32x1xf32>
    %cst_5 = arith.constant 6.400000e+01 : f32
    %5 = vector.broadcast %cst_5 : f32 to vector<32x1xf32>
    %6 = arith.divf %4, %5 : vector<32x1xf32>
    %7 = vector.broadcast %6 : vector<32x1xf32> to vector<32x64xf32>
    %8 = arith.subf %0, %7 : vector<32x64xf32>
    %9 = arith.mulf %8, %8 : vector<32x64xf32>
    %cst_6 = arith.constant dense<0.000000e+00> : vector<32xf32>
    %10 = vector.multi_reduction <add>, %9, %cst_6 [1] : vector<32x64xf32> to vector<32xf32>
    %11 = vector.shape_cast %10 : vector<32xf32> to vector<32x1xf32>
    %cst_7 = arith.constant 6.400000e+01 : f32
    %12 = vector.broadcast %cst_7 : f32 to vector<32x1xf32>
    %13 = arith.divf %11, %12 : vector<32x1xf32>
    %14 = vector.broadcast %6 : vector<32x1xf32> to vector<32x64xf32>
    %15 = arith.subf %0, %14 : vector<32x64xf32>
    %cst_8 = arith.constant 9.99999974E-6 : f32
    %16 = vector.broadcast %cst_8 : f32 to vector<32x1xf32>
    %17 = arith.addf %13, %16 : vector<32x1xf32>
    %18 = math.rsqrt %17 : vector<32x1xf32>
    %19 = vector.broadcast %18 : vector<32x1xf32> to vector<32x64xf32>
    %20 = arith.mulf %15, %19 : vector<32x64xf32>
    %21 = vector.broadcast %1 : vector<1x64xf32> to vector<32x64xf32>
    %22 = arith.mulf %20, %21 : vector<32x64xf32>
    %23 = vector.broadcast %2 : vector<1x64xf32> to vector<32x64xf32>
    %24 = arith.addf %22, %23 : vector<32x64xf32>
    %25 = arith.truncf %24 : vector<32x64xf32> to vector<32x64xbf16>
    %c0_9 = arith.constant 0 : index
    %c0_10 = arith.constant 0 : index
    %26 = vector.load %arg6[%c0_9, %c0_10] : memref<64x256xbf16, #tpu.memory_space<vmem>>, vector<64x256xbf16>
    %cst_11 = arith.constant dense<0.000000e+00> : vector<32x256xf32>
    %27 = tpu.matmul %25, %26, %cst_11 {dimension_numbers = #tpu.dot_dimension_numbers<[1], [0], [0], [1], [0, 0, 1, 1], [], []>} : vector<32x64xbf16>, vector<64x256xbf16>, vector<32x256xf32> -> vector<32x256xf32>
    %28 = vector.shape_cast %27 : vector<32x256xf32> to vector<2x16x256xf32>
    %29 = vector.extract_strided_slice %28 {offsets = [0, 0, 192], sizes = [2, 16, 6], strides = [1, 1, 1]} : vector<2x16x256xf32> to vector<2x16x6xf32>
    %cst_12 = arith.constant dense<0xFF800000> : vector<2x16xf32>
    %30 = vector.multi_reduction <maximumf>, %29, %cst_12 [2] : vector<2x16x6xf32> to vector<2x16xf32>
    %31 = vector.shape_cast %30 : vector<2x16xf32> to vector<2x16x1xf32>
    %32 = vector.broadcast %31 : vector<2x16x1xf32> to vector<2x16x6xf32>
    %33 = arith.subf %29, %32 : vector<2x16x6xf32>
    %34 = math.exp %33 : vector<2x16x6xf32>
    %cst_13 = arith.constant dense<0.000000e+00> : vector<2x16xf32>
    %35 = vector.multi_reduction <add>, %34, %cst_13 [2] : vector<2x16x6xf32> to vector<2x16xf32>
    %36 = vector.shape_cast %35 : vector<2x16xf32> to vector<2x16x1xf32>
    %37 = tpu.reciprocal %36 {approx = true} : vector<2x16x1xf32> -> vector<2x16x1xf32>
    %38 = vector.broadcast %37 : vector<2x16x1xf32> to vector<2x16x6xf32>
    %39 = arith.mulf %34, %38 : vector<2x16x6xf32>
    %cst_14 = arith.constant dense<0.000000e+00> : vector<2x16xf32>
    %40 = vector.multi_reduction <add>, %39, %cst_14 [2] : vector<2x16x6xf32> to vector<2x16xf32>
    %41 = vector.shape_cast %40 : vector<2x16xf32> to vector<2x16x1xf32>
    %cst_15 = arith.constant 1.1920929E-7 : f32
    %42 = vector.broadcast %cst_15 : f32 to vector<2x16x1xf32>
    %43 = arith.maximumf %41, %42 : vector<2x16x1xf32>
    %44 = tpu.reciprocal %43 {approx = true} : vector<2x16x1xf32> -> vector<2x16x1xf32>
    %45 = vector.broadcast %44 : vector<2x16x1xf32> to vector<2x16x6xf32>
    %46 = arith.mulf %39, %45 : vector<2x16x6xf32>
    %cst_16 = arith.constant 6.000000e+00 : f32
    %47 = vector.broadcast %cst_16 : f32 to vector<2x16x6xf32>
    %48 = arith.mulf %46, %47 : vector<2x16x6xf32>
    %49 = vector.extract_strided_slice %28 {offsets = [0, 0, 198], sizes = [2, 16, 2], strides = [1, 1, 1]} : vector<2x16x256xf32> to vector<2x16x2xf32>
    %cst_17 = arith.constant dense<0xFF800000> : vector<2x16xf32>
    %50 = vector.multi_reduction <maximumf>, %49, %cst_17 [2] : vector<2x16x2xf32> to vector<2x16xf32>
    %51 = vector.shape_cast %50 : vector<2x16xf32> to vector<2x16x1xf32>
    %52 = vector.broadcast %51 : vector<2x16x1xf32> to vector<2x16x2xf32>
    %53 = arith.subf %49, %52 : vector<2x16x2xf32>
    %54 = math.exp %53 : vector<2x16x2xf32>
    %cst_18 = arith.constant dense<0.000000e+00> : vector<2x16xf32>
    %55 = vector.multi_reduction <add>, %54, %cst_18 [2] : vector<2x16x2xf32> to vector<2x16xf32>
    %56 = vector.shape_cast %55 : vector<2x16xf32> to vector<2x16x1xf32>
    %57 = tpu.reciprocal %56 {approx = true} : vector<2x16x1xf32> -> vector<2x16x1xf32>
    %58 = vector.broadcast %57 : vector<2x16x1xf32> to vector<2x16x2xf32>
    %59 = arith.mulf %54, %58 : vector<2x16x2xf32>
    %cst_19 = arith.constant 2.000000e+00 : f32
    %60 = vector.broadcast %cst_19 : f32 to vector<2x16x2xf32>
    %61 = arith.mulf %59, %60 : vector<2x16x2xf32>
    %62 = vector.extract_strided_slice %28 {offsets = [0, 0, 200], sizes = [2, 16, 2], strides = [1, 1, 1]} : vector<2x16x256xf32> to vector<2x16x2xf32>
    %cst_20 = arith.constant dense<0xFF800000> : vector<2x16xf32>
    %63 = vector.multi_reduction <maximumf>, %62, %cst_20 [2] : vector<2x16x2xf32> to vector<2x16xf32>
    %64 = vector.shape_cast %63 : vector<2x16xf32> to vector<2x16x1xf32>
    %65 = vector.broadcast %64 : vector<2x16x1xf32> to vector<2x16x2xf32>
    %66 = arith.subf %62, %65 : vector<2x16x2xf32>
    %67 = math.exp %66 : vector<2x16x2xf32>
    %cst_21 = arith.constant dense<0.000000e+00> : vector<2x16xf32>
    %68 = vector.multi_reduction <add>, %67, %cst_21 [2] : vector<2x16x2xf32> to vector<2x16xf32>
    %69 = vector.shape_cast %68 : vector<2x16xf32> to vector<2x16x1xf32>
    %70 = tpu.reciprocal %69 {approx = true} : vector<2x16x1xf32> -> vector<2x16x1xf32>
    %71 = vector.broadcast %70 : vector<2x16x1xf32> to vector<2x16x2xf32>
    %72 = arith.mulf %67, %71 : vector<2x16x2xf32>
    %cst_22 = arith.constant 2.000000e+00 : f32
    %73 = vector.broadcast %cst_22 : f32 to vector<2x16x2xf32>
    %74 = arith.mulf %72, %73 : vector<2x16x2xf32>
    %75 = vector.extract_strided_slice %61 {offsets = [0, 0, 0], sizes = [2, 16, 1], strides = [1, 1, 1]} : vector<2x16x2xf32> to vector<2x16x1xf32>
    %76 = vector.broadcast %75 : vector<2x16x1xf32> to vector<2x16x2xf32>
    %77 = arith.mulf %76, %74 : vector<2x16x2xf32>
    %78 = vector.extract_strided_slice %61 {offsets = [0, 0, 1], sizes = [2, 16, 1], strides = [1, 1, 1]} : vector<2x16x2xf32> to vector<2x16x1xf32>
    %79 = vector.broadcast %78 : vector<2x16x1xf32> to vector<2x16x6xf32>
    %80 = arith.mulf %79, %48 : vector<2x16x6xf32>
    %81 = tpu.concatenate %77, %80 in 2 : vector<2x16x2xf32>, vector<2x16x6xf32> -> vector<2x16x8xf32>
    %82 = vector.extract_strided_slice %28 {offsets = [0, 0, 0], sizes = [2, 16, 192], strides = [1, 1, 1]} : vector<2x16x256xf32> to vector<2x16x192xf32>
    %83 = vector.extract_strided_slice %82 {offsets = [0, 0, 0], sizes = [2, 16, 8], strides = [1, 1, 1]} : vector<2x16x192xf32> to vector<2x16x8xf32>
    %84 = arith.truncf %83 : vector<2x16x8xf32> to vector<2x16x8xbf16>
    %85 = vector.extract_strided_slice %82 {offsets = [0, 0, 64], sizes = [2, 16, 8], strides = [1, 1, 1]} : vector<2x16x192xf32> to vector<2x16x8xf32>
    %86 = arith.truncf %85 : vector<2x16x8xf32> to vector<2x16x8xbf16>
    %87 = vector.extract_strided_slice %82 {offsets = [0, 0, 128], sizes = [2, 16, 8], strides = [1, 1, 1]} : vector<2x16x192xf32> to vector<2x16x8xf32>
    %88 = arith.truncf %87 : vector<2x16x8xf32> to vector<2x16x8xbf16>
    "tpu.trace_start"() <{level = 10 : i32, message = "bnd,bmd->bnm"}> : () -> ()
    %cst_23 = arith.constant dense<0.000000e+00> : vector<2x16x16xf32>
    %89 = tpu.matmul %84, %86, %cst_23 {dimension_numbers = #tpu.dot_dimension_numbers<[2], [2], [1], [1], [0, 0, 0, 1, 1, 1], [0], [0]>} : vector<2x16x8xbf16>, vector<2x16x8xbf16>, vector<2x16x16xf32> -> vector<2x16x16xf32>
    "tpu.trace_stop"() : () -> ()
    %cst_24 = arith.constant dense<0xFF800000> : vector<2x16xf32>
    %90 = vector.multi_reduction <maximumf>, %89, %cst_24 [2] : vector<2x16x16xf32> to vector<2x16xf32>
    %91 = vector.shape_cast %90 : vector<2x16xf32> to vector<2x16x1xf32>
    %92 = vector.broadcast %91 : vector<2x16x1xf32> to vector<2x16x16xf32>
    %93 = arith.subf %89, %92 : vector<2x16x16xf32>
    %94 = math.exp %93 : vector<2x16x16xf32>
    %cst_25 = arith.constant dense<0.000000e+00> : vector<2x16xf32>
    %95 = vector.multi_reduction <add>, %94, %cst_25 [2] : vector<2x16x16xf32> to vector<2x16xf32>
    %96 = vector.shape_cast %95 : vector<2x16xf32> to vector<2x16x1xf32>
    %97 = tpu.reciprocal %96 {approx = true} : vector<2x16x1xf32> -> vector<2x16x1xf32>
    %98 = vector.broadcast %97 : vector<2x16x1xf32> to vector<2x16x16xf32>
    %99 = arith.mulf %94, %98 : vector<2x16x16xf32>
    %100 = arith.truncf %99 : vector<2x16x16xf32> to vector<2x16x16xbf16>
    "tpu.trace_start"() <{level = 10 : i32, message = "bnm,bmd->bnd"}> : () -> ()
    %cst_26 = arith.constant dense<0.000000e+00> : vector<2x16x8xf32>
    %101 = tpu.matmul %100, %88, %cst_26 {dimension_numbers = #tpu.dot_dimension_numbers<[2], [1], [1], [2], [0, 0, 0, 1, 1, 2], [0], [0]>} : vector<2x16x16xbf16>, vector<2x16x8xbf16>, vector<2x16x8xf32> -> vector<2x16x8xf32>
    "tpu.trace_stop"() : () -> ()
    %102 = vector.extract_strided_slice %81 {offsets = [0, 0, 0], sizes = [2, 16, 1], strides = [1, 1, 1]} : vector<2x16x8xf32> to vector<2x16x1xf32>
    %103 = vector.broadcast %102 : vector<2x16x1xf32> to vector<2x16x8xf32>
    %104 = arith.mulf %101, %103 : vector<2x16x8xf32>
    %105 = vector.extract_strided_slice %82 {offsets = [0, 0, 8], sizes = [2, 16, 8], strides = [1, 1, 1]} : vector<2x16x192xf32> to vector<2x16x8xf32>
    %106 = arith.truncf %105 : vector<2x16x8xf32> to vector<2x16x8xbf16>
    %107 = vector.extract_strided_slice %82 {offsets = [0, 0, 72], sizes = [2, 16, 8], strides = [1, 1, 1]} : vector<2x16x192xf32> to vector<2x16x8xf32>
    %108 = arith.truncf %107 : vector<2x16x8xf32> to vector<2x16x8xbf16>
    %109 = vector.extract_strided_slice %82 {offsets = [0, 0, 136], sizes = [2, 16, 8], strides = [1, 1, 1]} : vector<2x16x192xf32> to vector<2x16x8xf32>
    %110 = arith.truncf %109 : vector<2x16x8xf32> to vector<2x16x8xbf16>
    "tpu.trace_start"() <{level = 10 : i32, message = "bnd,bmd->bnm"}> : () -> ()
    %cst_27 = arith.constant dense<0.000000e+00> : vector<2x16x16xf32>
    %111 = tpu.matmul %106, %108, %cst_27 {dimension_numbers = #tpu.dot_dimension_numbers<[2], [2], [1], [1], [0, 0, 0, 1, 1, 1], [0], [0]>} : vector<2x16x8xbf16>, vector<2x16x8xbf16>, vector<2x16x16xf32> -> vector<2x16x16xf32>
    "tpu.trace_stop"() : () -> ()
    %cst_28 = arith.constant dense<0xFF800000> : vector<2x16xf32>
    %112 = vector.multi_reduction <maximumf>, %111, %cst_28 [2] : vector<2x16x16xf32> to vector<2x16xf32>
    %113 = vector.shape_cast %112 : vector<2x16xf32> to vector<2x16x1xf32>
    %114 = vector.broadcast %113 : vector<2x16x1xf32> to vector<2x16x16xf32>
    %115 = arith.subf %111, %114 : vector<2x16x16xf32>
    %116 = math.exp %115 : vector<2x16x16xf32>
    %cst_29 = arith.constant dense<0.000000e+00> : vector<2x16xf32>
    %117 = vector.multi_reduction <add>, %116, %cst_29 [2] : vector<2x16x16xf32> to vector<2x16xf32>
    %118 = vector.shape_cast %117 : vector<2x16xf32> to vector<2x16x1xf32>
    %119 = tpu.reciprocal %118 {approx = true} : vector<2x16x1xf32> -> vector<2x16x1xf32>
    %120 = vector.broadcast %119 : vector<2x16x1xf32> to vector<2x16x16xf32>
    %121 = arith.mulf %116, %120 : vector<2x16x16xf32>
    %122 = arith.truncf %121 : vector<2x16x16xf32> to vector<2x16x16xbf16>
    "tpu.trace_start"() <{level = 10 : i32, message = "bnm,bmd->bnd"}> : () -> ()
    %cst_30 = arith.constant dense<0.000000e+00> : vector<2x16x8xf32>
    %123 = tpu.matmul %122, %110, %cst_30 {dimension_numbers = #tpu.dot_dimension_numbers<[2], [1], [1], [2], [0, 0, 0, 1, 1, 2], [0], [0]>} : vector<2x16x16xbf16>, vector<2x16x8xbf16>, vector<2x16x8xf32> -> vector<2x16x8xf32>
    "tpu.trace_stop"() : () -> ()
    %124 = vector.extract_strided_slice %81 {offsets = [0, 0, 1], sizes = [2, 16, 1], strides = [1, 1, 1]} : vector<2x16x8xf32> to vector<2x16x1xf32>
    %125 = vector.broadcast %124 : vector<2x16x1xf32> to vector<2x16x8xf32>
    %126 = arith.mulf %123, %125 : vector<2x16x8xf32>
    %127 = vector.extract_strided_slice %82 {offsets = [0, 0, 16], sizes = [2, 16, 8], strides = [1, 1, 1]} : vector<2x16x192xf32> to vector<2x16x8xf32>
    %128 = arith.truncf %127 : vector<2x16x8xf32> to vector<2x16x8xbf16>
    %129 = vector.extract_strided_slice %82 {offsets = [0, 0, 80], sizes = [2, 16, 8], strides = [1, 1, 1]} : vector<2x16x192xf32> to vector<2x16x8xf32>
    %130 = arith.truncf %129 : vector<2x16x8xf32> to vector<2x16x8xbf16>
    %131 = vector.extract_strided_slice %82 {offsets = [0, 0, 144], sizes = [2, 16, 8], strides = [1, 1, 1]} : vector<2x16x192xf32> to vector<2x16x8xf32>
    %132 = arith.truncf %131 : vector<2x16x8xf32> to vector<2x16x8xbf16>
    "tpu.trace_start"() <{level = 10 : i32, message = "bnd,bmd->bnm"}> : () -> ()
    %cst_31 = arith.constant dense<0.000000e+00> : vector<2x16x16xf32>
    %133 = tpu.matmul %128, %130, %cst_31 {dimension_numbers = #tpu.dot_dimension_numbers<[2], [2], [1], [1], [0, 0, 0, 1, 1, 1], [0], [0]>} : vector<2x16x8xbf16>, vector<2x16x8xbf16>, vector<2x16x16xf32> -> vector<2x16x16xf32>
    "tpu.trace_stop"() : () -> ()
    %cst_32 = arith.constant dense<0xFF800000> : vector<2x16xf32>
    %134 = vector.multi_reduction <maximumf>, %133, %cst_32 [2] : vector<2x16x16xf32> to vector<2x16xf32>
    %135 = vector.shape_cast %134 : vector<2x16xf32> to vector<2x16x1xf32>
    %136 = vector.broadcast %135 : vector<2x16x1xf32> to vector<2x16x16xf32>
    %137 = arith.subf %133, %136 : vector<2x16x16xf32>
    %138 = math.exp %137 : vector<2x16x16xf32>
    %cst_33 = arith.constant dense<0.000000e+00> : vector<2x16xf32>
    %139 = vector.multi_reduction <add>, %138, %cst_33 [2] : vector<2x16x16xf32> to vector<2x16xf32>
    %140 = vector.shape_cast %139 : vector<2x16xf32> to vector<2x16x1xf32>
    %141 = tpu.reciprocal %140 {approx = true} : vector<2x16x1xf32> -> vector<2x16x1xf32>
    %142 = vector.broadcast %141 : vector<2x16x1xf32> to vector<2x16x16xf32>
    %143 = arith.mulf %138, %142 : vector<2x16x16xf32>
    %144 = arith.truncf %143 : vector<2x16x16xf32> to vector<2x16x16xbf16>
    "tpu.trace_start"() <{level = 10 : i32, message = "bnm,bmd->bnd"}> : () -> ()
    %cst_34 = arith.constant dense<0.000000e+00> : vector<2x16x8xf32>
    %145 = tpu.matmul %144, %132, %cst_34 {dimension_numbers = #tpu.dot_dimension_numbers<[2], [1], [1], [2], [0, 0, 0, 1, 1, 2], [0], [0]>} : vector<2x16x16xbf16>, vector<2x16x8xbf16>, vector<2x16x8xf32> -> vector<2x16x8xf32>
    "tpu.trace_stop"() : () -> ()
    %146 = vector.extract_strided_slice %81 {offsets = [0, 0, 2], sizes = [2, 16, 1], strides = [1, 1, 1]} : vector<2x16x8xf32> to vector<2x16x1xf32>
    %147 = vector.broadcast %146 : vector<2x16x1xf32> to vector<2x16x8xf32>
    %148 = arith.mulf %145, %147 : vector<2x16x8xf32>
    %149 = vector.extract_strided_slice %82 {offsets = [0, 0, 24], sizes = [2, 16, 8], strides = [1, 1, 1]} : vector<2x16x192xf32> to vector<2x16x8xf32>
    %150 = arith.truncf %149 : vector<2x16x8xf32> to vector<2x16x8xbf16>
    %151 = vector.extract_strided_slice %82 {offsets = [0, 0, 88], sizes = [2, 16, 8], strides = [1, 1, 1]} : vector<2x16x192xf32> to vector<2x16x8xf32>
    %152 = arith.truncf %151 : vector<2x16x8xf32> to vector<2x16x8xbf16>
    %153 = vector.extract_strided_slice %82 {offsets = [0, 0, 152], sizes = [2, 16, 8], strides = [1, 1, 1]} : vector<2x16x192xf32> to vector<2x16x8xf32>
    %154 = arith.truncf %153 : vector<2x16x8xf32> to vector<2x16x8xbf16>
    "tpu.trace_start"() <{level = 10 : i32, message = "bnd,bmd->bnm"}> : () -> ()
    %cst_35 = arith.constant dense<0.000000e+00> : vector<2x16x16xf32>
    %155 = tpu.matmul %150, %152, %cst_35 {dimension_numbers = #tpu.dot_dimension_numbers<[2], [2], [1], [1], [0, 0, 0, 1, 1, 1], [0], [0]>} : vector<2x16x8xbf16>, vector<2x16x8xbf16>, vector<2x16x16xf32> -> vector<2x16x16xf32>
    "tpu.trace_stop"() : () -> ()
    %cst_36 = arith.constant dense<0xFF800000> : vector<2x16xf32>
    %156 = vector.multi_reduction <maximumf>, %155, %cst_36 [2] : vector<2x16x16xf32> to vector<2x16xf32>
    %157 = vector.shape_cast %156 : vector<2x16xf32> to vector<2x16x1xf32>
    %158 = vector.broadcast %157 : vector<2x16x1xf32> to vector<2x16x16xf32>
    %159 = arith.subf %155, %158 : vector<2x16x16xf32>
    %160 = math.exp %159 : vector<2x16x16xf32>
    %cst_37 = arith.constant dense<0.000000e+00> : vector<2x16xf32>
    %161 = vector.multi_reduction <add>, %160, %cst_37 [2] : vector<2x16x16xf32> to vector<2x16xf32>
    %162 = vector.shape_cast %161 : vector<2x16xf32> to vector<2x16x1xf32>
    %163 = tpu.reciprocal %162 {approx = true} : vector<2x16x1xf32> -> vector<2x16x1xf32>
    %164 = vector.broadcast %163 : vector<2x16x1xf32> to vector<2x16x16xf32>
    %165 = arith.mulf %160, %164 : vector<2x16x16xf32>
    %166 = arith.truncf %165 : vector<2x16x16xf32> to vector<2x16x16xbf16>
    "tpu.trace_start"() <{level = 10 : i32, message = "bnm,bmd->bnd"}> : () -> ()
    %cst_38 = arith.constant dense<0.000000e+00> : vector<2x16x8xf32>
    %167 = tpu.matmul %166, %154, %cst_38 {dimension_numbers = #tpu.dot_dimension_numbers<[2], [1], [1], [2], [0, 0, 0, 1, 1, 2], [0], [0]>} : vector<2x16x16xbf16>, vector<2x16x8xbf16>, vector<2x16x8xf32> -> vector<2x16x8xf32>
    "tpu.trace_stop"() : () -> ()
    %168 = vector.extract_strided_slice %81 {offsets = [0, 0, 3], sizes = [2, 16, 1], strides = [1, 1, 1]} : vector<2x16x8xf32> to vector<2x16x1xf32>
    %169 = vector.broadcast %168 : vector<2x16x1xf32> to vector<2x16x8xf32>
    %170 = arith.mulf %167, %169 : vector<2x16x8xf32>
    %171 = vector.extract_strided_slice %82 {offsets = [0, 0, 32], sizes = [2, 16, 8], strides = [1, 1, 1]} : vector<2x16x192xf32> to vector<2x16x8xf32>
    %172 = arith.truncf %171 : vector<2x16x8xf32> to vector<2x16x8xbf16>
    %173 = vector.extract_strided_slice %82 {offsets = [0, 0, 96], sizes = [2, 16, 8], strides = [1, 1, 1]} : vector<2x16x192xf32> to vector<2x16x8xf32>
    %174 = arith.truncf %173 : vector<2x16x8xf32> to vector<2x16x8xbf16>
    %175 = vector.extract_strided_slice %82 {offsets = [0, 0, 160], sizes = [2, 16, 8], strides = [1, 1, 1]} : vector<2x16x192xf32> to vector<2x16x8xf32>
    %176 = arith.truncf %175 : vector<2x16x8xf32> to vector<2x16x8xbf16>
    "tpu.trace_start"() <{level = 10 : i32, message = "bnd,bmd->bnm"}> : () -> ()
    %cst_39 = arith.constant dense<0.000000e+00> : vector<2x16x16xf32>
    %177 = tpu.matmul %172, %174, %cst_39 {dimension_numbers = #tpu.dot_dimension_numbers<[2], [2], [1], [1], [0, 0, 0, 1, 1, 1], [0], [0]>} : vector<2x16x8xbf16>, vector<2x16x8xbf16>, vector<2x16x16xf32> -> vector<2x16x16xf32>
    "tpu.trace_stop"() : () -> ()
    %cst_40 = arith.constant dense<0xFF800000> : vector<2x16xf32>
    %178 = vector.multi_reduction <maximumf>, %177, %cst_40 [2] : vector<2x16x16xf32> to vector<2x16xf32>
    %179 = vector.shape_cast %178 : vector<2x16xf32> to vector<2x16x1xf32>
    %180 = vector.broadcast %179 : vector<2x16x1xf32> to vector<2x16x16xf32>
    %181 = arith.subf %177, %180 : vector<2x16x16xf32>
    %182 = math.exp %181 : vector<2x16x16xf32>
    %cst_41 = arith.constant dense<0.000000e+00> : vector<2x16xf32>
    %183 = vector.multi_reduction <add>, %182, %cst_41 [2] : vector<2x16x16xf32> to vector<2x16xf32>
    %184 = vector.shape_cast %183 : vector<2x16xf32> to vector<2x16x1xf32>
    %185 = tpu.reciprocal %184 {approx = true} : vector<2x16x1xf32> -> vector<2x16x1xf32>
    %186 = vector.broadcast %185 : vector<2x16x1xf32> to vector<2x16x16xf32>
    %187 = arith.mulf %182, %186 : vector<2x16x16xf32>
    %188 = arith.truncf %187 : vector<2x16x16xf32> to vector<2x16x16xbf16>
    "tpu.trace_start"() <{level = 10 : i32, message = "bnm,bmd->bnd"}> : () -> ()
    %cst_42 = arith.constant dense<0.000000e+00> : vector<2x16x8xf32>
    %189 = tpu.matmul %188, %176, %cst_42 {dimension_numbers = #tpu.dot_dimension_numbers<[2], [1], [1], [2], [0, 0, 0, 1, 1, 2], [0], [0]>} : vector<2x16x16xbf16>, vector<2x16x8xbf16>, vector<2x16x8xf32> -> vector<2x16x8xf32>
    "tpu.trace_stop"() : () -> ()
    %190 = vector.extract_strided_slice %81 {offsets = [0, 0, 4], sizes = [2, 16, 1], strides = [1, 1, 1]} : vector<2x16x8xf32> to vector<2x16x1xf32>
    %191 = vector.broadcast %190 : vector<2x16x1xf32> to vector<2x16x8xf32>
    %192 = arith.mulf %189, %191 : vector<2x16x8xf32>
    %193 = vector.extract_strided_slice %82 {offsets = [0, 0, 40], sizes = [2, 16, 8], strides = [1, 1, 1]} : vector<2x16x192xf32> to vector<2x16x8xf32>
    %194 = arith.truncf %193 : vector<2x16x8xf32> to vector<2x16x8xbf16>
    %195 = vector.extract_strided_slice %82 {offsets = [0, 0, 104], sizes = [2, 16, 8], strides = [1, 1, 1]} : vector<2x16x192xf32> to vector<2x16x8xf32>
    %196 = arith.truncf %195 : vector<2x16x8xf32> to vector<2x16x8xbf16>
    %197 = vector.extract_strided_slice %82 {offsets = [0, 0, 168], sizes = [2, 16, 8], strides = [1, 1, 1]} : vector<2x16x192xf32> to vector<2x16x8xf32>
    %198 = arith.truncf %197 : vector<2x16x8xf32> to vector<2x16x8xbf16>
    "tpu.trace_start"() <{level = 10 : i32, message = "bnd,bmd->bnm"}> : () -> ()
    %cst_43 = arith.constant dense<0.000000e+00> : vector<2x16x16xf32>
    %199 = tpu.matmul %194, %196, %cst_43 {dimension_numbers = #tpu.dot_dimension_numbers<[2], [2], [1], [1], [0, 0, 0, 1, 1, 1], [0], [0]>} : vector<2x16x8xbf16>, vector<2x16x8xbf16>, vector<2x16x16xf32> -> vector<2x16x16xf32>
    "tpu.trace_stop"() : () -> ()
    %cst_44 = arith.constant dense<0xFF800000> : vector<2x16xf32>
    %200 = vector.multi_reduction <maximumf>, %199, %cst_44 [2] : vector<2x16x16xf32> to vector<2x16xf32>
    %201 = vector.shape_cast %200 : vector<2x16xf32> to vector<2x16x1xf32>
    %202 = vector.broadcast %201 : vector<2x16x1xf32> to vector<2x16x16xf32>
    %203 = arith.subf %199, %202 : vector<2x16x16xf32>
    %204 = math.exp %203 : vector<2x16x16xf32>
    %cst_45 = arith.constant dense<0.000000e+00> : vector<2x16xf32>
    %205 = vector.multi_reduction <add>, %204, %cst_45 [2] : vector<2x16x16xf32> to vector<2x16xf32>
    %206 = vector.shape_cast %205 : vector<2x16xf32> to vector<2x16x1xf32>
    %207 = tpu.reciprocal %206 {approx = true} : vector<2x16x1xf32> -> vector<2x16x1xf32>
    %208 = vector.broadcast %207 : vector<2x16x1xf32> to vector<2x16x16xf32>
    %209 = arith.mulf %204, %208 : vector<2x16x16xf32>
    %210 = arith.truncf %209 : vector<2x16x16xf32> to vector<2x16x16xbf16>
    "tpu.trace_start"() <{level = 10 : i32, message = "bnm,bmd->bnd"}> : () -> ()
    %cst_46 = arith.constant dense<0.000000e+00> : vector<2x16x8xf32>
    %211 = tpu.matmul %210, %198, %cst_46 {dimension_numbers = #tpu.dot_dimension_numbers<[2], [1], [1], [2], [0, 0, 0, 1, 1, 2], [0], [0]>} : vector<2x16x16xbf16>, vector<2x16x8xbf16>, vector<2x16x8xf32> -> vector<2x16x8xf32>
    "tpu.trace_stop"() : () -> ()
    %212 = vector.extract_strided_slice %81 {offsets = [0, 0, 5], sizes = [2, 16, 1], strides = [1, 1, 1]} : vector<2x16x8xf32> to vector<2x16x1xf32>
    %213 = vector.broadcast %212 : vector<2x16x1xf32> to vector<2x16x8xf32>
    %214 = arith.mulf %211, %213 : vector<2x16x8xf32>
    %215 = vector.extract_strided_slice %82 {offsets = [0, 0, 48], sizes = [2, 16, 8], strides = [1, 1, 1]} : vector<2x16x192xf32> to vector<2x16x8xf32>
    %216 = arith.truncf %215 : vector<2x16x8xf32> to vector<2x16x8xbf16>
    %217 = vector.extract_strided_slice %82 {offsets = [0, 0, 112], sizes = [2, 16, 8], strides = [1, 1, 1]} : vector<2x16x192xf32> to vector<2x16x8xf32>
    %218 = arith.truncf %217 : vector<2x16x8xf32> to vector<2x16x8xbf16>
    %219 = vector.extract_strided_slice %82 {offsets = [0, 0, 176], sizes = [2, 16, 8], strides = [1, 1, 1]} : vector<2x16x192xf32> to vector<2x16x8xf32>
    %220 = arith.truncf %219 : vector<2x16x8xf32> to vector<2x16x8xbf16>
    "tpu.trace_start"() <{level = 10 : i32, message = "bnd,bmd->bnm"}> : () -> ()
    %cst_47 = arith.constant dense<0.000000e+00> : vector<2x16x16xf32>
    %221 = tpu.matmul %216, %218, %cst_47 {dimension_numbers = #tpu.dot_dimension_numbers<[2], [2], [1], [1], [0, 0, 0, 1, 1, 1], [0], [0]>} : vector<2x16x8xbf16>, vector<2x16x8xbf16>, vector<2x16x16xf32> -> vector<2x16x16xf32>
    "tpu.trace_stop"() : () -> ()
    %cst_48 = arith.constant dense<0xFF800000> : vector<2x16xf32>
    %222 = vector.multi_reduction <maximumf>, %221, %cst_48 [2] : vector<2x16x16xf32> to vector<2x16xf32>
    %223 = vector.shape_cast %222 : vector<2x16xf32> to vector<2x16x1xf32>
    %224 = vector.broadcast %223 : vector<2x16x1xf32> to vector<2x16x16xf32>
    %225 = arith.subf %221, %224 : vector<2x16x16xf32>
    %226 = math.exp %225 : vector<2x16x16xf32>
    %cst_49 = arith.constant dense<0.000000e+00> : vector<2x16xf32>
    %227 = vector.multi_reduction <add>, %226, %cst_49 [2] : vector<2x16x16xf32> to vector<2x16xf32>
    %228 = vector.shape_cast %227 : vector<2x16xf32> to vector<2x16x1xf32>
    %229 = tpu.reciprocal %228 {approx = true} : vector<2x16x1xf32> -> vector<2x16x1xf32>
    %230 = vector.broadcast %229 : vector<2x16x1xf32> to vector<2x16x16xf32>
    %231 = arith.mulf %226, %230 : vector<2x16x16xf32>
    %232 = arith.truncf %231 : vector<2x16x16xf32> to vector<2x16x16xbf16>
    "tpu.trace_start"() <{level = 10 : i32, message = "bnm,bmd->bnd"}> : () -> ()
    %cst_50 = arith.constant dense<0.000000e+00> : vector<2x16x8xf32>
    %233 = tpu.matmul %232, %220, %cst_50 {dimension_numbers = #tpu.dot_dimension_numbers<[2], [1], [1], [2], [0, 0, 0, 1, 1, 2], [0], [0]>} : vector<2x16x16xbf16>, vector<2x16x8xbf16>, vector<2x16x8xf32> -> vector<2x16x8xf32>
    "tpu.trace_stop"() : () -> ()
    %234 = vector.extract_strided_slice %81 {offsets = [0, 0, 6], sizes = [2, 16, 1], strides = [1, 1, 1]} : vector<2x16x8xf32> to vector<2x16x1xf32>
    %235 = vector.broadcast %234 : vector<2x16x1xf32> to vector<2x16x8xf32>
    %236 = arith.mulf %233, %235 : vector<2x16x8xf32>
    %237 = vector.extract_strided_slice %82 {offsets = [0, 0, 56], sizes = [2, 16, 8], strides = [1, 1, 1]} : vector<2x16x192xf32> to vector<2x16x8xf32>
    %238 = arith.truncf %237 : vector<2x16x8xf32> to vector<2x16x8xbf16>
    %239 = vector.extract_strided_slice %82 {offsets = [0, 0, 120], sizes = [2, 16, 8], strides = [1, 1, 1]} : vector<2x16x192xf32> to vector<2x16x8xf32>
    %240 = arith.truncf %239 : vector<2x16x8xf32> to vector<2x16x8xbf16>
    %241 = vector.extract_strided_slice %82 {offsets = [0, 0, 184], sizes = [2, 16, 8], strides = [1, 1, 1]} : vector<2x16x192xf32> to vector<2x16x8xf32>
    %242 = arith.truncf %241 : vector<2x16x8xf32> to vector<2x16x8xbf16>
    "tpu.trace_start"() <{level = 10 : i32, message = "bnd,bmd->bnm"}> : () -> ()
    %cst_51 = arith.constant dense<0.000000e+00> : vector<2x16x16xf32>
    %243 = tpu.matmul %238, %240, %cst_51 {dimension_numbers = #tpu.dot_dimension_numbers<[2], [2], [1], [1], [0, 0, 0, 1, 1, 1], [0], [0]>} : vector<2x16x8xbf16>, vector<2x16x8xbf16>, vector<2x16x16xf32> -> vector<2x16x16xf32>
    "tpu.trace_stop"() : () -> ()
    %cst_52 = arith.constant dense<0xFF800000> : vector<2x16xf32>
    %244 = vector.multi_reduction <maximumf>, %243, %cst_52 [2] : vector<2x16x16xf32> to vector<2x16xf32>
    %245 = vector.shape_cast %244 : vector<2x16xf32> to vector<2x16x1xf32>
    %246 = vector.broadcast %245 : vector<2x16x1xf32> to vector<2x16x16xf32>
    %247 = arith.subf %243, %246 : vector<2x16x16xf32>
    %248 = math.exp %247 : vector<2x16x16xf32>
    %cst_53 = arith.constant dense<0.000000e+00> : vector<2x16xf32>
    %249 = vector.multi_reduction <add>, %248, %cst_53 [2] : vector<2x16x16xf32> to vector<2x16xf32>
    %250 = vector.shape_cast %249 : vector<2x16xf32> to vector<2x16x1xf32>
    %251 = tpu.reciprocal %250 {approx = true} : vector<2x16x1xf32> -> vector<2x16x1xf32>
    %252 = vector.broadcast %251 : vector<2x16x1xf32> to vector<2x16x16xf32>
    %253 = arith.mulf %248, %252 : vector<2x16x16xf32>
    %254 = arith.truncf %253 : vector<2x16x16xf32> to vector<2x16x16xbf16>
    "tpu.trace_start"() <{level = 10 : i32, message = "bnm,bmd->bnd"}> : () -> ()
    %cst_54 = arith.constant dense<0.000000e+00> : vector<2x16x8xf32>
    %255 = tpu.matmul %254, %242, %cst_54 {dimension_numbers = #tpu.dot_dimension_numbers<[2], [1], [1], [2], [0, 0, 0, 1, 1, 2], [0], [0]>} : vector<2x16x16xbf16>, vector<2x16x8xbf16>, vector<2x16x8xf32> -> vector<2x16x8xf32>
    "tpu.trace_stop"() : () -> ()
    %256 = vector.extract_strided_slice %81 {offsets = [0, 0, 7], sizes = [2, 16, 1], strides = [1, 1, 1]} : vector<2x16x8xf32> to vector<2x16x1xf32>
    %257 = vector.broadcast %256 : vector<2x16x1xf32> to vector<2x16x8xf32>
    %258 = arith.mulf %255, %257 : vector<2x16x8xf32>
    %259 = tpu.concatenate %99, %121, %143, %165, %187, %209, %231, %253 in 2 : vector<2x16x16xf32>, vector<2x16x16xf32>, vector<2x16x16xf32>, vector<2x16x16xf32>, vector<2x16x16xf32>, vector<2x16x16xf32>, vector<2x16x16xf32>, vector<2x16x16xf32> -> vector<2x16x128xf32>
    %260 = vector.shape_cast %259 : vector<2x16x128xf32> to vector<32x128xf32>
    %c0_55 = arith.constant 0 : index
    %c0_56 = arith.constant 0 : index
    %261 = vector.load %arg14[%c0_55, %c0_56] : memref<32x128xf32, #tpu.memory_space<vmem>>, vector<32x128xf32>
    tpu.vector_store %arg14[%c0_55, %c0_56], %260 {strides = array<i32>} : memref<32x128xf32, #tpu.memory_space<vmem>>, vector<32x128xf32>,
    %262 = tpu.concatenate %104, %126, %148, %170, %192, %214, %236, %258 in 2 : vector<2x16x8xf32>, vector<2x16x8xf32>, vector<2x16x8xf32>, vector<2x16x8xf32>, vector<2x16x8xf32>, vector<2x16x8xf32>, vector<2x16x8xf32>, vector<2x16x8xf32> -> vector<2x16x64xf32>
    %263 = vector.shape_cast %262 : vector<2x16x64xf32> to vector<32x64xf32>
    %264 = arith.truncf %263 : vector<32x64xf32> to vector<32x64xbf16>
    %c0_57 = arith.constant 0 : index
    %c0_58 = arith.constant 0 : index
    %265 = vector.load %arg7[%c0_57, %c0_58] : memref<64x64xbf16, #tpu.memory_space<vmem>>, vector<64x64xbf16>
    %cst_59 = arith.constant dense<0.000000e+00> : vector<32x64xf32>
    %266 = tpu.matmul %264, %265, %cst_59 {dimension_numbers = #tpu.dot_dimension_numbers<[1], [0], [0], [1], [0, 0, 1, 1], [], []>} : vector<32x64xbf16>, vector<64x64xbf16>, vector<32x64xf32> -> vector<32x64xf32>
    %c0_60 = arith.constant 0 : index
    %c0_61 = arith.constant 0 : index
    %267 = vector.load %arg8[%c0_60, %c0_61] : memref<1x64xf32, #tpu.memory_space<vmem>>, vector<1x64xf32>
    %268 = vector.broadcast %267 : vector<1x64xf32> to vector<32x64xf32>
    %269 = arith.addf %266, %268 : vector<32x64xf32>
    %c0_62 = arith.constant 0 : index
    %c0_63 = arith.constant 0 : index
    %270 = vector.load %arg4[%c0_62, %c0_63] : memref<1x64xf32, #tpu.memory_space<vmem>>, vector<1x64xf32>
    %c0_64 = arith.constant 0 : index
    %c0_65 = arith.constant 0 : index
    %271 = vector.load %arg5[%c0_64, %c0_65] : memref<1x64xf32, #tpu.memory_space<vmem>>, vector<1x64xf32>
    %cst_66 = arith.constant dense<0.000000e+00> : vector<32xf32>
    %272 = vector.multi_reduction <add>, %269, %cst_66 [1] : vector<32x64xf32> to vector<32xf32>
    %273 = vector.shape_cast %272 : vector<32xf32> to vector<32x1xf32>
    %cst_67 = arith.constant 6.400000e+01 : f32
    %274 = vector.broadcast %cst_67 : f32 to vector<32x1xf32>
    %275 = arith.divf %273, %274 : vector<32x1xf32>
    %276 = vector.broadcast %275 : vector<32x1xf32> to vector<32x64xf32>
    %277 = arith.subf %269, %276 : vector<32x64xf32>
    %278 = arith.mulf %277, %277 : vector<32x64xf32>
    %cst_68 = arith.constant dense<0.000000e+00> : vector<32xf32>
    %279 = vector.multi_reduction <add>, %278, %cst_68 [1] : vector<32x64xf32> to vector<32xf32>
    %280 = vector.shape_cast %279 : vector<32xf32> to vector<32x1xf32>
    %cst_69 = arith.constant 6.400000e+01 : f32
    %281 = vector.broadcast %cst_69 : f32 to vector<32x1xf32>
    %282 = arith.divf %280, %281 : vector<32x1xf32>
    %283 = vector.broadcast %275 : vector<32x1xf32> to vector<32x64xf32>
    %284 = arith.subf %269, %283 : vector<32x64xf32>
    %cst_70 = arith.constant 9.99999974E-6 : f32
    %285 = vector.broadcast %cst_70 : f32 to vector<32x1xf32>
    %286 = arith.addf %282, %285 : vector<32x1xf32>
    %287 = math.rsqrt %286 : vector<32x1xf32>
    %288 = vector.broadcast %287 : vector<32x1xf32> to vector<32x64xf32>
    %289 = arith.mulf %284, %288 : vector<32x64xf32>
    %290 = vector.broadcast %270 : vector<1x64xf32> to vector<32x64xf32>
    %291 = arith.mulf %289, %290 : vector<32x64xf32>
    %292 = vector.broadcast %271 : vector<1x64xf32> to vector<32x64xf32>
    %293 = arith.addf %291, %292 : vector<32x64xf32>
    %294 = arith.truncf %293 : vector<32x64xf32> to vector<32x64xbf16>
    %c0_71 = arith.constant 0 : index
    %c0_72 = arith.constant 0 : index
    %295 = vector.load %arg9[%c0_71, %c0_72] : memref<64x256xbf16, #tpu.memory_space<vmem>>, vector<64x256xbf16>
    %cst_73 = arith.constant dense<0.000000e+00> : vector<32x256xf32>
    %296 = tpu.matmul %294, %295, %cst_73 {dimension_numbers = #tpu.dot_dimension_numbers<[1], [0], [0], [1], [0, 0, 1, 1], [], []>} : vector<32x64xbf16>, vector<64x256xbf16>, vector<32x256xf32> -> vector<32x256xf32>
    %c0_74 = arith.constant 0 : index
    %c0_75 = arith.constant 0 : index
    %297 = vector.load %arg10[%c0_74, %c0_75] : memref<1x256xf32, #tpu.memory_space<vmem>>, vector<1x256xf32>
    %298 = vector.broadcast %297 : vector<1x256xf32> to vector<32x256xf32>
    %299 = arith.addf %296, %298 : vector<32x256xf32>
    %cst_76 = arith.constant 5.000000e-01 : f32
    %300 = vector.broadcast %cst_76 : f32 to vector<32x256xf32>
    %301 = arith.mulf %300, %299 : vector<32x256xf32>
    %cst_77 = arith.constant 0.707106769 : f32
    %302 = vector.broadcast %cst_77 : f32 to vector<32x256xf32>
    %303 = arith.mulf %299, %302 : vector<32x256xf32>
    %304 = math.erf %303 : vector<32x256xf32>
    %cst_78 = arith.constant 1.000000e+00 : f32
    %305 = vector.broadcast %cst_78 : f32 to vector<32x256xf32>
    %306 = arith.addf %305, %304 : vector<32x256xf32>
    %307 = arith.mulf %301, %306 : vector<32x256xf32>
    %308 = arith.truncf %307 : vector<32x256xf32> to vector<32x256xbf16>
    %c0_79 = arith.constant 0 : index
    %c0_80 = arith.constant 0 : index
    %309 = vector.load %arg11[%c0_79, %c0_80] : memref<256x64xbf16, #tpu.memory_space<vmem>>, vector<256x64xbf16>
    %cst_81 = arith.constant dense<0.000000e+00> : vector<32x64xf32>
    %310 = tpu.matmul %308, %309, %cst_81 {dimension_numbers = #tpu.dot_dimension_numbers<[1], [0], [0], [1], [0, 0, 1, 1], [], []>} : vector<32x256xbf16>, vector<256x64xbf16>, vector<32x64xf32> -> vector<32x64xf32>
    %c0_82 = arith.constant 0 : index
    %c0_83 = arith.constant 0 : index
    %311 = vector.load %arg12[%c0_82, %c0_83] : memref<1x64xf32, #tpu.memory_space<vmem>>, vector<1x64xf32>
    %312 = vector.broadcast %311 : vector<1x64xf32> to vector<32x64xf32>
    %313 = arith.addf %310, %312 : vector<32x64xf32>
    %314 = arith.addf %269, %313 : vector<32x64xf32>
    %c0_84 = arith.constant 0 : index
    %c0_85 = arith.constant 0 : index
    %315 = vector.load %arg13[%c0_84, %c0_85] : memref<32x64xf32, #tpu.memory_space<vmem>>, vector<32x64xf32>
    tpu.vector_store %arg13[%c0_84, %c0_85], %314 {strides = array<i32>} : memref<32x64xf32, #tpu.memory_space<vmem>>, vector<32x64xf32>,
    return
  }
  func.func @transform_0(%arg0: i32) -> (i32, i32) {
    %c0_i32 = arith.constant 0 : i32
    %c0_i32_0 = arith.constant 0 : i32
    return %arg0, %c0_i32 : i32, i32
  }
  func.func @transform_1(%arg0: i32) -> (i32, i32) {
    %c0_i32 = arith.constant 0 : i32
    %c0_i32_0 = arith.constant 0 : i32
    %c0_i32_1 = arith.constant 0 : i32
    return %c0_i32, %c0_i32_0 : i32, i32
  }
  func.func @transform_2(%arg0: i32) -> (i32, i32) {
    %c0_i32 = arith.constant 0 : i32
    %c0_i32_0 = arith.constant 0 : i32
    %c0_i32_1 = arith.constant 0 : i32
    return %c0_i32, %c0_i32_0 : i32, i32
  }
  func.func @transform_3(%arg0: i32) -> (i32, i32) {
    %c0_i32 = arith.constant 0 : i32
    %c0_i32_0 = arith.constant 0 : i32
    %c0_i32_1 = arith.constant 0 : i32
    return %c0_i32, %c0_i32_0 : i32, i32
  }
  func.func @transform_4(%arg0: i32) -> (i32, i32) {
    %c0_i32 = arith.constant 0 : i32
    %c0_i32_0 = arith.constant 0 : i32
    %c0_i32_1 = arith.constant 0 : i32
    return %c0_i32, %c0_i32_0 : i32, i32
  }
  func.func @transform_5(%arg0: i32) -> (i32, i32) {
    %c0_i32 = arith.constant 0 : i32
    %c0_i32_0 = arith.constant 0 : i32
    %c0_i32_1 = arith.constant 0 : i32
    return %c0_i32, %c0_i32_0 : i32, i32
  }
  func.func @transform_6(%arg0: i32) -> (i32, i32) {
    %c0_i32 = arith.constant 0 : i32
    %c0_i32_0 = arith.constant 0 : i32
    %c0_i32_1 = arith.constant 0 : i32
    return %c0_i32, %c0_i32_0 : i32, i32
  }
  func.func @transform_7(%arg0: i32) -> (i32, i32) {
    %c0_i32 = arith.constant 0 : i32
    %c0_i32_0 = arith.constant 0 : i32
    %c0_i32_1 = arith.constant 0 : i32
    return %c0_i32, %c0_i32_0 : i32, i32
  }
  func.func @transform_8(%arg0: i32) -> (i32, i32) {
    %c0_i32 = arith.constant 0 : i32
    %c0_i32_0 = arith.constant 0 : i32
    %c0_i32_1 = arith.constant 0 : i32
    return %c0_i32, %c0_i32_0 : i32, i32
  }
  func.func @transform_9(%arg0: i32) -> (i32, i32) {
    %c0_i32 = arith.constant 0 : i32
    %c0_i32_0 = arith.constant 0 : i32
    %c0_i32_1 = arith.constant 0 : i32
    return %c0_i32, %c0_i32_0 : i32, i32
  }
  func.func @transform_10(%arg0: i32) -> (i32, i32) {
    %c0_i32 = arith.constant 0 : i32
    %c0_i32_0 = arith.constant 0 : i32
    %c0_i32_1 = arith.constant 0 : i32
    return %c0_i32, %c0_i32_0 : i32, i32
  }
  func.func @transform_11(%arg0: i32) -> (i32, i32) {
    %c0_i32 = arith.constant 0 : i32
    %c0_i32_0 = arith.constant 0 : i32
    %c0_i32_1 = arith.constant 0 : i32
    return %c0_i32, %c0_i32_0 : i32, i32
  }
  func.func @transform_12(%arg0: i32) -> (i32, i32) {
    %c0_i32 = arith.constant 0 : i32
    %c0_i32_0 = arith.constant 0 : i32
    return %arg0, %c0_i32 : i32, i32
  }
  func.func @transform_13(%arg0: i32) -> (i32, i32) {
    %c0_i32 = arith.constant 0 : i32
    %c0_i32_0 = arith.constant 0 : i32
    return %arg0, %c0_i32 : i32, i32
  }
}

</mosaic_0001>

<llo_original>
// kernel: tpu_custom_call.1
$region0: #{tpu_custom_call.1}
  #allocation0 [shape = 'u32[]', space=smem, size = 0x4, offset = 0x4, fixed_abs, tag = 'smem constant byte address 0x4 - core index']
  #allocation1 [shape = 'u32[72,128]{1,0:T(1,128)}', space=vmem, size = 0x9000, scoped, tag = 'internal scratch']
  %s0 = inlined_call_operand.vmem [shape: f32[32,64], index: 0, kind: input, shape index: {}]
  %s1 = inlined_call_operand.hbm [shape: f32[1,64], index: 1, kind: input, shape index: {}]
  %s2 = inlined_call_operand.hbm [shape: f32[1,64], index: 2, kind: input, shape index: {}]
  %s3 = inlined_call_operand.hbm [shape: f32[1,64], index: 3, kind: input, shape index: {}]
  %s4 = inlined_call_operand.hbm [shape: f32[1,64], index: 4, kind: input, shape index: {}]
  %s5 = inlined_call_operand.vmem [shape: bf16[64,256], index: 5, kind: input, shape index: {}]
  %s6 = inlined_call_operand.vmem [shape: bf16[64,64], index: 6, kind: input, shape index: {}]
  %s7 = inlined_call_operand.vmem [shape: f32[1,64], index: 7, kind: input, shape index: {}]
  %s8 = inlined_call_operand.vmem [shape: bf16[64,256], index: 8, kind: input, shape index: {}]
  %s9 = inlined_call_operand.vmem [shape: f32[1,256], index: 9, kind: input, shape index: {}]
  %s10 = inlined_call_operand.vmem [shape: bf16[256,64], index: 10, kind: input, shape index: {}]
  %s11 = inlined_call_operand.vmem [shape: f32[1,64], index: 11, kind: input, shape index: {}]
  %s12 = inlined_call_operand.hbm [shape: f32[32,64], index: 12, kind: output, shape index: {0}]
  %s13 = inlined_call_operand.hbm [shape: f32[32,128], index: 13, kind: output, shape index: {1}]
  %14 = xla_tuple %s12, %s13
  %s15 = sld [smem:[#allocation0]]
  $region82: #{tpu_custom_call.1} parent=0
    _
  %s17 = ssub.s32 1, %s15
  %s18 = scalar_select 0, %s17, %s15
  $region1: #{tpu_custom_call.1} parent=0
    #allocation2 [shape = 'u8[512]{0}', space=vmem, size = 0x400, scoped, tag = 'input window, operand 1, single buffered']
    #allocation3 [shape = 's32[1]{0}', space=sflag, size = 0x4, scoped, tag = 'scoped memory for tpu_custom_call.1']
    #allocation4 [shape = 's32[1]{0}', space=sflag, size = 0x4, scoped, tag = 'scoped memory for tpu_custom_call.1']
    #allocation5 [shape = 'u8[512]{0}', space=vmem, size = 0x400, scoped, tag = 'input window, operand 2, single buffered']
    #allocation6 [shape = 's32[1]{0}', space=sflag, size = 0x4, scoped, tag = 'scoped memory for tpu_custom_call.1']
    #allocation7 [shape = 'u8[512]{0}', space=vmem, size = 0x400, scoped, tag = 'input window, operand 3, single buffered']
    #allocation8 [shape = 'u8[512]{0}', space=vmem, size = 0x400, scoped, tag = 'input window, operand 4, single buffered']
    #allocation9 [shape = 's32[1]{0}', space=sflag, size = 0x4, scoped, tag = 'scoped memory for tpu_custom_call.1']
    #allocation10 [shape = 'u8[16384]{0}', space=vmem, size = 0x4000, scoped, tag = 'output window, operand 0, single buffered']
    #allocation11 [shape = 'u8[16384]{0}', space=vmem, size = 0x4000, scoped, tag = 'output window, operand 1, single buffered']
    #allocation12 [shape = 's32[1]{0}', space=sflag, size = 0x4, scoped, tag = 'scoped memory for tpu_custom_call.1']
    %19 = vsyncpa [#allocation3], 0
    %20 = vsyncpa [#allocation6], 0
    %21 = vsyncpa [#allocation9], 0
    %22 = vsyncpa [#allocation4], 0
    %23 = vsyncpa [#allocation12], 0
    // Predicated region
    $region2: #{tpu_custom_call.1} parent=1 // pred_check
      _
    $region3: #{tpu_custom_call.1} parent=1 // pred_check_branch
      %25 = sbr.rel (0) target = $region5
    $region4: #{tpu_custom_call.1} parent=1 // pred_region
      _
    $region5: #{tpu_custom_call.1} parent=1 // pred_fallthru
      _
    // Predicated region
    $region6: #{tpu_custom_call.1} parent=1 // pred_check
      _
    $region7: #{tpu_custom_call.1} parent=1 // pred_check_branch
      %27 = sbr.rel (0) target = $region9
    $region8: #{tpu_custom_call.1} parent=1 // pred_region
      %29 = vsyncadd [#allocation3], 0
      %s31 = sshll.u32 %s1, 4
      %s32 = int_to_ptr.hbm [resolvable:$true] %s31
      %s33 = sshll.u32 [#allocation2], 4
      %s34 = int_to_ptr.vmem [resolvable:$true] %s33
      %36 = dma.hbm_to_vmem [thread:$0]  %s32, 16, %s34, [#allocation3]
    $region9: #{tpu_custom_call.1} parent=1 // pred_fallthru
      _
    // Predicated region
    $region10: #{tpu_custom_call.1} parent=1 // pred_check
      _
    $region11: #{tpu_custom_call.1} parent=1 // pred_check_branch
      %38 = sbr.rel (0) target = $region13
    $region12: #{tpu_custom_call.1} parent=1 // pred_region
      %40 = vsyncadd [#allocation6], 0
      %s42 = sshll.u32 %s2, 4
      %s43 = int_to_ptr.hbm [resolvable:$true] %s42
      %s44 = sshll.u32 [#allocation5], 4
      %s45 = int_to_ptr.vmem [resolvable:$true] %s44
      %47 = dma.hbm_to_vmem [thread:$0]  %s43, 16, %s45, [#allocation6]
    $region13: #{tpu_custom_call.1} parent=1 // pred_fallthru
      _
    // Predicated region
    $region14: #{tpu_custom_call.1} parent=1 // pred_check
      _
    $region15: #{tpu_custom_call.1} parent=1 // pred_check_branch
      %49 = sbr.rel (0) target = $region17
    $region16: #{tpu_custom_call.1} parent=1 // pred_region
      %51 = vsyncadd [#allocation6], 0
      %s53 = sshll.u32 %s3, 4
      %s54 = int_to_ptr.hbm [resolvable:$true] %s53
      %s55 = sshll.u32 [#allocation7], 4
      %s56 = int_to_ptr.vmem [resolvable:$true] %s55
      %58 = dma.hbm_to_vmem [thread:$0]  %s54, 16, %s56, [#allocation6]
    $region17: #{tpu_custom_call.1} parent=1 // pred_fallthru
      _
    // Predicated region
    $region18: #{tpu_custom_call.1} parent=1 // pred_check
      _
    $region19: #{tpu_custom_call.1} parent=1 // pred_check_branch
      %60 = sbr.rel (0) target = $region21
    $region20: #{tpu_custom_call.1} parent=1 // pred_region
      %62 = vsyncadd [#allocation9], 0
      %s64 = sshll.u32 %s4, 4
      %s65 = int_to_ptr.hbm [resolvable:$true] %s64
      %s66 = sshll.u32 [#allocation8], 4
      %s67 = int_to_ptr.vmem [resolvable:$true] %s66
      %69 = dma.hbm_to_vmem [thread:$0]  %s65, 16, %s67, [#allocation9]
    $region21: #{tpu_custom_call.1} parent=1 // pred_fallthru
      _
    // Predicated region
    $region22: #{tpu_custom_call.1} parent=1 // pred_check
      _
    $region23: #{tpu_custom_call.1} parent=1 // pred_check_branch
      %71 = sbr.rel (0) target = $region25
    $region24: #{tpu_custom_call.1} parent=1 // pred_region
      _
    $region25: #{tpu_custom_call.1} parent=1 // pred_fallthru
      _
    // Predicated region
    $region26: #{tpu_custom_call.1} parent=1 // pred_check
      _
    $region27: #{tpu_custom_call.1} parent=1 // pred_check_branch
      %73 = sbr.rel (0) target = $region29
    $region28: #{tpu_custom_call.1} parent=1 // pred_region
      _
    $region29: #{tpu_custom_call.1} parent=1 // pred_fallthru
      _
    // Predicated region
    $region30: #{tpu_custom_call.1} parent=1 // pred_check
      _
    $region31: #{tpu_custom_call.1} parent=1 // pred_check_branch
      %75 = sbr.rel (0) target = $region33
    $region32: #{tpu_custom_call.1} parent=1 // pred_region
      _
    $region33: #{tpu_custom_call.1} parent=1 // pred_fallthru
      _
    // Predicated region
    $region34: #{tpu_custom_call.1} parent=1 // pred_check
      _
    $region35: #{tpu_custom_call.1} parent=1 // pred_check_branch
      %77 = sbr.rel (0) target = $region37
    $region36: #{tpu_custom_call.1} parent=1 // pred_region
      _
    $region37: #{tpu_custom_call.1} parent=1 // pred_fallthru
      _
    // Predicated region
    $region38: #{tpu_custom_call.1} parent=1 // pred_check
      _
    $region39: #{tpu_custom_call.1} parent=1 // pred_check_branch
      %79 = sbr.rel (0) target = $region41
    $region40: #{tpu_custom_call.1} parent=1 // pred_region
      _
    $region41: #{tpu_custom_call.1} parent=1 // pred_fallthru
      _
    // Predicated region
    $region42: #{tpu_custom_call.1} parent=1 // pred_check
      _
    $region43: #{tpu_custom_call.1} parent=1 // pred_check_branch
      %81 = sbr.rel (0) target = $region45
    $region44: #{tpu_custom_call.1} parent=1 // pred_region
      _
    $region45: #{tpu_custom_call.1} parent=1 // pred_fallthru
      _
    // Predicated region
    $region46: #{tpu_custom_call.1} parent=1 // pred_check
      _
    $region47: #{tpu_custom_call.1} parent=1 // pred_check_branch
      %83 = sbr.rel (0) target = $region49
    $region48: #{tpu_custom_call.1} parent=1 // pred_region
      _
    $region49: #{tpu_custom_call.1} parent=1 // pred_fallthru
      _
    // Predicated region
    $region50: #{tpu_custom_call.1} parent=1 // pred_check
      _
    $region51: #{tpu_custom_call.1} parent=1 // pred_check_branch
      %85 = sbr.rel (0) target = $region53
    $region52: #{tpu_custom_call.1} parent=1 // pred_region
      %87 = dma.done [#allocation3], 16
    $region53: #{tpu_custom_call.1} parent=1 // pred_fallthru
      _
    // Predicated region
    $region54: #{tpu_custom_call.1} parent=1 // pred_check
      _
    $region55: #{tpu_custom_call.1} parent=1 // pred_check_branch
      %89 = sbr.rel (0) target = $region57
    $region56: #{tpu_custom_call.1} parent=1 // pred_region
      %91 = dma.done [#allocation6], 16
    $region57: #{tpu_custom_call.1} parent=1 // pred_fallthru
      _
    // Predicated region
    $region58: #{tpu_custom_call.1} parent=1 // pred_check
      _
    $region59: #{tpu_custom_call.1} parent=1 // pred_check_branch
      %93 = sbr.rel (0) target = $region61
    $region60: #{tpu_custom_call.1} parent=1 // pred_region
      %95 = dma.done [#allocation6], 16
    $region61: #{tpu_custom_call.1} parent=1 // pred_fallthru
      _
    // Predicated region
    $region62: #{tpu_custom_call.1} parent=1 // pred_check
      _
    $region63: #{tpu_custom_call.1} parent=1 // pred_check_branch
      %97 = sbr.rel (0) target = $region65
    $region64: #{tpu_custom_call.1} parent=1 // pred_region
      %99 = dma.done [#allocation9], 16
    $region65: #{tpu_custom_call.1} parent=1 // pred_fallthru
      _
    %v101 = vld [vmem:[%s0] sm:$0xff]
    %v102 = vld [vmem:[%s0 + $0x8] sm:$0xff]
    %v103 = vld [vmem:[%s0 + $0x10] sm:$0xff]
    %v104 = vld [vmem:[%s0 + $0x18] sm:$0xff]
    %v105 = vld [vmem:[#allocation2] sm:$0x1]
    %v106 = vld [vmem:[#allocation5] sm:$0x1]
    %vm107 = vcmask 523264
    %v108 = vsel %vm107, %v101, 0.0
    %109 = vadd.xlane.f32.xlu0 %v108
    %v110 = vpop.xlane.xlu0 %109
    %v111 = vsel %vm107, %v102, 0.0
    %112 = vadd.xlane.f32.xlu0 %v111
    %v113 = vpop.xlane.xlu0 %112
    %v114 = vsel %vm107, %v103, 0.0
    %115 = vadd.xlane.f32.xlu0 %v114
    %v116 = vpop.xlane.xlu0 %115
    %v117 = vsel %vm107, %v104, 0.0
    %118 = vadd.xlane.f32.xlu0 %v117
    %v119 = vpop.xlane.xlu0 %118
    %v120 = vrcp.pop 64.0
    %v121 = vmul.f32 64.0, %v120
    %v122 = vsub.f32 1.0, %v121
    %v123 = vmul.f32 %v120, %v122
    %v124 = vadd.f32 %v120, %v123
    %vm125 = vweird.f32 %v120
    %v126 = vsel %vm125, %v120, %v124
    %v127 = vmul.f32 %v110, %v126
    %v128 = vmul.f32 %v113, %v126
    %v129 = vmul.f32 %v116, %v126
    %v130 = vmul.f32 %v119, %v126
    %v131 = vsub.f32 %v101, %v127
    %v132 = vsub.f32 %v102, %v128
    %v133 = vsub.f32 %v103, %v129
    %v134 = vsub.f32 %v104, %v130
    %v135 = vmul.f32 %v131, %v131
    %v136 = vmul.f32 %v132, %v132
    %v137 = vmul.f32 %v133, %v133
    %v138 = vmul.f32 %v134, %v134
    %v139 = vsel %vm107, %v135, 0.0
    %140 = vadd.xlane.f32.xlu0 %v139
    %v141 = vpop.xlane.xlu0 %140
    %v142 = vsel %vm107, %v136, 0.0
    %143 = vadd.xlane.f32.xlu0 %v142
    %v144 = vpop.xlane.xlu0 %143
    %v145 = vsel %vm107, %v137, 0.0
    %146 = vadd.xlane.f32.xlu0 %v145
    %v147 = vpop.xlane.xlu0 %146
    %v148 = vsel %vm107, %v138, 0.0
    %149 = vadd.xlane.f32.xlu0 %v148
    %v150 = vpop.xlane.xlu0 %149
    %v151 = vmul.f32 %v141, %v126
    %v152 = vmul.f32 %v144, %v126
    %v153 = vmul.f32 %v147, %v126
    %v154 = vmul.f32 %v150, %v126
    %v155 = vadd.f32 %v151, 1e-05
    %v156 = vadd.f32 %v152, 1e-05
    %v157 = vadd.f32 %v153, 1e-05
    %v158 = vadd.f32 %v154, 1e-05
    %v159 = vrsqrt.pop %v155
    %v160 = vmul.f32 %v159, %v155
    %v161 = vmul.f32 %v160, %v159
    %v162 = vmul.f32 0.5, %v161
    %v163 = vsub.f32 1.5, %v162
    %v164 = vmul.f32 %v159, %v163
    %vm165 = vweird.f32 %v155
    %vm166 = vweird.f32 %v159
    %vm167 = vmor %vm165, %vm166
    %v168 = vsel %vm167, %v159, %v164
    %v169 = vrsqrt.pop %v156
    %v170 = vmul.f32 %v169, %v156
    %v171 = vmul.f32 %v170, %v169
    %v172 = vmul.f32 0.5, %v171
    %v173 = vsub.f32 1.5, %v172
    %v174 = vmul.f32 %v169, %v173
    %vm175 = vweird.f32 %v156
    %vm176 = vweird.f32 %v169
    %vm177 = vmor %vm175, %vm176
    %v178 = vsel %vm177, %v169, %v174
    %v179 = vrsqrt.pop %v157
    %v180 = vmul.f32 %v179, %v157
    %v181 = vmul.f32 %v180, %v179
    %v182 = vmul.f32 0.5, %v181
    %v183 = vsub.f32 1.5, %v182
    %v184 = vmul.f32 %v179, %v183
    %vm185 = vweird.f32 %v157
    %vm186 = vweird.f32 %v179
    %vm187 = vmor %vm185, %vm186
    %v188 = vsel %vm187, %v179, %v184
    %v189 = vrsqrt.pop %v158
    %v190 = vmul.f32 %v189, %v158
    %v191 = vmul.f32 %v190, %v189
    %v192 = vmul.f32 0.5, %v191
    %v193 = vsub.f32 1.5, %v192
    %v194 = vmul.f32 %v189, %v193
    %vm195 = vweird.f32 %v158
    %vm196 = vweird.f32 %v189
    %vm197 = vmor %vm195, %vm196
    %v198 = vsel %vm197, %v189, %v194
    %v199 = vmul.f32 %v131, %v168
    %v200 = vmul.f32 %v132, %v178
    %v201 = vmul.f32 %v133, %v188
    %v202 = vmul.f32 %v134, %v198
    %v204 = vperm.slane %v105, 0
    %v206 = vmul.f32 %v199, %v204
    %v207 = vmul.f32 %v200, %v204
    %v208 = vmul.f32 %v201, %v204
    %v209 = vmul.f32 %v202, %v204
    %v211 = vperm.slane %v106, 0
    %v213 = vadd.f32 %v206, %v211
    %v214 = vadd.f32 %v207, %v211
    %v215 = vadd.f32 %v208, %v211
    %v216 = vadd.f32 %v209, %v211
    %v217 = vpack.c.bf16 %v214, %v213
    %v218 = vpack.c.bf16 %v216, %v215
    %v219 = vld [vmem:[%s5] sm:$0xff]
    %v220 = vld [vmem:[%s5 + $0x8] sm:$0xff]
    %v221 = vld [vmem:[%s5 + $0x10] sm:$0xff]
    %v222 = vld [vmem:[%s5 + $0x18] sm:$0xff]
    %v223 = vld [vmem:[%s5 + $0x20] sm:$0xff]
    %v224 = vld [vmem:[%s5 + $0x28] sm:$0xff]
    %v225 = vld [vmem:[%s5 + $0x30] sm:$0xff]
    %v226 = vld [vmem:[%s5 + $0x38] sm:$0xff]
    %v235 = vunpack.c.l.b16 %v219
    %v236 = vunpack.c.h.b16 %v219
    %v237 = vunpack.c.l.b16 %v220
    %v238 = vunpack.c.h.b16 %v220
    %v239 = vunpack.c.l.b16 %v221
    %v240 = vunpack.c.h.b16 %v221
    %v241 = vunpack.c.l.b16 %v222
    %v242 = vunpack.c.h.b16 %v222
    %v243 = vunpack.c.l.b16 %v223
    %v244 = vunpack.c.h.b16 %v223
    %v245 = vunpack.c.l.b16 %v224
    %v246 = vunpack.c.h.b16 %v224
    %v247 = vunpack.c.l.b16 %v225
    %v248 = vunpack.c.h.b16 %v225
    %v249 = vunpack.c.l.b16 %v226
    %v250 = vunpack.c.h.b16 %v226
    %v251 = vpack.c.b16 %v237, %v235
    %v252 = vpack.c.b16 %v238, %v236
    %v253 = vpack.c.b16 %v241, %v239
    %v254 = vpack.c.b16 %v242, %v240
    %v255 = vpack.c.b16 %v245, %v243
    %v256 = vpack.c.b16 %v246, %v244
    %v257 = vpack.c.b16 %v249, %v247
    %v258 = vpack.c.b16 %v250, %v248
    %v268 = vsel %vm107, %v217, 0
    %v271 = vsel %vm107, %v218, 0
    %273 = vmatpush.bf16.msra.mxu0 0
    %274 = vmatpush.bf16.msra.mxu0 0
    %275 = vmatpush.bf16.msra.mxu0 0
    %276 = vmatpush.bf16.msra.mxu0 0
    %277 = vmatpush.bf16.msra.mxu0 %v257
    %278 = vmatpush.bf16.msra.mxu0 %v255
    %279 = vmatpush.bf16.msra.mxu0 %v253
    %280 = vmatpush.bf16.msra.mxu0 %v251
    %281 = vmatmul.bf16.gmra.mxu0 %v268
    %v282 = vpop.f32.mrf.mxu0
    %v283 = vadd.f32 0.0, %v282
    %v284 = vpop.f32.mrf.mxu0
    %v285 = vadd.f32 0.0, %v284
    %286 = vmatmul.bf16.gmra.mxu0 %v271
    %v287 = vpop.f32.mrf.mxu0
    %v288 = vadd.f32 0.0, %v287
    %v289 = vpop.f32.mrf.mxu0
    %v290 = vadd.f32 0.0, %v289
    %291 = vdwg.mxu0
    %292 = vmatpush.bf16.msra.mxu0 0
    %293 = vmatpush.bf16.msra.mxu0 0
    %294 = vmatpush.bf16.msra.mxu0 0
    %295 = vmatpush.bf16.msra.mxu0 0
    %296 = vmatpush.bf16.msra.mxu0 %v258
    %297 = vmatpush.bf16.msra.mxu0 %v256
    %298 = vmatpush.bf16.msra.mxu0 %v254
    %299 = vmatpush.bf16.msra.mxu0 %v252
    %300 = vmatmul.bf16.gmra.mxu0 %v268
    %v301 = vpop.f32.mrf.mxu0
    %v302 = vadd.f32 0.0, %v301
    %v303 = vpop.f32.mrf.mxu0
    %v304 = vadd.f32 0.0, %v303
    %305 = vmatmul.bf16.gmra.mxu0 %v271
    %v306 = vpop.f32.mrf.mxu0
    %v307 = vadd.f32 0.0, %v306
    %v308 = vpop.f32.mrf.mxu0
    %v309 = vadd.f32 0.0, %v308
    %310 = vdwg.mxu0
    %vm311 = vcmask 572928
    %v312 = vsel %vm311, %v302, -inf
    %313 = vmax.xlane.f32.xlu0 %v312
    %v314 = vpop.xlane.xlu0 %313
    %v315 = vsel %vm311, %v304, -inf
    %316 = vmax.xlane.f32.xlu0 %v315
    %v317 = vpop.xlane.xlu0 %316
    %v318 = vsel %vm311, %v307, -inf
    %319 = vmax.xlane.f32.xlu0 %v318
    %v320 = vpop.xlane.xlu0 %319
    %v321 = vsel %vm311, %v309, -inf
    %322 = vmax.xlane.f32.xlu0 %v321
    %v323 = vpop.xlane.xlu0 %322
    %v324 = vsub.f32 %v302, %v314
    %v325 = vsub.f32 %v304, %v317
    %v326 = vsub.f32 %v307, %v320
    %v327 = vsub.f32 %v309, %v323
    %v328 = vmul.f32 %v324, 1.442695
    %v329 = vpow.pop %v328
    %v330 = vmul.f32 %v325, 1.442695
    %v331 = vpow.pop %v330
    %v332 = vmul.f32 %v326, 1.442695
    %v333 = vpow.pop %v332
    %v334 = vmul.f32 %v327, 1.442695
    %v335 = vpow.pop %v334
    %340 = vrot.lane.b32.xlu0 %v329, 64
    %v341 = vpop.permute.xlu0 %340
    %342 = vrot.lane.b32.xlu0 %v331, 64
    %v343 = vpop.permute.xlu0 %342
    %344 = vrot.lane.b32.xlu0 %v333, 64
    %v345 = vpop.permute.xlu0 %344
    %346 = vrot.lane.b32.xlu0 %v335, 64
    %v347 = vpop.permute.xlu0 %346
    %vm352 = vcmask 48128
    %v353 = vsel %vm352, %v341, 0.0
    %354 = vadd.xlane.f32.xlu0 %v353
    %v355 = vpop.xlane.xlu0 %354
    %v356 = vsel %vm352, %v343, 0.0
    %357 = vadd.xlane.f32.xlu0 %v356
    %v358 = vpop.xlane.xlu0 %357
    %v359 = vsel %vm352, %v345, 0.0
    %360 = vadd.xlane.f32.xlu0 %v359
    %v361 = vpop.xlane.xlu0 %360
    %v362 = vsel %vm352, %v347, 0.0
    %363 = vadd.xlane.f32.xlu0 %v362
    %v364 = vpop.xlane.xlu0 %363
    %v365 = vrcp.pop %v355
    %v366 = vrcp.pop %v358
    %v367 = vrcp.pop %v361
    %v368 = vrcp.pop %v364
    %v369 = vmul.f32 %v329, %v365
    %v370 = vmul.f32 %v331, %v366
    %v371 = vmul.f32 %v333, %v367
    %v372 = vmul.f32 %v335, %v368
    %377 = vrot.lane.b32.xlu0 %v369, 64
    %v378 = vpop.permute.xlu0 %377
    %379 = vrot.lane.b32.xlu0 %v370, 64
    %v380 = vpop.permute.xlu0 %379
    %381 = vrot.lane.b32.xlu0 %v371, 64
    %v382 = vpop.permute.xlu0 %381
    %383 = vrot.lane.b32.xlu0 %v372, 64
    %v384 = vpop.permute.xlu0 %383
    %v389 = vsel %vm352, %v378, 0.0
    %390 = vadd.xlane.f32.xlu0 %v389
    %v391 = vpop.xlane.xlu0 %390
    %v392 = vsel %vm352, %v380, 0.0
    %393 = vadd.xlane.f32.xlu0 %v392
    %v394 = vpop.xlane.xlu0 %393
    %v395 = vsel %vm352, %v382, 0.0
    %396 = vadd.xlane.f32.xlu0 %v395
    %v397 = vpop.xlane.xlu0 %396
    %v398 = vsel %vm352, %v384, 0.0
    %399 = vadd.xlane.f32.xlu0 %v398
    %v400 = vpop.xlane.xlu0 %399
    %v401 = vmax.f32 %v391, 1.1920929e-07
    %v402 = vmax.f32 %v394, 1.1920929e-07
    %v403 = vmax.f32 %v397, 1.1920929e-07
    %v404 = vmax.f32 %v400, 1.1920929e-07
    %v405 = vrcp.pop %v401
    %v406 = vrcp.pop %v402
    %v407 = vrcp.pop %v403
    %v408 = vrcp.pop %v404
    %v409 = vmul.f32 %v369, %v405
    %v410 = vmul.f32 %v370, %v406
    %v411 = vmul.f32 %v371, %v407
    %v412 = vmul.f32 %v372, %v408
    %v413 = vmul.f32 %v409, 6.0
    %v414 = vmul.f32 %v410, 6.0
    %v415 = vmul.f32 %v411, 6.0
    %v416 = vmul.f32 %v412, 6.0
    %vm417 = vcmask 589360
    %v418 = vsel %vm417, %v302, -inf
    %419 = vmax.xlane.f32.xlu0 %v418
    %v420 = vpop.xlane.xlu0 %419
    %v421 = vsel %vm417, %v304, -inf
    %422 = vmax.xlane.f32.xlu0 %v421
    %v423 = vpop.xlane.xlu0 %422
    %v424 = vsel %vm417, %v307, -inf
    %425 = vmax.xlane.f32.xlu0 %v424
    %v426 = vpop.xlane.xlu0 %425
    %v427 = vsel %vm417, %v309, -inf
    %428 = vmax.xlane.f32.xlu0 %v427
    %v429 = vpop.xlane.xlu0 %428
    %v430 = vsub.f32 %v302, %v420
    %v431 = vsub.f32 %v304, %v423
    %v432 = vsub.f32 %v307, %v426
    %v433 = vsub.f32 %v309, %v429
    %v434 = vmul.f32 %v430, 1.442695
    %v435 = vpow.pop %v434
    %v436 = vmul.f32 %v431, 1.442695
    %v437 = vpow.pop %v436
    %v438 = vmul.f32 %v432, 1.442695
    %v439 = vpow.pop %v438
    %v440 = vmul.f32 %v433, 1.442695
    %v441 = vpow.pop %v440
    %446 = vrot.lane.b32.xlu0 %v435, 58
    %v447 = vpop.permute.xlu0 %446
    %448 = vrot.lane.b32.xlu0 %v437, 58
    %v449 = vpop.permute.xlu0 %448
    %450 = vrot.lane.b32.xlu0 %v439, 58
    %v451 = vpop.permute.xlu0 %450
    %452 = vrot.lane.b32.xlu0 %v441, 58
    %v453 = vpop.permute.xlu0 %452
    %vm458 = vcmask 15360
    %v459 = vsel %vm458, %v447, 0.0
    %460 = vadd.xlane.f32.xlu0 %v459
    %v461 = vpop.xlane.xlu0 %460
    %v462 = vsel %vm458, %v449, 0.0
    %463 = vadd.xlane.f32.xlu0 %v462
    %v464 = vpop.xlane.xlu0 %463
    %v465 = vsel %vm458, %v451, 0.0
    %466 = vadd.xlane.f32.xlu0 %v465
    %v467 = vpop.xlane.xlu0 %466
    %v468 = vsel %vm458, %v453, 0.0
    %469 = vadd.xlane.f32.xlu0 %v468
    %v470 = vpop.xlane.xlu0 %469
    %v471 = vrcp.pop %v461
    %v472 = vrcp.pop %v464
    %v473 = vrcp.pop %v467
    %v474 = vrcp.pop %v470
    %v475 = vmul.f32 %v435, %v471
    %v476 = vmul.f32 %v437, %v472
    %v477 = vmul.f32 %v439, %v473
    %v478 = vmul.f32 %v441, %v474
    %v479 = vmul.f32 %v475, 2.0
    %v480 = vmul.f32 %v476, 2.0
    %v481 = vmul.f32 %v477, 2.0
    %v482 = vmul.f32 %v478, 2.0
    %vm483 = vcmask 605760
    %v484 = vsel %vm483, %v302, -inf
    %485 = vmax.xlane.f32.xlu0 %v484
    %v486 = vpop.xlane.xlu0 %485
    %v487 = vsel %vm483, %v304, -inf
    %488 = vmax.xlane.f32.xlu0 %v487
    %v489 = vpop.xlane.xlu0 %488
    %v490 = vsel %vm483, %v307, -inf
    %491 = vmax.xlane.f32.xlu0 %v490
    %v492 = vpop.xlane.xlu0 %491
    %v493 = vsel %vm483, %v309, -inf
    %494 = vmax.xlane.f32.xlu0 %v493
    %v495 = vpop.xlane.xlu0 %494
    %v496 = vsub.f32 %v302, %v486
    %v497 = vsub.f32 %v304, %v489
    %v498 = vsub.f32 %v307, %v492
    %v499 = vsub.f32 %v309, %v495
    %v500 = vmul.f32 %v496, 1.442695
    %v501 = vpow.pop %v500
    %v502 = vmul.f32 %v497, 1.442695
    %v503 = vpow.pop %v502
    %v504 = vmul.f32 %v498, 1.442695
    %v505 = vpow.pop %v504
    %v506 = vmul.f32 %v499, 1.442695
    %v507 = vpow.pop %v506
    %512 = vrot.lane.b32.xlu0 %v501, 56
    %v513 = vpop.permute.xlu0 %512
    %514 = vrot.lane.b32.xlu0 %v503, 56
    %v515 = vpop.permute.xlu0 %514
    %516 = vrot.lane.b32.xlu0 %v505, 56
    %v517 = vpop.permute.xlu0 %516
    %518 = vrot.lane.b32.xlu0 %v507, 56
    %v519 = vpop.permute.xlu0 %518
    %v524 = vsel %vm458, %v513, 0.0
    %525 = vadd.xlane.f32.xlu0 %v524
    %v526 = vpop.xlane.xlu0 %525
    %v527 = vsel %vm458, %v515, 0.0
    %528 = vadd.xlane.f32.xlu0 %v527
    %v529 = vpop.xlane.xlu0 %528
    %v530 = vsel %vm458, %v517, 0.0
    %531 = vadd.xlane.f32.xlu0 %v530
    %v532 = vpop.xlane.xlu0 %531
    %v533 = vsel %vm458, %v519, 0.0
    %534 = vadd.xlane.f32.xlu0 %v533
    %v535 = vpop.xlane.xlu0 %534
    %v536 = vrcp.pop %v526
    %v537 = vrcp.pop %v529
    %v538 = vrcp.pop %v532
    %v539 = vrcp.pop %v535
    %v540 = vmul.f32 %v501, %v536
    %v541 = vmul.f32 %v503, %v537
    %v542 = vmul.f32 %v505, %v538
    %v543 = vmul.f32 %v507, %v539
    %v544 = vmul.f32 %v540, 2.0
    %v545 = vmul.f32 %v541, 2.0
    %v546 = vmul.f32 %v542, 2.0
    %v547 = vmul.f32 %v543, 2.0
    %549 = vset.pattern.permute.xlu0 70
    %550 = vperm.xlu0 %549, %v479
    %v551 = vpop.permute.xlu0 %550
    %554 = vset.pattern.permute.xlu0 70
    %555 = vperm.xlu0 %554, %v480
    %v556 = vpop.permute.xlu0 %555
    %559 = vset.pattern.permute.xlu0 70
    %560 = vperm.xlu0 %559, %v481
    %v561 = vpop.permute.xlu0 %560
    %564 = vset.pattern.permute.xlu0 70
    %565 = vperm.xlu0 %564, %v482
    %v566 = vpop.permute.xlu0 %565
    %v568 = vmul.f32 %v551, %v544
    %v569 = vmul.f32 %v556, %v545
    %v570 = vmul.f32 %v561, %v546
    %v571 = vmul.f32 %v566, %v547
    %572 = vset.pattern.permute.xlu0 71
    %573 = vperm.xlu0 %572, %v479
    %v574 = vpop.permute.xlu0 %573
    %576 = vset.pattern.permute.xlu0 71
    %577 = vperm.xlu0 %576, %v480
    %v578 = vpop.permute.xlu0 %577
    %580 = vset.pattern.permute.xlu0 71
    %581 = vperm.xlu0 %580, %v481
    %v582 = vpop.permute.xlu0 %581
    %584 = vset.pattern.permute.xlu0 71
    %585 = vperm.xlu0 %584, %v482
    %v586 = vpop.permute.xlu0 %585
    %v588 = vmul.f32 %v574, %v413
    %v589 = vmul.f32 %v578, %v414
    %v590 = vmul.f32 %v582, %v415
    %v591 = vmul.f32 %v586, %v416
    %596 = vrot.lane.b32.xlu0 %v568, 56
    %v597 = vpop.permute.xlu0 %596
    %598 = vrot.lane.b32.xlu0 %v569, 56
    %v599 = vpop.permute.xlu0 %598
    %600 = vrot.lane.b32.xlu0 %v570, 56
    %v601 = vpop.permute.xlu0 %600
    %602 = vrot.lane.b32.xlu0 %v571, 56
    %v603 = vpop.permute.xlu0 %602
    %612 = vrot.lane.b32.xlu0 %v588, 66
    %v613 = vpop.permute.xlu0 %612
    %614 = vrot.lane.b32.xlu0 %v589, 66
    %v615 = vpop.permute.xlu0 %614
    %616 = vrot.lane.b32.xlu0 %v590, 66
    %v617 = vpop.permute.xlu0 %616
    %618 = vrot.lane.b32.xlu0 %v591, 66
    %v619 = vpop.permute.xlu0 %618
    %v624 = vsel %vm458, %v597, %v613
    %v625 = vsel %vm458, %v599, %v615
    %v626 = vsel %vm458, %v601, %v617
    %v627 = vsel %vm458, %v603, %v619
    %v628 = vpack.c.bf16 %v283, %v283
    %v629 = vpack.c.bf16 %v285, %v285
    %v630 = vpack.c.bf16 %v288, %v288
    %v631 = vpack.c.bf16 %v290, %v290
    %v632 = vpack.c.bf16 %v302, %v302
    %v633 = vpack.c.bf16 %v304, %v304
    %v634 = vpack.c.bf16 %v307, %v307
    %v635 = vpack.c.bf16 %v309, %v309
    %v638 = vunpack.c.l.b16 %v628
    %v639 = vunpack.c.l.b16 %v629
    %v640 = vpack.c.b16 %v639, %v638
    %641 = vrot.lane.b32.xlu0 %v640, 64
    %v642 = vpop.permute.xlu0 %641
    %vm643 = vcmask 64512
    %v645 = vsel %vm643, %v640, 0
    %v648 = vsel %vm643, %v642, 0
    %650 = vmatpush.bf16.xpose.msra.mxu0 0
    %651 = vmatpush.bf16.xpose.msra.mxu0 0
    %652 = vmatpush.bf16.xpose.msra.mxu0 0
    %653 = vmatpush.bf16.xpose.msra.mxu0 0
    %654 = vmatpush.bf16.xpose.msra.mxu0 0
    %655 = vmatpush.bf16.xpose.msra.mxu0 0
    %656 = vmatpush.bf16.xpose.msra.mxu0 0
    %657 = vmatpush.bf16.xpose.msra.mxu0 %v648
    %658 = vmatmul.bf16.gmra.mxu0 %v645
    %v659 = vpop.f32.mrf.mxu0
    %v660 = vadd.f32 0.0, %v659
    %v661 = vpop.f32.mrf.mxu0
    %v662 = vadd.f32 0.0, %v661
    %663 = vdwg.mxu0
    %v666 = vunpack.c.l.b16 %v630
    %v667 = vunpack.c.l.b16 %v631
    %v668 = vpack.c.b16 %v667, %v666
    %669 = vrot.lane.b32.xlu0 %v668, 64
    %v670 = vpop.permute.xlu0 %669
    %v672 = vsel %vm643, %v668, 0
    %v675 = vsel %vm643, %v670, 0
    %677 = vmatpush.bf16.xpose.msra.mxu0 0
    %678 = vmatpush.bf16.xpose.msra.mxu0 0
    %679 = vmatpush.bf16.xpose.msra.mxu0 0
    %680 = vmatpush.bf16.xpose.msra.mxu0 0
    %681 = vmatpush.bf16.xpose.msra.mxu0 0
    %682 = vmatpush.bf16.xpose.msra.mxu0 0
    %683 = vmatpush.bf16.xpose.msra.mxu0 0
    %684 = vmatpush.bf16.xpose.msra.mxu0 %v675
    %685 = vmatmul.bf16.gmra.mxu0 %v672
    %v686 = vpop.f32.mrf.mxu0
    %v687 = vadd.f32 0.0, %v686
    %v688 = vpop.f32.mrf.mxu0
    %v689 = vadd.f32 0.0, %v688
    %690 = vdwg.mxu0
    %vm691 = vcmask 130048
    %v692 = vsel %vm691, %v660, -inf
    %693 = vmax.xlane.f32.xlu0 %v692
    %v694 = vpop.xlane.xlu0 %693
    %v695 = vsel %vm691, %v662, -inf
    %696 = vmax.xlane.f32.xlu0 %v695
    %v697 = vpop.xlane.xlu0 %696
    %v698 = vsel %vm691, %v687, -inf
    %699 = vmax.xlane.f32.xlu0 %v698
    %v700 = vpop.xlane.xlu0 %699
    %v701 = vsel %vm691, %v689, -inf
    %702 = vmax.xlane.f32.xlu0 %v701
    %v703 = vpop.xlane.xlu0 %702
    %v704 = vsub.f32 %v660, %v694
    %v705 = vsub.f32 %v662, %v697
    %v706 = vsub.f32 %v687, %v700
    %v707 = vsub.f32 %v689, %v703
    %v708 = vmul.f32 %v704, 1.442695
    %v709 = vpow.pop %v708
    %v710 = vmul.f32 %v705, 1.442695
    %v711 = vpow.pop %v710
    %v712 = vmul.f32 %v706, 1.442695
    %v713 = vpow.pop %v712
    %v714 = vmul.f32 %v707, 1.442695
    %v715 = vpow.pop %v714
    %v716 = vsel %vm691, %v709, 0.0
    %717 = vadd.xlane.f32.xlu0 %v716
    %v718 = vpop.xlane.xlu0 %717
    %v719 = vsel %vm691, %v711, 0.0
    %720 = vadd.xlane.f32.xlu0 %v719
    %v721 = vpop.xlane.xlu0 %720
    %v722 = vsel %vm691, %v713, 0.0
    %723 = vadd.xlane.f32.xlu0 %v722
    %v724 = vpop.xlane.xlu0 %723
    %v725 = vsel %vm691, %v715, 0.0
    %726 = vadd.xlane.f32.xlu0 %v725
    %v727 = vpop.xlane.xlu0 %726
    %v728 = vrcp.pop %v718
    %v729 = vrcp.pop %v721
    %v730 = vrcp.pop %v724
    %v731 = vrcp.pop %v727
    %v732 = vmul.f32 %v709, %v728
    %v733 = vmul.f32 %v711, %v729
    %v734 = vmul.f32 %v713, %v730
    %v735 = vmul.f32 %v715, %v731
    %v736 = vpack.c.bf16 %v732, %v732
    %v737 = vpack.c.bf16 %v733, %v733
    %v738 = vpack.c.bf16 %v734, %v734
    %v739 = vpack.c.bf16 %v735, %v735
    %v742 = vunpack.c.l.b16 %v736
    %v743 = vunpack.c.l.b16 %v737
    %v744 = vpack.c.b16 %v743, %v742
    %v747 = vunpack.c.l.b16 %v632
    %v748 = vunpack.c.l.b16 %v633
    %v749 = vpack.c.b16 %v748, %v747
    %v752 = vsel %vm691, %v744, 0
    %754 = vmatpush.bf16.msra.mxu0 0
    %755 = vmatpush.bf16.msra.mxu0 0
    %756 = vmatpush.bf16.msra.mxu0 0
    %757 = vmatpush.bf16.msra.mxu0 0
    %758 = vmatpush.bf16.msra.mxu0 0
    %759 = vmatpush.bf16.msra.mxu0 0
    %760 = vmatpush.bf16.msra.mxu0 0
    %761 = vmatpush.bf16.msra.mxu0 %v749
    %762 = vmatmul.bf16.gmra.mxu0 %v752
    %v763 = vpop.f32.mrf.mxu0
    %v764 = vadd.f32 0.0, %v763
    %v765 = vpop.f32.mrf.mxu0
    %v766 = vadd.f32 0.0, %v765
    %767 = vdwg.mxu0
    %v770 = vunpack.c.l.b16 %v738
    %v771 = vunpack.c.l.b16 %v739
    %v772 = vpack.c.b16 %v771, %v770
    %v775 = vunpack.c.l.b16 %v634
    %v776 = vunpack.c.l.b16 %v635
    %v777 = vpack.c.b16 %v776, %v775
    %v780 = vsel %vm691, %v772, 0
    %782 = vmatpush.bf16.msra.mxu0 0
    %783 = vmatpush.bf16.msra.mxu0 0
    %784 = vmatpush.bf16.msra.mxu0 0
    %785 = vmatpush.bf16.msra.mxu0 0
    %786 = vmatpush.bf16.msra.mxu0 0
    %787 = vmatpush.bf16.msra.mxu0 0
    %788 = vmatpush.bf16.msra.mxu0 0
    %789 = vmatpush.bf16.msra.mxu0 %v777
    %790 = vmatmul.bf16.gmra.mxu0 %v780
    %v791 = vpop.f32.mrf.mxu0
    %v792 = vadd.f32 0.0, %v791
    %v793 = vpop.f32.mrf.mxu0
    %v794 = vadd.f32 0.0, %v793
    %795 = vdwg.mxu0
    %797 = vset.pattern.permute.xlu0 0
    %798 = vperm.xlu0 %797, %v624
    %v799 = vpop.permute.xlu0 %798
    %802 = vset.pattern.permute.xlu0 0
    %803 = vperm.xlu0 %802, %v625
    %v804 = vpop.permute.xlu0 %803
    %807 = vset.pattern.permute.xlu0 0
    %808 = vperm.xlu0 %807, %v626
    %v809 = vpop.permute.xlu0 %808
    %812 = vset.pattern.permute.xlu0 0
    %813 = vperm.xlu0 %812, %v627
    %v814 = vpop.permute.xlu0 %813
    %v816 = vmul.f32 %v764, %v799
    %v817 = vmul.f32 %v766, %v804
    %v818 = vmul.f32 %v792, %v809
    %v819 = vmul.f32 %v794, %v814
    %820 = vrot.lane.b32.xlu0 %v640, 120
    %v821 = vpop.permute.xlu0 %820
    %822 = vrot.lane.b32.xlu0 %v640, 56
    %v823 = vpop.permute.xlu0 %822
    %v825 = vsel %vm643, %v821, 0
    %v828 = vsel %vm643, %v823, 0
    %830 = vmatpush.bf16.xpose.msra.mxu0 0
    %831 = vmatpush.bf16.xpose.msra.mxu0 0
    %832 = vmatpush.bf16.xpose.msra.mxu0 0
    %833 = vmatpush.bf16.xpose.msra.mxu0 0
    %834 = vmatpush.bf16.xpose.msra.mxu0 0
    %835 = vmatpush.bf16.xpose.msra.mxu0 0
    %836 = vmatpush.bf16.xpose.msra.mxu0 0
    %837 = vmatpush.bf16.xpose.msra.mxu0 %v828
    %838 = vmatmul.bf16.gmra.mxu0 %v825
    %v839 = vpop.f32.mrf.mxu0
    %v840 = vadd.f32 0.0, %v839
    %v841 = vpop.f32.mrf.mxu0
    %v842 = vadd.f32 0.0, %v841
    %843 = vdwg.mxu0
    %844 = vrot.lane.b32.xlu0 %v668, 120
    %v845 = vpop.permute.xlu0 %844
    %846 = vrot.lane.b32.xlu0 %v668, 56
    %v847 = vpop.permute.xlu0 %846
    %v849 = vsel %vm643, %v845, 0
    %v852 = vsel %vm643, %v847, 0
    %854 = vmatpush.bf16.xpose.msra.mxu0 0
    %855 = vmatpush.bf16.xpose.msra.mxu0 0
    %856 = vmatpush.bf16.xpose.msra.mxu0 0
    %857 = vmatpush.bf16.xpose.msra.mxu0 0
    %858 = vmatpush.bf16.xpose.msra.mxu0 0
    %859 = vmatpush.bf16.xpose.msra.mxu0 0
    %860 = vmatpush.bf16.xpose.msra.mxu0 0
    %861 = vmatpush.bf16.xpose.msra.mxu0 %v852
    %862 = vmatmul.bf16.gmra.mxu0 %v849
    %v863 = vpop.f32.mrf.mxu0
    %v864 = vadd.f32 0.0, %v863
    %v865 = vpop.f32.mrf.mxu0
    %v866 = vadd.f32 0.0, %v865
    %867 = vdwg.mxu0
    %v868 = vsel %vm691, %v840, -inf
    %869 = vmax.xlane.f32.xlu0 %v868
    %v870 = vpop.xlane.xlu0 %869
    %v871 = vsel %vm691, %v842, -inf
    %872 = vmax.xlane.f32.xlu0 %v871
    %v873 = vpop.xlane.xlu0 %872
    %v874 = vsel %vm691, %v864, -inf
    %875 = vmax.xlane.f32.xlu0 %v874
    %v876 = vpop.xlane.xlu0 %875
    %v877 = vsel %vm691, %v866, -inf
    %878 = vmax.xlane.f32.xlu0 %v877
    %v879 = vpop.xlane.xlu0 %878
    %v880 = vsub.f32 %v840, %v870
    %v881 = vsub.f32 %v842, %v873
    %v882 = vsub.f32 %v864, %v876
    %v883 = vsub.f32 %v866, %v879
    %v884 = vmul.f32 %v880, 1.442695
    %v885 = vpow.pop %v884
    %v886 = vmul.f32 %v881, 1.442695
    %v887 = vpow.pop %v886
    %v888 = vmul.f32 %v882, 1.442695
    %v889 = vpow.pop %v888
    %v890 = vmul.f32 %v883, 1.442695
    %v891 = vpow.pop %v890
    %v892 = vsel %vm691, %v885, 0.0
    %893 = vadd.xlane.f32.xlu0 %v892
    %v894 = vpop.xlane.xlu0 %893
    %v895 = vsel %vm691, %v887, 0.0
    %896 = vadd.xlane.f32.xlu0 %v895
    %v897 = vpop.xlane.xlu0 %896
    %v898 = vsel %vm691, %v889, 0.0
    %899 = vadd.xlane.f32.xlu0 %v898
    %v900 = vpop.xlane.xlu0 %899
    %v901 = vsel %vm691, %v891, 0.0
    %902 = vadd.xlane.f32.xlu0 %v901
    %v903 = vpop.xlane.xlu0 %902
    %v904 = vrcp.pop %v894
    %v905 = vrcp.pop %v897
    %v906 = vrcp.pop %v900
    %v907 = vrcp.pop %v903
    %v908 = vmul.f32 %v885, %v904
    %v909 = vmul.f32 %v887, %v905
    %v910 = vmul.f32 %v889, %v906
    %v911 = vmul.f32 %v891, %v907
    %v912 = vpack.c.bf16 %v908, %v908
    %v913 = vpack.c.bf16 %v909, %v909
    %v914 = vpack.c.bf16 %v910, %v910
    %v915 = vpack.c.bf16 %v911, %v911
    %v918 = vunpack.c.l.b16 %v912
    %v919 = vunpack.c.l.b16 %v913
    %v920 = vpack.c.b16 %v919, %v918
    %921 = vrot.lane.b32.xlu0 %v749, 120
    %v922 = vpop.permute.xlu0 %921
    %v925 = vsel %vm691, %v920, 0
    %927 = vmatpush.bf16.msra.mxu0 0
    %928 = vmatpush.bf16.msra.mxu0 0
    %929 = vmatpush.bf16.msra.mxu0 0
    %930 = vmatpush.bf16.msra.mxu0 0
    %931 = vmatpush.bf16.msra.mxu0 0
    %932 = vmatpush.bf16.msra.mxu0 0
    %933 = vmatpush.bf16.msra.mxu0 0
    %934 = vmatpush.bf16.msra.mxu0 %v922
    %935 = vmatmul.bf16.gmra.mxu0 %v925
    %v936 = vpop.f32.mrf.mxu0
    %v937 = vadd.f32 0.0, %v936
    %v938 = vpop.f32.mrf.mxu0
    %v939 = vadd.f32 0.0, %v938
    %940 = vdwg.mxu0
    %v943 = vunpack.c.l.b16 %v914
    %v944 = vunpack.c.l.b16 %v915
    %v945 = vpack.c.b16 %v944, %v943
    %946 = vrot.lane.b32.xlu0 %v777, 120
    %v947 = vpop.permute.xlu0 %946
    %v950 = vsel %vm691, %v945, 0
    %952 = vmatpush.bf16.msra.mxu0 0
    %953 = vmatpush.bf16.msra.mxu0 0
    %954 = vmatpush.bf16.msra.mxu0 0
    %955 = vmatpush.bf16.msra.mxu0 0
    %956 = vmatpush.bf16.msra.mxu0 0
    %957 = vmatpush.bf16.msra.mxu0 0
    %958 = vmatpush.bf16.msra.mxu0 0
    %959 = vmatpush.bf16.msra.mxu0 %v947
    %960 = vmatmul.bf16.gmra.mxu0 %v950
    %v961 = vpop.f32.mrf.mxu0
    %v962 = vadd.f32 0.0, %v961
    %v963 = vpop.f32.mrf.mxu0
    %v964 = vadd.f32 0.0, %v963
    %965 = vdwg.mxu0
    %966 = vset.pattern.permute.xlu0 1
    %967 = vperm.xlu0 %966, %v624
    %v968 = vpop.permute.xlu0 %967
    %970 = vset.pattern.permute.xlu0 1
    %971 = vperm.xlu0 %970, %v625
    %v972 = vpop.permute.xlu0 %971
    %974 = vset.pattern.permute.xlu0 1
    %975 = vperm.xlu0 %974, %v626
    %v976 = vpop.permute.xlu0 %975
    %978 = vset.pattern.permute.xlu0 1
    %979 = vperm.xlu0 %978, %v627
    %v980 = vpop.permute.xlu0 %979
    %v982 = vmul.f32 %v937, %v968
    %v983 = vmul.f32 %v939, %v972
    %v984 = vmul.f32 %v962, %v976
    %v985 = vmul.f32 %v964, %v980
    %986 = vrot.lane.b32.xlu0 %v640, 112
    %v987 = vpop.permute.xlu0 %986
    %988 = vrot.lane.b32.xlu0 %v640, 48
    %v989 = vpop.permute.xlu0 %988
    %v991 = vsel %vm643, %v987, 0
    %v994 = vsel %vm643, %v989, 0
    %996 = vmatpush.bf16.xpose.msra.mxu0 0
    %997 = vmatpush.bf16.xpose.msra.mxu0 0
    %998 = vmatpush.bf16.xpose.msra.mxu0 0
    %999 = vmatpush.bf16.xpose.msra.mxu0 0
    %1000 = vmatpush.bf16.xpose.msra.mxu0 0
    %1001 = vmatpush.bf16.xpose.msra.mxu0 0
    %1002 = vmatpush.bf16.xpose.msra.mxu0 0
    %1003 = vmatpush.bf16.xpose.msra.mxu0 %v994
    %1004 = vmatmul.bf16.gmra.mxu0 %v991
    %v1005 = vpop.f32.mrf.mxu0
    %v1006 = vadd.f32 0.0, %v1005
    %v1007 = vpop.f32.mrf.mxu0
    %v1008 = vadd.f32 0.0, %v1007
    %1009 = vdwg.mxu0
    %1010 = vrot.lane.b32.xlu0 %v668, 112
    %v1011 = vpop.permute.xlu0 %1010
    %1012 = vrot.lane.b32.xlu0 %v668, 48
    %v1013 = vpop.permute.xlu0 %1012
    %v1015 = vsel %vm643, %v1011, 0
    %v1018 = vsel %vm643, %v1013, 0
    %1020 = vmatpush.bf16.xpose.msra.mxu0 0
    %1021 = vmatpush.bf16.xpose.msra.mxu0 0
    %1022 = vmatpush.bf16.xpose.msra.mxu0 0
    %1023 = vmatpush.bf16.xpose.msra.mxu0 0
    %1024 = vmatpush.bf16.xpose.msra.mxu0 0
    %1025 = vmatpush.bf16.xpose.msra.mxu0 0
    %1026 = vmatpush.bf16.xpose.msra.mxu0 0
    %1027 = vmatpush.bf16.xpose.msra.mxu0 %v1018
    %1028 = vmatmul.bf16.gmra.mxu0 %v1015
    %v1029 = vpop.f32.mrf.mxu0
    %v1030 = vadd.f32 0.0, %v1029
    %v1031 = vpop.f32.mrf.mxu0
    %v1032 = vadd.f32 0.0, %v1031
    %1033 = vdwg.mxu0
    %v1034 = vsel %vm691, %v1006, -inf
    %1035 = vmax.xlane.f32.xlu0 %v1034
    %v1036 = vpop.xlane.xlu0 %1035
    %v1037 = vsel %vm691, %v1008, -inf
    %1038 = vmax.xlane.f32.xlu0 %v1037
    %v1039 = vpop.xlane.xlu0 %1038
    %v1040 = vsel %vm691, %v1030, -inf
    %1041 = vmax.xlane.f32.xlu0 %v1040
    %v1042 = vpop.xlane.xlu0 %1041
    %v1043 = vsel %vm691, %v1032, -inf
    %1044 = vmax.xlane.f32.xlu0 %v1043
    %v1045 = vpop.xlane.xlu0 %1044
    %v1046 = vsub.f32 %v1006, %v1036
    %v1047 = vsub.f32 %v1008, %v1039
    %v1048 = vsub.f32 %v1030, %v1042
    %v1049 = vsub.f32 %v1032, %v1045
    %v1050 = vmul.f32 %v1046, 1.442695
    %v1051 = vpow.pop %v1050
    %v1052 = vmul.f32 %v1047, 1.442695
    %v1053 = vpow.pop %v1052
    %v1054 = vmul.f32 %v1048, 1.442695
    %v1055 = vpow.pop %v1054
    %v1056 = vmul.f32 %v1049, 1.442695
    %v1057 = vpow.pop %v1056
    %v1058 = vsel %vm691, %v1051, 0.0
    %1059 = vadd.xlane.f32.xlu0 %v1058
    %v1060 = vpop.xlane.xlu0 %1059
    %v1061 = vsel %vm691, %v1053, 0.0
    %1062 = vadd.xlane.f32.xlu0 %v1061
    %v1063 = vpop.xlane.xlu0 %1062
    %v1064 = vsel %vm691, %v1055, 0.0
    %1065 = vadd.xlane.f32.xlu0 %v1064
    %v1066 = vpop.xlane.xlu0 %1065
    %v1067 = vsel %vm691, %v1057, 0.0
    %1068 = vadd.xlane.f32.xlu0 %v1067
    %v1069 = vpop.xlane.xlu0 %1068
    %v1070 = vrcp.pop %v1060
    %v1071 = vrcp.pop %v1063
    %v1072 = vrcp.pop %v1066
    %v1073 = vrcp.pop %v1069
    %v1074 = vmul.f32 %v1051, %v1070
    %v1075 = vmul.f32 %v1053, %v1071
    %v1076 = vmul.f32 %v1055, %v1072
    %v1077 = vmul.f32 %v1057, %v1073
    %v1078 = vpack.c.bf16 %v1074, %v1074
    %v1079 = vpack.c.bf16 %v1075, %v1075
    %v1080 = vpack.c.bf16 %v1076, %v1076
    %v1081 = vpack.c.bf16 %v1077, %v1077
    %v1084 = vunpack.c.l.b16 %v1078
    %v1085 = vunpack.c.l.b16 %v1079
    %v1086 = vpack.c.b16 %v1085, %v1084
    %1087 = vrot.lane.b32.xlu0 %v749, 112
    %v1088 = vpop.permute.xlu0 %1087
    %v1091 = vsel %vm691, %v1086, 0
    %1093 = vmatpush.bf16.msra.mxu0 0
    %1094 = vmatpush.bf16.msra.mxu0 0
    %1095 = vmatpush.bf16.msra.mxu0 0
    %1096 = vmatpush.bf16.msra.mxu0 0
    %1097 = vmatpush.bf16.msra.mxu0 0
    %1098 = vmatpush.bf16.msra.mxu0 0
    %1099 = vmatpush.bf16.msra.mxu0 0
    %1100 = vmatpush.bf16.msra.mxu0 %v1088
    %1101 = vmatmul.bf16.gmra.mxu0 %v1091
    %v1102 = vpop.f32.mrf.mxu0
    %v1103 = vadd.f32 0.0, %v1102
    %v1104 = vpop.f32.mrf.mxu0
    %v1105 = vadd.f32 0.0, %v1104
    %1106 = vdwg.mxu0
    %v1109 = vunpack.c.l.b16 %v1080
    %v1110 = vunpack.c.l.b16 %v1081
    %v1111 = vpack.c.b16 %v1110, %v1109
    %1112 = vrot.lane.b32.xlu0 %v777, 112
    %v1113 = vpop.permute.xlu0 %1112
    %v1116 = vsel %vm691, %v1111, 0
    %1118 = vmatpush.bf16.msra.mxu0 0
    %1119 = vmatpush.bf16.msra.mxu0 0
    %1120 = vmatpush.bf16.msra.mxu0 0
    %1121 = vmatpush.bf16.msra.mxu0 0
    %1122 = vmatpush.bf16.msra.mxu0 0
    %1123 = vmatpush.bf16.msra.mxu0 0
    %1124 = vmatpush.bf16.msra.mxu0 0
    %1125 = vmatpush.bf16.msra.mxu0 %v1113
    %1126 = vmatmul.bf16.gmra.mxu0 %v1116
    %v1127 = vpop.f32.mrf.mxu0
    %v1128 = vadd.f32 0.0, %v1127
    %v1129 = vpop.f32.mrf.mxu0
    %v1130 = vadd.f32 0.0, %v1129
    %1131 = vdwg.mxu0
    %1132 = vset.pattern.permute.xlu0 2
    %1133 = vperm.xlu0 %1132, %v624
    %v1134 = vpop.permute.xlu0 %1133
    %1136 = vset.pattern.permute.xlu0 2
    %1137 = vperm.xlu0 %1136, %v625
    %v1138 = vpop.permute.xlu0 %1137
    %1140 = vset.pattern.permute.xlu0 2
    %1141 = vperm.xlu0 %1140, %v626
    %v1142 = vpop.permute.xlu0 %1141
    %1144 = vset.pattern.permute.xlu0 2
    %1145 = vperm.xlu0 %1144, %v627
    %v1146 = vpop.permute.xlu0 %1145
    %v1148 = vmul.f32 %v1103, %v1134
    %v1149 = vmul.f32 %v1105, %v1138
    %v1150 = vmul.f32 %v1128, %v1142
    %v1151 = vmul.f32 %v1130, %v1146
    %1152 = vrot.lane.b32.xlu0 %v640, 104
    %v1153 = vpop.permute.xlu0 %1152
    %1154 = vrot.lane.b32.xlu0 %v640, 40
    %v1155 = vpop.permute.xlu0 %1154
    %v1157 = vsel %vm643, %v1153, 0
    %v1160 = vsel %vm643, %v1155, 0
    %1162 = vmatpush.bf16.xpose.msra.mxu0 0
    %1163 = vmatpush.bf16.xpose.msra.mxu0 0
    %1164 = vmatpush.bf16.xpose.msra.mxu0 0
    %1165 = vmatpush.bf16.xpose.msra.mxu0 0
    %1166 = vmatpush.bf16.xpose.msra.mxu0 0
    %1167 = vmatpush.bf16.xpose.msra.mxu0 0
    %1168 = vmatpush.bf16.xpose.msra.mxu0 0
    %1169 = vmatpush.bf16.xpose.msra.mxu0 %v1160
    %1170 = vmatmul.bf16.gmra.mxu0 %v1157
    %v1171 = vpop.f32.mrf.mxu0
    %v1172 = vadd.f32 0.0, %v1171
    %v1173 = vpop.f32.mrf.mxu0
    %v1174 = vadd.f32 0.0, %v1173
    %1175 = vdwg.mxu0
    %1176 = vrot.lane.b32.xlu0 %v668, 104
    %v1177 = vpop.permute.xlu0 %1176
    %1178 = vrot.lane.b32.xlu0 %v668, 40
    %v1179 = vpop.permute.xlu0 %1178
    %v1181 = vsel %vm643, %v1177, 0
    %v1184 = vsel %vm643, %v1179, 0
    %1186 = vmatpush.bf16.xpose.msra.mxu0 0
    %1187 = vmatpush.bf16.xpose.msra.mxu0 0
    %1188 = vmatpush.bf16.xpose.msra.mxu0 0
    %1189 = vmatpush.bf16.xpose.msra.mxu0 0
    %1190 = vmatpush.bf16.xpose.msra.mxu0 0
    %1191 = vmatpush.bf16.xpose.msra.mxu0 0
    %1192 = vmatpush.bf16.xpose.msra.mxu0 0
    %1193 = vmatpush.bf16.xpose.msra.mxu0 %v1184
    %1194 = vmatmul.bf16.gmra.mxu0 %v1181
    %v1195 = vpop.f32.mrf.mxu0
    %v1196 = vadd.f32 0.0, %v1195
    %v1197 = vpop.f32.mrf.mxu0
    %v1198 = vadd.f32 0.0, %v1197
    %1199 = vdwg.mxu0
    %v1200 = vsel %vm691, %v1172, -inf
    %1201 = vmax.xlane.f32.xlu0 %v1200
    %v1202 = vpop.xlane.xlu0 %1201
    %v1203 = vsel %vm691, %v1174, -inf
    %1204 = vmax.xlane.f32.xlu0 %v1203
    %v1205 = vpop.xlane.xlu0 %1204
    %v1206 = vsel %vm691, %v1196, -inf
    %1207 = vmax.xlane.f32.xlu0 %v1206
    %v1208 = vpop.xlane.xlu0 %1207
    %v1209 = vsel %vm691, %v1198, -inf
    %1210 = vmax.xlane.f32.xlu0 %v1209
    %v1211 = vpop.xlane.xlu0 %1210
    %v1212 = vsub.f32 %v1172, %v1202
    %v1213 = vsub.f32 %v1174, %v1205
    %v1214 = vsub.f32 %v1196, %v1208
    %v1215 = vsub.f32 %v1198, %v1211
    %v1216 = vmul.f32 %v1212, 1.442695
    %v1217 = vpow.pop %v1216
    %v1218 = vmul.f32 %v1213, 1.442695
    %v1219 = vpow.pop %v1218
    %v1220 = vmul.f32 %v1214, 1.442695
    %v1221 = vpow.pop %v1220
    %v1222 = vmul.f32 %v1215, 1.442695
    %v1223 = vpow.pop %v1222
    %v1224 = vsel %vm691, %v1217, 0.0
    %1225 = vadd.xlane.f32.xlu0 %v1224
    %v1226 = vpop.xlane.xlu0 %1225
    %v1227 = vsel %vm691, %v1219, 0.0
    %1228 = vadd.xlane.f32.xlu0 %v1227
    %v1229 = vpop.xlane.xlu0 %1228
    %v1230 = vsel %vm691, %v1221, 0.0
    %1231 = vadd.xlane.f32.xlu0 %v1230
    %v1232 = vpop.xlane.xlu0 %1231
    %v1233 = vsel %vm691, %v1223, 0.0
    %1234 = vadd.xlane.f32.xlu0 %v1233
    %v1235 = vpop.xlane.xlu0 %1234
    %v1236 = vrcp.pop %v1226
    %v1237 = vrcp.pop %v1229
    %v1238 = vrcp.pop %v1232
    %v1239 = vrcp.pop %v1235
    %v1240 = vmul.f32 %v1217, %v1236
    %v1241 = vmul.f32 %v1219, %v1237
    %v1242 = vmul.f32 %v1221, %v1238
    %v1243 = vmul.f32 %v1223, %v1239
    %v1244 = vpack.c.bf16 %v1240, %v1240
    %v1245 = vpack.c.bf16 %v1241, %v1241
    %v1246 = vpack.c.bf16 %v1242, %v1242
    %v1247 = vpack.c.bf16 %v1243, %v1243
    %v1250 = vunpack.c.l.b16 %v1244
    %v1251 = vunpack.c.l.b16 %v1245
    %v1252 = vpack.c.b16 %v1251, %v1250
    %1253 = vrot.lane.b32.xlu0 %v749, 104
    %v1254 = vpop.permute.xlu0 %1253
    %v1257 = vsel %vm691, %v1252, 0
    %1259 = vmatpush.bf16.msra.mxu0 0
    %1260 = vmatpush.bf16.msra.mxu0 0
    %1261 = vmatpush.bf16.msra.mxu0 0
    %1262 = vmatpush.bf16.msra.mxu0 0
    %1263 = vmatpush.bf16.msra.mxu0 0
    %1264 = vmatpush.bf16.msra.mxu0 0
    %1265 = vmatpush.bf16.msra.mxu0 0
    %1266 = vmatpush.bf16.msra.mxu0 %v1254
    %1267 = vmatmul.bf16.gmra.mxu0 %v1257
    %v1268 = vpop.f32.mrf.mxu0
    %v1269 = vadd.f32 0.0, %v1268
    %v1270 = vpop.f32.mrf.mxu0
    %v1271 = vadd.f32 0.0, %v1270
    %1272 = vdwg.mxu0
    %v1275 = vunpack.c.l.b16 %v1246
    %v1276 = vunpack.c.l.b16 %v1247
    %v1277 = vpack.c.b16 %v1276, %v1275
    %1278 = vrot.lane.b32.xlu0 %v777, 104
    %v1279 = vpop.permute.xlu0 %1278
    %v1282 = vsel %vm691, %v1277, 0
    %1284 = vmatpush.bf16.msra.mxu0 0
    %1285 = vmatpush.bf16.msra.mxu0 0
    %1286 = vmatpush.bf16.msra.mxu0 0
    %1287 = vmatpush.bf16.msra.mxu0 0
    %1288 = vmatpush.bf16.msra.mxu0 0
    %1289 = vmatpush.bf16.msra.mxu0 0
    %1290 = vmatpush.bf16.msra.mxu0 0
    %1291 = vmatpush.bf16.msra.mxu0 %v1279
    %1292 = vmatmul.bf16.gmra.mxu0 %v1282
    %v1293 = vpop.f32.mrf.mxu0
    %v1294 = vadd.f32 0.0, %v1293
    %v1295 = vpop.f32.mrf.mxu0
    %v1296 = vadd.f32 0.0, %v1295
    %1297 = vdwg.mxu0
    %1298 = vset.pattern.permute.xlu0 3
    %1299 = vperm.xlu0 %1298, %v624
    %v1300 = vpop.permute.xlu0 %1299
    %1302 = vset.pattern.permute.xlu0 3
    %1303 = vperm.xlu0 %1302, %v625
    %v1304 = vpop.permute.xlu0 %1303
    %1306 = vset.pattern.permute.xlu0 3
    %1307 = vperm.xlu0 %1306, %v626
    %v1308 = vpop.permute.xlu0 %1307
    %1310 = vset.pattern.permute.xlu0 3
    %1311 = vperm.xlu0 %1310, %v627
    %v1312 = vpop.permute.xlu0 %1311
    %v1314 = vmul.f32 %v1269, %v1300
    %v1315 = vmul.f32 %v1271, %v1304
    %v1316 = vmul.f32 %v1294, %v1308
    %v1317 = vmul.f32 %v1296, %v1312
    %1318 = vrot.lane.b32.xlu0 %v640, 96
    %v1319 = vpop.permute.xlu0 %1318
    %1320 = vrot.lane.b32.xlu0 %v640, 32
    %v1321 = vpop.permute.xlu0 %1320
    %v1323 = vsel %vm643, %v1319, 0
    %v1326 = vsel %vm643, %v1321, 0
    %1328 = vmatpush.bf16.xpose.msra.mxu0 0
    %1329 = vmatpush.bf16.xpose.msra.mxu0 0
    %1330 = vmatpush.bf16.xpose.msra.mxu0 0
    %1331 = vmatpush.bf16.xpose.msra.mxu0 0
    %1332 = vmatpush.bf16.xpose.msra.mxu0 0
    %1333 = vmatpush.bf16.xpose.msra.mxu0 0
    %1334 = vmatpush.bf16.xpose.msra.mxu0 0
    %1335 = vmatpush.bf16.xpose.msra.mxu0 %v1326
    %1336 = vmatmul.bf16.gmra.mxu0 %v1323
    %v1337 = vpop.f32.mrf.mxu0
    %v1338 = vadd.f32 0.0, %v1337
    %v1339 = vpop.f32.mrf.mxu0
    %v1340 = vadd.f32 0.0, %v1339
    %1341 = vdwg.mxu0
    %1342 = vrot.lane.b32.xlu0 %v668, 96
    %v1343 = vpop.permute.xlu0 %1342
    %1344 = vrot.lane.b32.xlu0 %v668, 32
    %v1345 = vpop.permute.xlu0 %1344
    %v1347 = vsel %vm643, %v1343, 0
    %v1350 = vsel %vm643, %v1345, 0
    %1352 = vmatpush.bf16.xpose.msra.mxu0 0
    %1353 = vmatpush.bf16.xpose.msra.mxu0 0
    %1354 = vmatpush.bf16.xpose.msra.mxu0 0
    %1355 = vmatpush.bf16.xpose.msra.mxu0 0
    %1356 = vmatpush.bf16.xpose.msra.mxu0 0
    %1357 = vmatpush.bf16.xpose.msra.mxu0 0
    %1358 = vmatpush.bf16.xpose.msra.mxu0 0
    %1359 = vmatpush.bf16.xpose.msra.mxu0 %v1350
    %1360 = vmatmul.bf16.gmra.mxu0 %v1347
    %v1361 = vpop.f32.mrf.mxu0
    %v1362 = vadd.f32 0.0, %v1361
    %v1363 = vpop.f32.mrf.mxu0
    %v1364 = vadd.f32 0.0, %v1363
    %1365 = vdwg.mxu0
    %v1366 = vsel %vm691, %v1338, -inf
    %1367 = vmax.xlane.f32.xlu0 %v1366
    %v1368 = vpop.xlane.xlu0 %1367
    %v1369 = vsel %vm691, %v1340, -inf
    %1370 = vmax.xlane.f32.xlu0 %v1369
    %v1371 = vpop.xlane.xlu0 %1370
    %v1372 = vsel %vm691, %v1362, -inf
    %1373 = vmax.xlane.f32.xlu0 %v1372
    %v1374 = vpop.xlane.xlu0 %1373
    %v1375 = vsel %vm691, %v1364, -inf
    %1376 = vmax.xlane.f32.xlu0 %v1375
    %v1377 = vpop.xlane.xlu0 %1376
    %v1378 = vsub.f32 %v1338, %v1368
    %v1379 = vsub.f32 %v1340, %v1371
    %v1380 = vsub.f32 %v1362, %v1374
    %v1381 = vsub.f32 %v1364, %v1377
    %v1382 = vmul.f32 %v1378, 1.442695
    %v1383 = vpow.pop %v1382
    %v1384 = vmul.f32 %v1379, 1.442695
    %v1385 = vpow.pop %v1384
    %v1386 = vmul.f32 %v1380, 1.442695
    %v1387 = vpow.pop %v1386
    %v1388 = vmul.f32 %v1381, 1.442695
    %v1389 = vpow.pop %v1388
    %v1390 = vsel %vm691, %v1383, 0.0
    %1391 = vadd.xlane.f32.xlu0 %v1390
    %v1392 = vpop.xlane.xlu0 %1391
    %v1393 = vsel %vm691, %v1385, 0.0
    %1394 = vadd.xlane.f32.xlu0 %v1393
    %v1395 = vpop.xlane.xlu0 %1394
    %v1396 = vsel %vm691, %v1387, 0.0
    %1397 = vadd.xlane.f32.xlu0 %v1396
    %v1398 = vpop.xlane.xlu0 %1397
    %v1399 = vsel %vm691, %v1389, 0.0
    %1400 = vadd.xlane.f32.xlu0 %v1399
    %v1401 = vpop.xlane.xlu0 %1400
    %v1402 = vrcp.pop %v1392
    %v1403 = vrcp.pop %v1395
    %v1404 = vrcp.pop %v1398
    %v1405 = vrcp.pop %v1401
    %v1406 = vmul.f32 %v1383, %v1402
    %v1407 = vmul.f32 %v1385, %v1403
    %v1408 = vmul.f32 %v1387, %v1404
    %v1409 = vmul.f32 %v1389, %v1405
    %v1410 = vpack.c.bf16 %v1406, %v1406
    %v1411 = vpack.c.bf16 %v1407, %v1407
    %v1412 = vpack.c.bf16 %v1408, %v1408
    %v1413 = vpack.c.bf16 %v1409, %v1409
    %v1416 = vunpack.c.l.b16 %v1410
    %v1417 = vunpack.c.l.b16 %v1411
    %v1418 = vpack.c.b16 %v1417, %v1416
    %1419 = vrot.lane.b32.xlu0 %v749, 96
    %v1420 = vpop.permute.xlu0 %1419
    %v1423 = vsel %vm691, %v1418, 0
    %1425 = vmatpush.bf16.msra.mxu0 0
    %1426 = vmatpush.bf16.msra.mxu0 0
    %1427 = vmatpush.bf16.msra.mxu0 0
    %1428 = vmatpush.bf16.msra.mxu0 0
    %1429 = vmatpush.bf16.msra.mxu0 0
    %1430 = vmatpush.bf16.msra.mxu0 0
    %1431 = vmatpush.bf16.msra.mxu0 0
    %1432 = vmatpush.bf16.msra.mxu0 %v1420
    %1433 = vmatmul.bf16.gmra.mxu0 %v1423
    %v1434 = vpop.f32.mrf.mxu0
    %v1435 = vadd.f32 0.0, %v1434
    %v1436 = vpop.f32.mrf.mxu0
    %v1437 = vadd.f32 0.0, %v1436
    %1438 = vdwg.mxu0
    %v1441 = vunpack.c.l.b16 %v1412
    %v1442 = vunpack.c.l.b16 %v1413
    %v1443 = vpack.c.b16 %v1442, %v1441
    %1444 = vrot.lane.b32.xlu0 %v777, 96
    %v1445 = vpop.permute.xlu0 %1444
    %v1448 = vsel %vm691, %v1443, 0
    %1450 = vmatpush.bf16.msra.mxu0 0
    %1451 = vmatpush.bf16.msra.mxu0 0
    %1452 = vmatpush.bf16.msra.mxu0 0
    %1453 = vmatpush.bf16.msra.mxu0 0
    %1454 = vmatpush.bf16.msra.mxu0 0
    %1455 = vmatpush.bf16.msra.mxu0 0
    %1456 = vmatpush.bf16.msra.mxu0 0
    %1457 = vmatpush.bf16.msra.mxu0 %v1445
    %1458 = vmatmul.bf16.gmra.mxu0 %v1448
    %v1459 = vpop.f32.mrf.mxu0
    %v1460 = vadd.f32 0.0, %v1459
    %v1461 = vpop.f32.mrf.mxu0
    %v1462 = vadd.f32 0.0, %v1461
    %1463 = vdwg.mxu0
    %1464 = vset.pattern.permute.xlu0 4
    %1465 = vperm.xlu0 %1464, %v624
    %v1466 = vpop.permute.xlu0 %1465
    %1468 = vset.pattern.permute.xlu0 4
    %1469 = vperm.xlu0 %1468, %v625
    %v1470 = vpop.permute.xlu0 %1469
    %1472 = vset.pattern.permute.xlu0 4
    %1473 = vperm.xlu0 %1472, %v626
    %v1474 = vpop.permute.xlu0 %1473
    %1476 = vset.pattern.permute.xlu0 4
    %1477 = vperm.xlu0 %1476, %v627
    %v1478 = vpop.permute.xlu0 %1477
    %v1480 = vmul.f32 %v1435, %v1466
    %v1481 = vmul.f32 %v1437, %v1470
    %v1482 = vmul.f32 %v1460, %v1474
    %v1483 = vmul.f32 %v1462, %v1478
    %1484 = vrot.lane.b32.xlu0 %v640, 88
    %v1485 = vpop.permute.xlu0 %1484
    %1486 = vrot.lane.b32.xlu0 %v640, 24
    %v1487 = vpop.permute.xlu0 %1486
    %v1489 = vsel %vm643, %v1485, 0
    %v1492 = vsel %vm643, %v1487, 0
    %1494 = vmatpush.bf16.xpose.msra.mxu0 0
    %1495 = vmatpush.bf16.xpose.msra.mxu0 0
    %1496 = vmatpush.bf16.xpose.msra.mxu0 0
    %1497 = vmatpush.bf16.xpose.msra.mxu0 0
    %1498 = vmatpush.bf16.xpose.msra.mxu0 0
    %1499 = vmatpush.bf16.xpose.msra.mxu0 0
    %1500 = vmatpush.bf16.xpose.msra.mxu0 0
    %1501 = vmatpush.bf16.xpose.msra.mxu0 %v1492
    %1502 = vmatmul.bf16.gmra.mxu0 %v1489
    %v1503 = vpop.f32.mrf.mxu0
    %v1504 = vadd.f32 0.0, %v1503
    %v1505 = vpop.f32.mrf.mxu0
    %v1506 = vadd.f32 0.0, %v1505
    %1507 = vdwg.mxu0
    %1508 = vrot.lane.b32.xlu0 %v668, 88
    %v1509 = vpop.permute.xlu0 %1508
    %1510 = vrot.lane.b32.xlu0 %v668, 24
    %v1511 = vpop.permute.xlu0 %1510
    %v1513 = vsel %vm643, %v1509, 0
    %v1516 = vsel %vm643, %v1511, 0
    %1518 = vmatpush.bf16.xpose.msra.mxu0 0
    %1519 = vmatpush.bf16.xpose.msra.mxu0 0
    %1520 = vmatpush.bf16.xpose.msra.mxu0 0
    %1521 = vmatpush.bf16.xpose.msra.mxu0 0
    %1522 = vmatpush.bf16.xpose.msra.mxu0 0
    %1523 = vmatpush.bf16.xpose.msra.mxu0 0
    %1524 = vmatpush.bf16.xpose.msra.mxu0 0
    %1525 = vmatpush.bf16.xpose.msra.mxu0 %v1516
    %1526 = vmatmul.bf16.gmra.mxu0 %v1513
    %v1527 = vpop.f32.mrf.mxu0
    %v1528 = vadd.f32 0.0, %v1527
    %v1529 = vpop.f32.mrf.mxu0
    %v1530 = vadd.f32 0.0, %v1529
    %1531 = vdwg.mxu0
    %v1532 = vsel %vm691, %v1504, -inf
    %1533 = vmax.xlane.f32.xlu0 %v1532
    %v1534 = vpop.xlane.xlu0 %1533
    %v1535 = vsel %vm691, %v1506, -inf
    %1536 = vmax.xlane.f32.xlu0 %v1535
    %v1537 = vpop.xlane.xlu0 %1536
    %v1538 = vsel %vm691, %v1528, -inf
    %1539 = vmax.xlane.f32.xlu0 %v1538
    %v1540 = vpop.xlane.xlu0 %1539
    %v1541 = vsel %vm691, %v1530, -inf
    %1542 = vmax.xlane.f32.xlu0 %v1541
    %v1543 = vpop.xlane.xlu0 %1542
    %v1544 = vsub.f32 %v1504, %v1534
    %v1545 = vsub.f32 %v1506, %v1537
    %v1546 = vsub.f32 %v1528, %v1540
    %v1547 = vsub.f32 %v1530, %v1543
    %v1548 = vmul.f32 %v1544, 1.442695
    %v1549 = vpow.pop %v1548
    %v1550 = vmul.f32 %v1545, 1.442695
    %v1551 = vpow.pop %v1550
    %v1552 = vmul.f32 %v1546, 1.442695
    %v1553 = vpow.pop %v1552
    %v1554 = vmul.f32 %v1547, 1.442695
    %v1555 = vpow.pop %v1554
    %v1556 = vsel %vm691, %v1549, 0.0
    %1557 = vadd.xlane.f32.xlu0 %v1556
    %v1558 = vpop.xlane.xlu0 %1557
    %v1559 = vsel %vm691, %v1551, 0.0
    %1560 = vadd.xlane.f32.xlu0 %v1559
    %v1561 = vpop.xlane.xlu0 %1560
    %v1562 = vsel %vm691, %v1553, 0.0
    %1563 = vadd.xlane.f32.xlu0 %v1562
    %v1564 = vpop.xlane.xlu0 %1563
    %v1565 = vsel %vm691, %v1555, 0.0
    %1566 = vadd.xlane.f32.xlu0 %v1565
    %v1567 = vpop.xlane.xlu0 %1566
    %v1568 = vrcp.pop %v1558
    %v1569 = vrcp.pop %v1561
    %v1570 = vrcp.pop %v1564
    %v1571 = vrcp.pop %v1567
    %v1572 = vmul.f32 %v1549, %v1568
    %v1573 = vmul.f32 %v1551, %v1569
    %v1574 = vmul.f32 %v1553, %v1570
    %v1575 = vmul.f32 %v1555, %v1571
    %v1576 = vpack.c.bf16 %v1572, %v1572
    %v1577 = vpack.c.bf16 %v1573, %v1573
    %v1578 = vpack.c.bf16 %v1574, %v1574
    %v1579 = vpack.c.bf16 %v1575, %v1575
    %v1582 = vunpack.c.l.b16 %v1576
    %v1583 = vunpack.c.l.b16 %v1577
    %v1584 = vpack.c.b16 %v1583, %v1582
    %1585 = vrot.lane.b32.xlu0 %v749, 88
    %v1586 = vpop.permute.xlu0 %1585
    %v1589 = vsel %vm691, %v1584, 0
    %1591 = vmatpush.bf16.msra.mxu0 0
    %1592 = vmatpush.bf16.msra.mxu0 0
    %1593 = vmatpush.bf16.msra.mxu0 0
    %1594 = vmatpush.bf16.msra.mxu0 0
    %1595 = vmatpush.bf16.msra.mxu0 0
    %1596 = vmatpush.bf16.msra.mxu0 0
    %1597 = vmatpush.bf16.msra.mxu0 0
    %1598 = vmatpush.bf16.msra.mxu0 %v1586
    %1599 = vmatmul.bf16.gmra.mxu0 %v1589
    %v1600 = vpop.f32.mrf.mxu0
    %v1601 = vadd.f32 0.0, %v1600
    %v1602 = vpop.f32.mrf.mxu0
    %v1603 = vadd.f32 0.0, %v1602
    %1604 = vdwg.mxu0
    %v1607 = vunpack.c.l.b16 %v1578
    %v1608 = vunpack.c.l.b16 %v1579
    %v1609 = vpack.c.b16 %v1608, %v1607
    %1610 = vrot.lane.b32.xlu0 %v777, 88
    %v1611 = vpop.permute.xlu0 %1610
    %v1614 = vsel %vm691, %v1609, 0
    %1616 = vmatpush.bf16.msra.mxu0 0
    %1617 = vmatpush.bf16.msra.mxu0 0
    %1618 = vmatpush.bf16.msra.mxu0 0
    %1619 = vmatpush.bf16.msra.mxu0 0
    %1620 = vmatpush.bf16.msra.mxu0 0
    %1621 = vmatpush.bf16.msra.mxu0 0
    %1622 = vmatpush.bf16.msra.mxu0 0
    %1623 = vmatpush.bf16.msra.mxu0 %v1611
    %1624 = vmatmul.bf16.gmra.mxu0 %v1614
    %v1625 = vpop.f32.mrf.mxu0
    %v1626 = vadd.f32 0.0, %v1625
    %v1627 = vpop.f32.mrf.mxu0
    %v1628 = vadd.f32 0.0, %v1627
    %1629 = vdwg.mxu0
    %1630 = vset.pattern.permute.xlu0 5
    %1631 = vperm.xlu0 %1630, %v624
    %v1632 = vpop.permute.xlu0 %1631
    %1634 = vset.pattern.permute.xlu0 5
    %1635 = vperm.xlu0 %1634, %v625
    %v1636 = vpop.permute.xlu0 %1635
    %1638 = vset.pattern.permute.xlu0 5
    %1639 = vperm.xlu0 %1638, %v626
    %v1640 = vpop.permute.xlu0 %1639
    %1642 = vset.pattern.permute.xlu0 5
    %1643 = vperm.xlu0 %1642, %v627
    %v1644 = vpop.permute.xlu0 %1643
    %v1646 = vmul.f32 %v1601, %v1632
    %v1647 = vmul.f32 %v1603, %v1636
    %v1648 = vmul.f32 %v1626, %v1640
    %v1649 = vmul.f32 %v1628, %v1644
    %1650 = vrot.lane.b32.xlu0 %v640, 80
    %v1651 = vpop.permute.xlu0 %1650
    %1652 = vrot.lane.b32.xlu0 %v640, 16
    %v1653 = vpop.permute.xlu0 %1652
    %v1655 = vsel %vm643, %v1651, 0
    %v1658 = vsel %vm643, %v1653, 0
    %1660 = vmatpush.bf16.xpose.msra.mxu0 0
    %1661 = vmatpush.bf16.xpose.msra.mxu0 0
    %1662 = vmatpush.bf16.xpose.msra.mxu0 0
    %1663 = vmatpush.bf16.xpose.msra.mxu0 0
    %1664 = vmatpush.bf16.xpose.msra.mxu0 0
    %1665 = vmatpush.bf16.xpose.msra.mxu0 0
    %1666 = vmatpush.bf16.xpose.msra.mxu0 0
    %1667 = vmatpush.bf16.xpose.msra.mxu0 %v1658
    %1668 = vmatmul.bf16.gmra.mxu0 %v1655
    %v1669 = vpop.f32.mrf.mxu0
    %v1670 = vadd.f32 0.0, %v1669
    %v1671 = vpop.f32.mrf.mxu0
    %v1672 = vadd.f32 0.0, %v1671
    %1673 = vdwg.mxu0
    %1674 = vrot.lane.b32.xlu0 %v668, 80
    %v1675 = vpop.permute.xlu0 %1674
    %1676 = vrot.lane.b32.xlu0 %v668, 16
    %v1677 = vpop.permute.xlu0 %1676
    %v1679 = vsel %vm643, %v1675, 0
    %v1682 = vsel %vm643, %v1677, 0
    %1684 = vmatpush.bf16.xpose.msra.mxu0 0
    %1685 = vmatpush.bf16.xpose.msra.mxu0 0
    %1686 = vmatpush.bf16.xpose.msra.mxu0 0
    %1687 = vmatpush.bf16.xpose.msra.mxu0 0
    %1688 = vmatpush.bf16.xpose.msra.mxu0 0
    %1689 = vmatpush.bf16.xpose.msra.mxu0 0
    %1690 = vmatpush.bf16.xpose.msra.mxu0 0
    %1691 = vmatpush.bf16.xpose.msra.mxu0 %v1682
    %1692 = vmatmul.bf16.gmra.mxu0 %v1679
    %v1693 = vpop.f32.mrf.mxu0
    %v1694 = vadd.f32 0.0, %v1693
    %v1695 = vpop.f32.mrf.mxu0
    %v1696 = vadd.f32 0.0, %v1695
    %1697 = vdwg.mxu0
    %v1698 = vsel %vm691, %v1670, -inf
    %1699 = vmax.xlane.f32.xlu0 %v1698
    %v1700 = vpop.xlane.xlu0 %1699
    %v1701 = vsel %vm691, %v1672, -inf
    %1702 = vmax.xlane.f32.xlu0 %v1701
    %v1703 = vpop.xlane.xlu0 %1702
    %v1704 = vsel %vm691, %v1694, -inf
    %1705 = vmax.xlane.f32.xlu0 %v1704
    %v1706 = vpop.xlane.xlu0 %1705
    %v1707 = vsel %vm691, %v1696, -inf
    %1708 = vmax.xlane.f32.xlu0 %v1707
    %v1709 = vpop.xlane.xlu0 %1708
    %v1710 = vsub.f32 %v1670, %v1700
    %v1711 = vsub.f32 %v1672, %v1703
    %v1712 = vsub.f32 %v1694, %v1706
    %v1713 = vsub.f32 %v1696, %v1709
    %v1714 = vmul.f32 %v1710, 1.442695
    %v1715 = vpow.pop %v1714
    %v1716 = vmul.f32 %v1711, 1.442695
    %v1717 = vpow.pop %v1716
    %v1718 = vmul.f32 %v1712, 1.442695
    %v1719 = vpow.pop %v1718
    %v1720 = vmul.f32 %v1713, 1.442695
    %v1721 = vpow.pop %v1720
    %v1722 = vsel %vm691, %v1715, 0.0
    %1723 = vadd.xlane.f32.xlu0 %v1722
    %v1724 = vpop.xlane.xlu0 %1723
    %v1725 = vsel %vm691, %v1717, 0.0
    %1726 = vadd.xlane.f32.xlu0 %v1725
    %v1727 = vpop.xlane.xlu0 %1726
    %v1728 = vsel %vm691, %v1719, 0.0
    %1729 = vadd.xlane.f32.xlu0 %v1728
    %v1730 = vpop.xlane.xlu0 %1729
    %v1731 = vsel %vm691, %v1721, 0.0
    %1732 = vadd.xlane.f32.xlu0 %v1731
    %v1733 = vpop.xlane.xlu0 %1732
    %v1734 = vrcp.pop %v1724
    %v1735 = vrcp.pop %v1727
    %v1736 = vrcp.pop %v1730
    %v1737 = vrcp.pop %v1733
    %v1738 = vmul.f32 %v1715, %v1734
    %v1739 = vmul.f32 %v1717, %v1735
    %v1740 = vmul.f32 %v1719, %v1736
    %v1741 = vmul.f32 %v1721, %v1737
    %v1742 = vpack.c.bf16 %v1738, %v1738
    %v1743 = vpack.c.bf16 %v1739, %v1739
    %v1744 = vpack.c.bf16 %v1740, %v1740
    %v1745 = vpack.c.bf16 %v1741, %v1741
    %v1748 = vunpack.c.l.b16 %v1742
    %v1749 = vunpack.c.l.b16 %v1743
    %v1750 = vpack.c.b16 %v1749, %v1748
    %1751 = vrot.lane.b32.xlu0 %v749, 80
    %v1752 = vpop.permute.xlu0 %1751
    %v1755 = vsel %vm691, %v1750, 0
    %1757 = vmatpush.bf16.msra.mxu0 0
    %1758 = vmatpush.bf16.msra.mxu0 0
    %1759 = vmatpush.bf16.msra.mxu0 0
    %1760 = vmatpush.bf16.msra.mxu0 0
    %1761 = vmatpush.bf16.msra.mxu0 0
    %1762 = vmatpush.bf16.msra.mxu0 0
    %1763 = vmatpush.bf16.msra.mxu0 0
    %1764 = vmatpush.bf16.msra.mxu0 %v1752
    %1765 = vmatmul.bf16.gmra.mxu0 %v1755
    %v1766 = vpop.f32.mrf.mxu0
    %v1767 = vadd.f32 0.0, %v1766
    %v1768 = vpop.f32.mrf.mxu0
    %v1769 = vadd.f32 0.0, %v1768
    %1770 = vdwg.mxu0
    %v1773 = vunpack.c.l.b16 %v1744
    %v1774 = vunpack.c.l.b16 %v1745
    %v1775 = vpack.c.b16 %v1774, %v1773
    %1776 = vrot.lane.b32.xlu0 %v777, 80
    %v1777 = vpop.permute.xlu0 %1776
    %v1780 = vsel %vm691, %v1775, 0
    %1782 = vmatpush.bf16.msra.mxu0 0
    %1783 = vmatpush.bf16.msra.mxu0 0
    %1784 = vmatpush.bf16.msra.mxu0 0
    %1785 = vmatpush.bf16.msra.mxu0 0
    %1786 = vmatpush.bf16.msra.mxu0 0
    %1787 = vmatpush.bf16.msra.mxu0 0
    %1788 = vmatpush.bf16.msra.mxu0 0
    %1789 = vmatpush.bf16.msra.mxu0 %v1777
    %1790 = vmatmul.bf16.gmra.mxu0 %v1780
    %v1791 = vpop.f32.mrf.mxu0
    %v1792 = vadd.f32 0.0, %v1791
    %v1793 = vpop.f32.mrf.mxu0
    %v1794 = vadd.f32 0.0, %v1793
    %1795 = vdwg.mxu0
    %1796 = vset.pattern.permute.xlu0 6
    %1797 = vperm.xlu0 %1796, %v624
    %v1798 = vpop.permute.xlu0 %1797
    %1800 = vset.pattern.permute.xlu0 6
    %1801 = vperm.xlu0 %1800, %v625
    %v1802 = vpop.permute.xlu0 %1801
    %1804 = vset.pattern.permute.xlu0 6
    %1805 = vperm.xlu0 %1804, %v626
    %v1806 = vpop.permute.xlu0 %1805
    %1808 = vset.pattern.permute.xlu0 6
    %1809 = vperm.xlu0 %1808, %v627
    %v1810 = vpop.permute.xlu0 %1809
    %v1812 = vmul.f32 %v1767, %v1798
    %v1813 = vmul.f32 %v1769, %v1802
    %v1814 = vmul.f32 %v1792, %v1806
    %v1815 = vmul.f32 %v1794, %v1810
    %1816 = vrot.lane.b32.xlu0 %v640, 72
    %v1817 = vpop.permute.xlu0 %1816
    %1818 = vrot.lane.b32.xlu0 %v640, 8
    %v1819 = vpop.permute.xlu0 %1818
    %v1821 = vsel %vm643, %v1817, 0
    %v1824 = vsel %vm643, %v1819, 0
    %1826 = vmatpush.bf16.xpose.msra.mxu0 0
    %1827 = vmatpush.bf16.xpose.msra.mxu0 0
    %1828 = vmatpush.bf16.xpose.msra.mxu0 0
    %1829 = vmatpush.bf16.xpose.msra.mxu0 0
    %1830 = vmatpush.bf16.xpose.msra.mxu0 0
    %1831 = vmatpush.bf16.xpose.msra.mxu0 0
    %1832 = vmatpush.bf16.xpose.msra.mxu0 0
    %1833 = vmatpush.bf16.xpose.msra.mxu0 %v1824
    %1834 = vmatmul.bf16.gmra.mxu0 %v1821
    %v1835 = vpop.f32.mrf.mxu0
    %v1836 = vadd.f32 0.0, %v1835
    %v1837 = vpop.f32.mrf.mxu0
    %v1838 = vadd.f32 0.0, %v1837
    %1839 = vdwg.mxu0
    %1840 = vrot.lane.b32.xlu0 %v668, 72
    %v1841 = vpop.permute.xlu0 %1840
    %1842 = vrot.lane.b32.xlu0 %v668, 8
    %v1843 = vpop.permute.xlu0 %1842
    %v1845 = vsel %vm643, %v1841, 0
    %v1848 = vsel %vm643, %v1843, 0
    %1850 = vmatpush.bf16.xpose.msra.mxu0 0
    %1851 = vmatpush.bf16.xpose.msra.mxu0 0
    %1852 = vmatpush.bf16.xpose.msra.mxu0 0
    %1853 = vmatpush.bf16.xpose.msra.mxu0 0
    %1854 = vmatpush.bf16.xpose.msra.mxu0 0
    %1855 = vmatpush.bf16.xpose.msra.mxu0 0
    %1856 = vmatpush.bf16.xpose.msra.mxu0 0
    %1857 = vmatpush.bf16.xpose.msra.mxu0 %v1848
    %1858 = vmatmul.bf16.gmra.mxu0 %v1845
    %v1859 = vpop.f32.mrf.mxu0
    %v1860 = vadd.f32 0.0, %v1859
    %v1861 = vpop.f32.mrf.mxu0
    %v1862 = vadd.f32 0.0, %v1861
    %1863 = vdwg.mxu0
    %v1864 = vsel %vm691, %v1836, -inf
    %1865 = vmax.xlane.f32.xlu0 %v1864
    %v1866 = vpop.xlane.xlu0 %1865
    %v1867 = vsel %vm691, %v1838, -inf
    %1868 = vmax.xlane.f32.xlu0 %v1867
    %v1869 = vpop.xlane.xlu0 %1868
    %v1870 = vsel %vm691, %v1860, -inf
    %1871 = vmax.xlane.f32.xlu0 %v1870
    %v1872 = vpop.xlane.xlu0 %1871
    %v1873 = vsel %vm691, %v1862, -inf
    %1874 = vmax.xlane.f32.xlu0 %v1873
    %v1875 = vpop.xlane.xlu0 %1874
    %v1876 = vsub.f32 %v1836, %v1866
    %v1877 = vsub.f32 %v1838, %v1869
    %v1878 = vsub.f32 %v1860, %v1872
    %v1879 = vsub.f32 %v1862, %v1875
    %v1880 = vmul.f32 %v1876, 1.442695
    %v1881 = vpow.pop %v1880
    %v1882 = vmul.f32 %v1877, 1.442695
    %v1883 = vpow.pop %v1882
    %v1884 = vmul.f32 %v1878, 1.442695
    %v1885 = vpow.pop %v1884
    %v1886 = vmul.f32 %v1879, 1.442695
    %v1887 = vpow.pop %v1886
    %v1888 = vsel %vm691, %v1881, 0.0
    %1889 = vadd.xlane.f32.xlu0 %v1888
    %v1890 = vpop.xlane.xlu0 %1889
    %v1891 = vsel %vm691, %v1883, 0.0
    %1892 = vadd.xlane.f32.xlu0 %v1891
    %v1893 = vpop.xlane.xlu0 %1892
    %v1894 = vsel %vm691, %v1885, 0.0
    %1895 = vadd.xlane.f32.xlu0 %v1894
    %v1896 = vpop.xlane.xlu0 %1895
    %v1897 = vsel %vm691, %v1887, 0.0
    %1898 = vadd.xlane.f32.xlu0 %v1897
    %v1899 = vpop.xlane.xlu0 %1898
    %v1900 = vrcp.pop %v1890
    %v1901 = vrcp.pop %v1893
    %v1902 = vrcp.pop %v1896
    %v1903 = vrcp.pop %v1899
    %v1904 = vmul.f32 %v1881, %v1900
    %v1905 = vmul.f32 %v1883, %v1901
    %v1906 = vmul.f32 %v1885, %v1902
    %v1907 = vmul.f32 %v1887, %v1903
    %v1908 = vpack.c.bf16 %v1904, %v1904
    %v1909 = vpack.c.bf16 %v1905, %v1905
    %v1910 = vpack.c.bf16 %v1906, %v1906
    %v1911 = vpack.c.bf16 %v1907, %v1907
    %v1914 = vunpack.c.l.b16 %v1908
    %v1915 = vunpack.c.l.b16 %v1909
    %v1916 = vpack.c.b16 %v1915, %v1914
    %1917 = vrot.lane.b32.xlu0 %v749, 72
    %v1918 = vpop.permute.xlu0 %1917
    %v1921 = vsel %vm691, %v1916, 0
    %1923 = vmatpush.bf16.msra.mxu0 0
    %1924 = vmatpush.bf16.msra.mxu0 0
    %1925 = vmatpush.bf16.msra.mxu0 0
    %1926 = vmatpush.bf16.msra.mxu0 0
    %1927 = vmatpush.bf16.msra.mxu0 0
    %1928 = vmatpush.bf16.msra.mxu0 0
    %1929 = vmatpush.bf16.msra.mxu0 0
    %1930 = vmatpush.bf16.msra.mxu0 %v1918
    %1931 = vmatmul.bf16.gmra.mxu0 %v1921
    %v1932 = vpop.f32.mrf.mxu0
    %v1933 = vadd.f32 0.0, %v1932
    %v1934 = vpop.f32.mrf.mxu0
    %v1935 = vadd.f32 0.0, %v1934
    %1936 = vdwg.mxu0
    %v1939 = vunpack.c.l.b16 %v1910
    %v1940 = vunpack.c.l.b16 %v1911
    %v1941 = vpack.c.b16 %v1940, %v1939
    %1942 = vrot.lane.b32.xlu0 %v777, 72
    %v1943 = vpop.permute.xlu0 %1942
    %v1946 = vsel %vm691, %v1941, 0
    %1948 = vmatpush.bf16.msra.mxu0 0
    %1949 = vmatpush.bf16.msra.mxu0 0
    %1950 = vmatpush.bf16.msra.mxu0 0
    %1951 = vmatpush.bf16.msra.mxu0 0
    %1952 = vmatpush.bf16.msra.mxu0 0
    %1953 = vmatpush.bf16.msra.mxu0 0
    %1954 = vmatpush.bf16.msra.mxu0 0
    %1955 = vmatpush.bf16.msra.mxu0 %v1943
    %1956 = vmatmul.bf16.gmra.mxu0 %v1946
    %v1957 = vpop.f32.mrf.mxu0
    %v1958 = vadd.f32 0.0, %v1957
    %v1959 = vpop.f32.mrf.mxu0
    %v1960 = vadd.f32 0.0, %v1959
    %1961 = vdwg.mxu0
    %1962 = vset.pattern.permute.xlu0 7
    %1963 = vperm.xlu0 %1962, %v624
    %v1964 = vpop.permute.xlu0 %1963
    %1966 = vset.pattern.permute.xlu0 7
    %1967 = vperm.xlu0 %1966, %v625
    %v1968 = vpop.permute.xlu0 %1967
    %1970 = vset.pattern.permute.xlu0 7
    %1971 = vperm.xlu0 %1970, %v626
    %v1972 = vpop.permute.xlu0 %1971
    %1974 = vset.pattern.permute.xlu0 7
    %1975 = vperm.xlu0 %1974, %v627
    %v1976 = vpop.permute.xlu0 %1975
    %v1978 = vmul.f32 %v1933, %v1964
    %v1979 = vmul.f32 %v1935, %v1968
    %v1980 = vmul.f32 %v1958, %v1972
    %v1981 = vmul.f32 %v1960, %v1976
    %1986 = vrot.lane.b32.xlu0 %v908, 16
    %v1987 = vpop.permute.xlu0 %1986
    %1988 = vrot.lane.b32.xlu0 %v909, 16
    %v1989 = vpop.permute.xlu0 %1988
    %1990 = vrot.lane.b32.xlu0 %v910, 16
    %v1991 = vpop.permute.xlu0 %1990
    %1992 = vrot.lane.b32.xlu0 %v911, 16
    %v1993 = vpop.permute.xlu0 %1992
    %2002 = vrot.lane.b32.xlu0 %v1074, 32
    %v2003 = vpop.permute.xlu0 %2002
    %2004 = vrot.lane.b32.xlu0 %v1075, 32
    %v2005 = vpop.permute.xlu0 %2004
    %2006 = vrot.lane.b32.xlu0 %v1076, 32
    %v2007 = vpop.permute.xlu0 %2006
    %2008 = vrot.lane.b32.xlu0 %v1077, 32
    %v2009 = vpop.permute.xlu0 %2008
    %2018 = vrot.lane.b32.xlu0 %v1240, 48
    %v2019 = vpop.permute.xlu0 %2018
    %2020 = vrot.lane.b32.xlu0 %v1241, 48
    %v2021 = vpop.permute.xlu0 %2020
    %2022 = vrot.lane.b32.xlu0 %v1242, 48
    %v2023 = vpop.permute.xlu0 %2022
    %2024 = vrot.lane.b32.xlu0 %v1243, 48
    %v2025 = vpop.permute.xlu0 %2024
    %2034 = vrot.lane.b32.xlu0 %v1406, 64
    %v2035 = vpop.permute.xlu0 %2034
    %2036 = vrot.lane.b32.xlu0 %v1407, 64
    %v2037 = vpop.permute.xlu0 %2036
    %2038 = vrot.lane.b32.xlu0 %v1408, 64
    %v2039 = vpop.permute.xlu0 %2038
    %2040 = vrot.lane.b32.xlu0 %v1409, 64
    %v2041 = vpop.permute.xlu0 %2040
    %2050 = vrot.lane.b32.xlu0 %v1572, 80
    %v2051 = vpop.permute.xlu0 %2050
    %2052 = vrot.lane.b32.xlu0 %v1573, 80
    %v2053 = vpop.permute.xlu0 %2052
    %2054 = vrot.lane.b32.xlu0 %v1574, 80
    %v2055 = vpop.permute.xlu0 %2054
    %2056 = vrot.lane.b32.xlu0 %v1575, 80
    %v2057 = vpop.permute.xlu0 %2056
    %2066 = vrot.lane.b32.xlu0 %v1738, 96
    %v2067 = vpop.permute.xlu0 %2066
    %2068 = vrot.lane.b32.xlu0 %v1739, 96
    %v2069 = vpop.permute.xlu0 %2068
    %2070 = vrot.lane.b32.xlu0 %v1740, 96
    %v2071 = vpop.permute.xlu0 %2070
    %2072 = vrot.lane.b32.xlu0 %v1741, 96
    %v2073 = vpop.permute.xlu0 %2072
    %2082 = vrot.lane.b32.xlu0 %v1904, 112
    %v2083 = vpop.permute.xlu0 %2082
    %2084 = vrot.lane.b32.xlu0 %v1905, 112
    %v2085 = vpop.permute.xlu0 %2084
    %2086 = vrot.lane.b32.xlu0 %v1906, 112
    %v2087 = vpop.permute.xlu0 %2086
    %2088 = vrot.lane.b32.xlu0 %v1907, 112
    %v2089 = vpop.permute.xlu0 %2088
    %v2094 = vsel %vm691, %v732, %v1987
    %v2095 = vsel %vm691, %v733, %v1989
    %v2096 = vsel %vm691, %v734, %v1991
    %v2097 = vsel %vm691, %v735, %v1993
    %vm2098 = vcmask 261120
    %v2099 = vsel %vm2098, %v2094, %v2003
    %v2100 = vsel %vm2098, %v2095, %v2005
    %v2101 = vsel %vm2098, %v2096, %v2007
    %v2102 = vsel %vm2098, %v2097, %v2009
    %vm2103 = vcmask 392192
    %v2104 = vsel %vm2103, %v2099, %v2019
    %v2105 = vsel %vm2103, %v2100, %v2021
    %v2106 = vsel %vm2103, %v2101, %v2023
    %v2107 = vsel %vm2103, %v2102, %v2025
    %v2108 = vsel %vm107, %v2104, %v2035
    %v2109 = vsel %vm107, %v2105, %v2037
    %v2110 = vsel %vm107, %v2106, %v2039
    %v2111 = vsel %vm107, %v2107, %v2041
    %vm2112 = vcmask 654336
    %v2113 = vsel %vm2112, %v2108, %v2051
    %v2114 = vsel %vm2112, %v2109, %v2053
    %v2115 = vsel %vm2112, %v2110, %v2055
    %v2116 = vsel %vm2112, %v2111, %v2057
    %vm2117 = vcmask 785408
    %v2118 = vsel %vm2117, %v2113, %v2067
    %v2119 = vsel %vm2117, %v2114, %v2069
    %v2120 = vsel %vm2117, %v2115, %v2071
    %v2121 = vsel %vm2117, %v2116, %v2073
    %vm2122 = vcmask 916480
    %v2123 = vsel %vm2122, %v2118, %v2083
    %v2124 = vsel %vm2122, %v2119, %v2085
    %v2125 = vsel %vm2122, %v2120, %v2087
    %v2126 = vsel %vm2122, %v2121, %v2089
    %2127 = vst [vmem:[#allocation11] sm:$0xff] %v2123
    %2128 = vst [vmem:[#allocation11 + $0x8] sm:$0xff] %v2124
    %2129 = vst [vmem:[#allocation11 + $0x10] sm:$0xff] %v2125
    %2130 = vst [vmem:[#allocation11 + $0x18] sm:$0xff] %v2126
    %2135 = vrot.lane.b32.xlu0 %v982, 8
    %v2136 = vpop.permute.xlu0 %2135
    %2137 = vrot.lane.b32.xlu0 %v983, 8
    %v2138 = vpop.permute.xlu0 %2137
    %2139 = vrot.lane.b32.xlu0 %v984, 8
    %v2140 = vpop.permute.xlu0 %2139
    %2141 = vrot.lane.b32.xlu0 %v985, 8
    %v2142 = vpop.permute.xlu0 %2141
    %2151 = vrot.lane.b32.xlu0 %v1148, 16
    %v2152 = vpop.permute.xlu0 %2151
    %2153 = vrot.lane.b32.xlu0 %v1149, 16
    %v2154 = vpop.permute.xlu0 %2153
    %2155 = vrot.lane.b32.xlu0 %v1150, 16
    %v2156 = vpop.permute.xlu0 %2155
    %2157 = vrot.lane.b32.xlu0 %v1151, 16
    %v2158 = vpop.permute.xlu0 %2157
    %2167 = vrot.lane.b32.xlu0 %v1314, 24
    %v2168 = vpop.permute.xlu0 %2167
    %2169 = vrot.lane.b32.xlu0 %v1315, 24
    %v2170 = vpop.permute.xlu0 %2169
    %2171 = vrot.lane.b32.xlu0 %v1316, 24
    %v2172 = vpop.permute.xlu0 %2171
    %2173 = vrot.lane.b32.xlu0 %v1317, 24
    %v2174 = vpop.permute.xlu0 %2173
    %2183 = vrot.lane.b32.xlu0 %v1480, 32
    %v2184 = vpop.permute.xlu0 %2183
    %2185 = vrot.lane.b32.xlu0 %v1481, 32
    %v2186 = vpop.permute.xlu0 %2185
    %2187 = vrot.lane.b32.xlu0 %v1482, 32
    %v2188 = vpop.permute.xlu0 %2187
    %2189 = vrot.lane.b32.xlu0 %v1483, 32
    %v2190 = vpop.permute.xlu0 %2189
    %2199 = vrot.lane.b32.xlu0 %v1646, 40
    %v2200 = vpop.permute.xlu0 %2199
    %2201 = vrot.lane.b32.xlu0 %v1647, 40
    %v2202 = vpop.permute.xlu0 %2201
    %2203 = vrot.lane.b32.xlu0 %v1648, 40
    %v2204 = vpop.permute.xlu0 %2203
    %2205 = vrot.lane.b32.xlu0 %v1649, 40
    %v2206 = vpop.permute.xlu0 %2205
    %2215 = vrot.lane.b32.xlu0 %v1812, 48
    %v2216 = vpop.permute.xlu0 %2215
    %2217 = vrot.lane.b32.xlu0 %v1813, 48
    %v2218 = vpop.permute.xlu0 %2217
    %2219 = vrot.lane.b32.xlu0 %v1814, 48
    %v2220 = vpop.permute.xlu0 %2219
    %2221 = vrot.lane.b32.xlu0 %v1815, 48
    %v2222 = vpop.permute.xlu0 %2221
    %2231 = vrot.lane.b32.xlu0 %v1978, 56
    %v2232 = vpop.permute.xlu0 %2231
    %2233 = vrot.lane.b32.xlu0 %v1979, 56
    %v2234 = vpop.permute.xlu0 %2233
    %2235 = vrot.lane.b32.xlu0 %v1980, 56
    %v2236 = vpop.permute.xlu0 %2235
    %2237 = vrot.lane.b32.xlu0 %v1981, 56
    %v2238 = vpop.permute.xlu0 %2237
    %v2243 = vsel %vm643, %v816, %v2136
    %v2244 = vsel %vm643, %v817, %v2138
    %v2245 = vsel %vm643, %v818, %v2140
    %v2246 = vsel %vm643, %v819, %v2142
    %v2247 = vsel %vm691, %v2243, %v2152
    %v2248 = vsel %vm691, %v2244, %v2154
    %v2249 = vsel %vm691, %v2245, %v2156
    %v2250 = vsel %vm691, %v2246, %v2158
    %vm2251 = vcmask 195584
    %v2252 = vsel %vm2251, %v2247, %v2168
    %v2253 = vsel %vm2251, %v2248, %v2170
    %v2254 = vsel %vm2251, %v2249, %v2172
    %v2255 = vsel %vm2251, %v2250, %v2174
    %v2256 = vsel %vm2098, %v2252, %v2184
    %v2257 = vsel %vm2098, %v2253, %v2186
    %v2258 = vsel %vm2098, %v2254, %v2188
    %v2259 = vsel %vm2098, %v2255, %v2190
    %vm2260 = vcmask 326656
    %v2261 = vsel %vm2260, %v2256, %v2200
    %v2262 = vsel %vm2260, %v2257, %v2202
    %v2263 = vsel %vm2260, %v2258, %v2204
    %v2264 = vsel %vm2260, %v2259, %v2206
    %v2265 = vsel %vm2103, %v2261, %v2216
    %v2266 = vsel %vm2103, %v2262, %v2218
    %v2267 = vsel %vm2103, %v2263, %v2220
    %v2268 = vsel %vm2103, %v2264, %v2222
    %vm2269 = vcmask 457728
    %v2270 = vsel %vm2269, %v2265, %v2232
    %v2271 = vsel %vm2269, %v2266, %v2234
    %v2272 = vsel %vm2269, %v2267, %v2236
    %v2273 = vsel %vm2269, %v2268, %v2238
    %v2274 = vpack.c.bf16 %v2271, %v2270
    %v2275 = vpack.c.bf16 %v2273, %v2272
    %v2276 = vld [vmem:[%s6] sm:$0xf]
    %v2277 = vld [vmem:[%s6 + $0x4] sm:$0xf]
    %v2278 = vld [vmem:[%s6 + $0x8] sm:$0xf]
    %v2279 = vld [vmem:[%s6 + $0xc] sm:$0xf]
    %v2280 = vld [vmem:[%s6 + $0x10] sm:$0xf]
    %v2281 = vld [vmem:[%s6 + $0x14] sm:$0xf]
    %v2282 = vld [vmem:[%s6 + $0x18] sm:$0xf]
    %v2283 = vld [vmem:[%s6 + $0x1c] sm:$0xf]
    %v2284 = vld [vmem:[%s7] sm:$0x1]
    %v2286 = vperm.slane %v2284, 0
    %v2296 = vunpack.c.l.b16 %v2276
    %v2297 = vunpack.c.l.b16 %v2277
    %v2298 = vunpack.c.l.b16 %v2278
    %v2299 = vunpack.c.l.b16 %v2279
    %v2300 = vunpack.c.l.b16 %v2280
    %v2301 = vunpack.c.l.b16 %v2281
    %v2302 = vunpack.c.l.b16 %v2282
    %v2303 = vunpack.c.l.b16 %v2283
    %v2304 = vpack.c.b16 %v2297, %v2296
    %v2305 = vpack.c.b16 %v2299, %v2298
    %v2306 = vpack.c.b16 %v2301, %v2300
    %v2307 = vpack.c.b16 %v2303, %v2302
    %v2313 = vsel %vm107, %v2274, 0
    %v2316 = vsel %vm107, %v2275, 0
    %2318 = vmatpush.bf16.msra.mxu0 0
    %2319 = vmatpush.bf16.msra.mxu0 0
    %2320 = vmatpush.bf16.msra.mxu0 0
    %2321 = vmatpush.bf16.msra.mxu0 0
    %2322 = vmatpush.bf16.msra.mxu0 %v2307
    %2323 = vmatpush.bf16.msra.mxu0 %v2306
    %2324 = vmatpush.bf16.msra.mxu0 %v2305
    %2325 = vmatpush.bf16.msra.mxu0 %v2304
    %2326 = vmatmul.bf16.gmra.mxu0 %v2313
    %v2327 = vpop.f32.mrf.mxu0
    %v2328 = vadd.f32 %v2286, %v2327
    %v2329 = vpop.f32.mrf.mxu0
    %v2330 = vadd.f32 %v2286, %v2329
    %2331 = vmatmul.bf16.gmra.mxu0 %v2316
    %v2332 = vpop.f32.mrf.mxu0
    %v2333 = vadd.f32 %v2286, %v2332
    %v2334 = vpop.f32.mrf.mxu0
    %v2335 = vadd.f32 %v2286, %v2334
    %2336 = vdwg.mxu0
    %v2337 = vld [vmem:[#allocation7] sm:$0x1]
    %v2338 = vld [vmem:[#allocation8] sm:$0x1]
    %v2339 = vsel %vm107, %v2328, 0.0
    %2340 = vadd.xlane.f32.xlu0 %v2339
    %v2341 = vpop.xlane.xlu0 %2340
    %v2342 = vsel %vm107, %v2330, 0.0
    %2343 = vadd.xlane.f32.xlu0 %v2342
    %v2344 = vpop.xlane.xlu0 %2343
    %v2345 = vsel %vm107, %v2333, 0.0
    %2346 = vadd.xlane.f32.xlu0 %v2345
    %v2347 = vpop.xlane.xlu0 %2346
    %v2348 = vsel %vm107, %v2335, 0.0
    %2349 = vadd.xlane.f32.xlu0 %v2348
    %v2350 = vpop.xlane.xlu0 %2349
    %v2351 = vmul.f32 %v2341, %v126
    %v2352 = vmul.f32 %v2344, %v126
    %v2353 = vmul.f32 %v2347, %v126
    %v2354 = vmul.f32 %v2350, %v126
    %v2355 = vsub.f32 %v2328, %v2351
    %v2356 = vsub.f32 %v2330, %v2352
    %v2357 = vsub.f32 %v2333, %v2353
    %v2358 = vsub.f32 %v2335, %v2354
    %v2359 = vmul.f32 %v2355, %v2355
    %v2360 = vmul.f32 %v2356, %v2356
    %v2361 = vmul.f32 %v2357, %v2357
    %v2362 = vmul.f32 %v2358, %v2358
    %v2363 = vsel %vm107, %v2359, 0.0
    %2364 = vadd.xlane.f32.xlu0 %v2363
    %v2365 = vpop.xlane.xlu0 %2364
    %v2366 = vsel %vm107, %v2360, 0.0
    %2367 = vadd.xlane.f32.xlu0 %v2366
    %v2368 = vpop.xlane.xlu0 %2367
    %v2369 = vsel %vm107, %v2361, 0.0
    %2370 = vadd.xlane.f32.xlu0 %v2369
    %v2371 = vpop.xlane.xlu0 %2370
    %v2372 = vsel %vm107, %v2362, 0.0
    %2373 = vadd.xlane.f32.xlu0 %v2372
    %v2374 = vpop.xlane.xlu0 %2373
    %v2375 = vmul.f32 %v2365, %v126
    %v2376 = vmul.f32 %v2368, %v126
    %v2377 = vmul.f32 %v2371, %v126
    %v2378 = vmul.f32 %v2374, %v126
    %v2379 = vadd.f32 %v2375, 1e-05
    %v2380 = vadd.f32 %v2376, 1e-05
    %v2381 = vadd.f32 %v2377, 1e-05
    %v2382 = vadd.f32 %v2378, 1e-05
    %v2383 = vrsqrt.pop %v2379
    %v2384 = vmul.f32 %v2383, %v2379
    %v2385 = vmul.f32 %v2384, %v2383
    %v2386 = vmul.f32 0.5, %v2385
    %v2387 = vsub.f32 1.5, %v2386
    %v2388 = vmul.f32 %v2383, %v2387
    %vm2389 = vweird.f32 %v2379
    %vm2390 = vweird.f32 %v2383
    %vm2391 = vmor %vm2389, %vm2390
    %v2392 = vsel %vm2391, %v2383, %v2388
    %v2393 = vrsqrt.pop %v2380
    %v2394 = vmul.f32 %v2393, %v2380
    %v2395 = vmul.f32 %v2394, %v2393
    %v2396 = vmul.f32 0.5, %v2395
    %v2397 = vsub.f32 1.5, %v2396
    %v2398 = vmul.f32 %v2393, %v2397
    %vm2399 = vweird.f32 %v2380
    %vm2400 = vweird.f32 %v2393
    %vm2401 = vmor %vm2399, %vm2400
    %v2402 = vsel %vm2401, %v2393, %v2398
    %v2403 = vrsqrt.pop %v2381
    %v2404 = vmul.f32 %v2403, %v2381
    %v2405 = vmul.f32 %v2404, %v2403
    %v2406 = vmul.f32 0.5, %v2405
    %v2407 = vsub.f32 1.5, %v2406
    %v2408 = vmul.f32 %v2403, %v2407
    %vm2409 = vweird.f32 %v2381
    %vm2410 = vweird.f32 %v2403
    %vm2411 = vmor %vm2409, %vm2410
    %v2412 = vsel %vm2411, %v2403, %v2408
    %v2413 = vrsqrt.pop %v2382
    %v2414 = vmul.f32 %v2413, %v2382
    %v2415 = vmul.f32 %v2414, %v2413
    %v2416 = vmul.f32 0.5, %v2415
    %v2417 = vsub.f32 1.5, %v2416
    %v2418 = vmul.f32 %v2413, %v2417
    %vm2419 = vweird.f32 %v2382
    %vm2420 = vweird.f32 %v2413
    %vm2421 = vmor %vm2419, %vm2420
    %v2422 = vsel %vm2421, %v2413, %v2418
    %v2423 = vmul.f32 %v2355, %v2392
    %v2424 = vmul.f32 %v2356, %v2402
    %v2425 = vmul.f32 %v2357, %v2412
    %v2426 = vmul.f32 %v2358, %v2422
    %v2428 = vperm.slane %v2337, 0
    %v2430 = vmul.f32 %v2423, %v2428
    %v2431 = vmul.f32 %v2424, %v2428
    %v2432 = vmul.f32 %v2425, %v2428
    %v2433 = vmul.f32 %v2426, %v2428
    %v2435 = vperm.slane %v2338, 0
    %v2437 = vadd.f32 %v2430, %v2435
    %v2438 = vadd.f32 %v2431, %v2435
    %v2439 = vadd.f32 %v2432, %v2435
    %v2440 = vadd.f32 %v2433, %v2435
    %v2441 = vpack.c.bf16 %v2438, %v2437
    %v2442 = vpack.c.bf16 %v2440, %v2439
    %v2443 = vld [vmem:[%s8] sm:$0xff]
    %v2444 = vld [vmem:[%s8 + $0x8] sm:$0xff]
    %v2445 = vld [vmem:[%s8 + $0x10] sm:$0xff]
    %v2446 = vld [vmem:[%s8 + $0x18] sm:$0xff]
    %v2447 = vld [vmem:[%s8 + $0x20] sm:$0xff]
    %v2448 = vld [vmem:[%s8 + $0x28] sm:$0xff]
    %v2449 = vld [vmem:[%s8 + $0x30] sm:$0xff]
    %v2450 = vld [vmem:[%s8 + $0x38] sm:$0xff]
    %v2451 = vld [vmem:[%s9] sm:$0x3]
    %v2453 = vperm.slane %v2451, 0
    %v2454 = vperm.slane %v2451, 1
    %v2465 = vunpack.c.l.b16 %v2443
    %v2466 = vunpack.c.h.b16 %v2443
    %v2467 = vunpack.c.l.b16 %v2444
    %v2468 = vunpack.c.h.b16 %v2444
    %v2469 = vunpack.c.l.b16 %v2445
    %v2470 = vunpack.c.h.b16 %v2445
    %v2471 = vunpack.c.l.b16 %v2446
    %v2472 = vunpack.c.h.b16 %v2446
    %v2473 = vunpack.c.l.b16 %v2447
    %v2474 = vunpack.c.h.b16 %v2447
    %v2475 = vunpack.c.l.b16 %v2448
    %v2476 = vunpack.c.h.b16 %v2448
    %v2477 = vunpack.c.l.b16 %v2449
    %v2478 = vunpack.c.h.b16 %v2449
    %v2479 = vunpack.c.l.b16 %v2450
    %v2480 = vunpack.c.h.b16 %v2450
    %v2481 = vpack.c.b16 %v2467, %v2465
    %v2482 = vpack.c.b16 %v2468, %v2466
    %v2483 = vpack.c.b16 %v2471, %v2469
    %v2484 = vpack.c.b16 %v2472, %v2470
    %v2485 = vpack.c.b16 %v2475, %v2473
    %v2486 = vpack.c.b16 %v2476, %v2474
    %v2487 = vpack.c.b16 %v2479, %v2477
    %v2488 = vpack.c.b16 %v2480, %v2478
    %v2498 = vsel %vm107, %v2441, 0
    %v2501 = vsel %vm107, %v2442, 0
    %2503 = vmatpush.bf16.msra.mxu0 0
    %2504 = vmatpush.bf16.msra.mxu0 0
    %2505 = vmatpush.bf16.msra.mxu0 0
    %2506 = vmatpush.bf16.msra.mxu0 0
    %2507 = vmatpush.bf16.msra.mxu0 %v2487
    %2508 = vmatpush.bf16.msra.mxu0 %v2485
    %2509 = vmatpush.bf16.msra.mxu0 %v2483
    %2510 = vmatpush.bf16.msra.mxu0 %v2481
    %2511 = vmatmul.bf16.gmra.mxu0 %v2498
    %v2512 = vpop.f32.mrf.mxu0
    %v2513 = vadd.f32 %v2453, %v2512
    %v2514 = vpop.f32.mrf.mxu0
    %v2515 = vadd.f32 %v2453, %v2514
    %2516 = vmatmul.bf16.gmra.mxu0 %v2501
    %v2517 = vpop.f32.mrf.mxu0
    %v2518 = vadd.f32 %v2453, %v2517
    %v2519 = vpop.f32.mrf.mxu0
    %v2520 = vadd.f32 %v2453, %v2519
    %2521 = vdwg.mxu0
    %2522 = vmatpush.bf16.msra.mxu0 0
    %2523 = vmatpush.bf16.msra.mxu0 0
    %2524 = vmatpush.bf16.msra.mxu0 0
    %2525 = vmatpush.bf16.msra.mxu0 0
    %2526 = vmatpush.bf16.msra.mxu0 %v2488
    %2527 = vmatpush.bf16.msra.mxu0 %v2486
    %2528 = vmatpush.bf16.msra.mxu0 %v2484
    %2529 = vmatpush.bf16.msra.mxu0 %v2482
    %2530 = vmatmul.bf16.gmra.mxu0 %v2498
    %v2531 = vpop.f32.mrf.mxu0
    %v2532 = vadd.f32 %v2454, %v2531
    %v2533 = vpop.f32.mrf.mxu0
    %v2534 = vadd.f32 %v2454, %v2533
    %2535 = vmatmul.bf16.gmra.mxu0 %v2501
    %v2536 = vpop.f32.mrf.mxu0
    %v2537 = vadd.f32 %v2454, %v2536
    %v2538 = vpop.f32.mrf.mxu0
    %v2539 = vadd.f32 %v2454, %v2538
    %2540 = vdwg.mxu0
    %v2541 = vmul.f32 %v2513, 0.5
    %v2542 = vmul.f32 %v2532, 0.5
    %v2543 = vmul.f32 %v2515, 0.5
    %v2544 = vmul.f32 %v2534, 0.5
    %v2545 = vmul.f32 %v2518, 0.5
    %v2546 = vmul.f32 %v2537, 0.5
    %v2547 = vmul.f32 %v2520, 0.5
    %v2548 = vmul.f32 %v2539, 0.5
    %v2549 = vmul.f32 %v2513, 0.70710677
    %v2550 = vmul.f32 %v2532, 0.70710677
    %v2551 = vmul.f32 %v2515, 0.70710677
    %v2552 = vmul.f32 %v2534, 0.70710677
    %v2553 = vmul.f32 %v2518, 0.70710677
    %v2554 = vmul.f32 %v2537, 0.70710677
    %v2555 = vmul.f32 %v2520, 0.70710677
    %v2556 = vmul.f32 %v2539, 0.70710677
    %v2557 = vmul.f32 %v2549, %v2549
    %v2558 = vmin.f32 16.0, %v2557
    %v2559 = vmul.f32 %v2558, 2.1237322e-06
    %v2560 = vadd.f32 %v2559, 0.00028619796
    %v2561 = vmul.f32 %v2558, %v2560
    %v2562 = vadd.f32 %v2561, 0.0036580483
    %v2563 = vmul.f32 %v2558, %v2562
    %v2564 = vadd.f32 %v2563, 0.05243302
    %v2565 = vmul.f32 %v2558, %v2564
    %v2566 = vadd.f32 %v2565, 0.18741608
    %v2567 = vmul.f32 %v2558, %v2566
    %v2568 = vadd.f32 %v2567, 1.1283791
    %v2569 = vmul.f32 %v2549, %v2568
    %v2570 = vmul.f32 %v2558, 3.8918573e-05
    %v2571 = vadd.f32 %v2570, 0.001143296
    %v2572 = vmul.f32 %v2558, %v2571
    %v2573 = vadd.f32 %v2572, 0.014752088
    %v2574 = vmul.f32 %v2558, %v2573
    %v2575 = vadd.f32 %v2574, 0.112945676
    %v2576 = vmul.f32 %v2558, %v2575
    %v2577 = vadd.f32 %v2576, 0.4994258
    %v2578 = vmul.f32 %v2558, %v2577
    %v2579 = vadd.f32 %v2578, 1.0
    %v2580 = vrcp.pop %v2579
    %v2581 = vmul.f32 %v2579, %v2580
    %v2582 = vsub.f32 1.0, %v2581
    %v2583 = vmul.f32 %v2580, %v2582
    %v2584 = vadd.f32 %v2580, %v2583
    %vm2585 = vweird.f32 %v2579
    %vm2586 = vweird.f32 %v2580
    %vm2587 = vmor %vm2585, %vm2586
    %v2588 = vsel %vm2587, %v2580, %v2584
    %v2589 = vand.u32 2147483647, %v2579
    %vm2590 = vcmp.eq.f32.partialorder %v2589, 8.507059e+37
    %v2591 = vand.u32 %v2579, 2147483648
    %v2592 = vor.u32 1.1754944e-38, %v2591
    %v2593 = vsel %vm2590, %v2592, %v2588
    %v2594 = vmul.f32 %v2569, %v2593
    %v2595 = vmin.f32 %v2594, 1.0
    %v2596 = vmax.f32 %v2595, -1.0
    %v2597 = vmul.f32 %v2550, %v2550
    %v2598 = vmin.f32 16.0, %v2597
    %v2599 = vmul.f32 %v2598, 2.1237322e-06
    %v2600 = vadd.f32 %v2599, 0.00028619796
    %v2601 = vmul.f32 %v2598, %v2600
    %v2602 = vadd.f32 %v2601, 0.0036580483
    %v2603 = vmul.f32 %v2598, %v2602
    %v2604 = vadd.f32 %v2603, 0.05243302
    %v2605 = vmul.f32 %v2598, %v2604
    %v2606 = vadd.f32 %v2605, 0.18741608
    %v2607 = vmul.f32 %v2598, %v2606
    %v2608 = vadd.f32 %v2607, 1.1283791
    %v2609 = vmul.f32 %v2550, %v2608
    %v2610 = vmul.f32 %v2598, 3.8918573e-05
    %v2611 = vadd.f32 %v2610, 0.001143296
    %v2612 = vmul.f32 %v2598, %v2611
    %v2613 = vadd.f32 %v2612, 0.014752088
    %v2614 = vmul.f32 %v2598, %v2613
    %v2615 = vadd.f32 %v2614, 0.112945676
    %v2616 = vmul.f32 %v2598, %v2615
    %v2617 = vadd.f32 %v2616, 0.4994258
    %v2618 = vmul.f32 %v2598, %v2617
    %v2619 = vadd.f32 %v2618, 1.0
    %v2620 = vrcp.pop %v2619
    %v2621 = vmul.f32 %v2619, %v2620
    %v2622 = vsub.f32 1.0, %v2621
    %v2623 = vmul.f32 %v2620, %v2622
    %v2624 = vadd.f32 %v2620, %v2623
    %vm2625 = vweird.f32 %v2619
    %vm2626 = vweird.f32 %v2620
    %vm2627 = vmor %vm2625, %vm2626
    %v2628 = vsel %vm2627, %v2620, %v2624
    %v2629 = vand.u32 2147483647, %v2619
    %vm2630 = vcmp.eq.f32.partialorder %v2629, 8.507059e+37
    %v2631 = vand.u32 %v2619, 2147483648
    %v2632 = vor.u32 1.1754944e-38, %v2631
    %v2633 = vsel %vm2630, %v2632, %v2628
    %v2634 = vmul.f32 %v2609, %v2633
    %v2635 = vmin.f32 %v2634, 1.0
    %v2636 = vmax.f32 %v2635, -1.0
    %v2637 = vmul.f32 %v2551, %v2551
    %v2638 = vmin.f32 16.0, %v2637
    %v2639 = vmul.f32 %v2638, 2.1237322e-06
    %v2640 = vadd.f32 %v2639, 0.00028619796
    %v2641 = vmul.f32 %v2638, %v2640
    %v2642 = vadd.f32 %v2641, 0.0036580483
    %v2643 = vmul.f32 %v2638, %v2642
    %v2644 = vadd.f32 %v2643, 0.05243302
    %v2645 = vmul.f32 %v2638, %v2644
    %v2646 = vadd.f32 %v2645, 0.18741608
    %v2647 = vmul.f32 %v2638, %v2646
    %v2648 = vadd.f32 %v2647, 1.1283791
    %v2649 = vmul.f32 %v2551, %v2648
    %v2650 = vmul.f32 %v2638, 3.8918573e-05
    %v2651 = vadd.f32 %v2650, 0.001143296
    %v2652 = vmul.f32 %v2638, %v2651
    %v2653 = vadd.f32 %v2652, 0.014752088
    %v2654 = vmul.f32 %v2638, %v2653
    %v2655 = vadd.f32 %v2654, 0.112945676
    %v2656 = vmul.f32 %v2638, %v2655
    %v2657 = vadd.f32 %v2656, 0.4994258
    %v2658 = vmul.f32 %v2638, %v2657
    %v2659 = vadd.f32 %v2658, 1.0
    %v2660 = vrcp.pop %v2659
    %v2661 = vmul.f32 %v2659, %v2660
    %v2662 = vsub.f32 1.0, %v2661
    %v2663 = vmul.f32 %v2660, %v2662
    %v2664 = vadd.f32 %v2660, %v2663
    %vm2665 = vweird.f32 %v2659
    %vm2666 = vweird.f32 %v2660
    %vm2667 = vmor %vm2665, %vm2666
    %v2668 = vsel %vm2667, %v2660, %v2664
    %v2669 = vand.u32 2147483647, %v2659
    %vm2670 = vcmp.eq.f32.partialorder %v2669, 8.507059e+37
    %v2671 = vand.u32 %v2659, 2147483648
    %v2672 = vor.u32 1.1754944e-38, %v2671
    %v2673 = vsel %vm2670, %v2672, %v2668
    %v2674 = vmul.f32 %v2649, %v2673
    %v2675 = vmin.f32 %v2674, 1.0
    %v2676 = vmax.f32 %v2675, -1.0
    %v2677 = vmul.f32 %v2552, %v2552
    %v2678 = vmin.f32 16.0, %v2677
    %v2679 = vmul.f32 %v2678, 2.1237322e-06
    %v2680 = vadd.f32 %v2679, 0.00028619796
    %v2681 = vmul.f32 %v2678, %v2680
    %v2682 = vadd.f32 %v2681, 0.0036580483
    %v2683 = vmul.f32 %v2678, %v2682
    %v2684 = vadd.f32 %v2683, 0.05243302
    %v2685 = vmul.f32 %v2678, %v2684
    %v2686 = vadd.f32 %v2685, 0.18741608
    %v2687 = vmul.f32 %v2678, %v2686
    %v2688 = vadd.f32 %v2687, 1.1283791
    %v2689 = vmul.f32 %v2552, %v2688
    %v2690 = vmul.f32 %v2678, 3.8918573e-05
    %v2691 = vadd.f32 %v2690, 0.001143296
    %v2692 = vmul.f32 %v2678, %v2691
    %v2693 = vadd.f32 %v2692, 0.014752088
    %v2694 = vmul.f32 %v2678, %v2693
    %v2695 = vadd.f32 %v2694, 0.112945676
    %v2696 = vmul.f32 %v2678, %v2695
    %v2697 = vadd.f32 %v2696, 0.4994258
    %v2698 = vmul.f32 %v2678, %v2697
    %v2699 = vadd.f32 %v2698, 1.0
    %v2700 = vrcp.pop %v2699
    %v2701 = vmul.f32 %v2699, %v2700
    %v2702 = vsub.f32 1.0, %v2701
    %v2703 = vmul.f32 %v2700, %v2702
    %v2704 = vadd.f32 %v2700, %v2703
    %vm2705 = vweird.f32 %v2699
    %vm2706 = vweird.f32 %v2700
    %vm2707 = vmor %vm2705, %vm2706
    %v2708 = vsel %vm2707, %v2700, %v2704
    %v2709 = vand.u32 2147483647, %v2699
    %vm2710 = vcmp.eq.f32.partialorder %v2709, 8.507059e+37
    %v2711 = vand.u32 %v2699, 2147483648
    %v2712 = vor.u32 1.1754944e-38, %v2711
    %v2713 = vsel %vm2710, %v2712, %v2708
    %v2714 = vmul.f32 %v2689, %v2713
    %v2715 = vmin.f32 %v2714, 1.0
    %v2716 = vmax.f32 %v2715, -1.0
    %v2717 = vmul.f32 %v2553, %v2553
    %v2718 = vmin.f32 16.0, %v2717
    %v2719 = vmul.f32 %v2718, 2.1237322e-06
    %v2720 = vadd.f32 %v2719, 0.00028619796
    %v2721 = vmul.f32 %v2718, %v2720
    %v2722 = vadd.f32 %v2721, 0.0036580483
    %v2723 = vmul.f32 %v2718, %v2722
    %v2724 = vadd.f32 %v2723, 0.05243302
    %v2725 = vmul.f32 %v2718, %v2724
    %v2726 = vadd.f32 %v2725, 0.18741608
    %v2727 = vmul.f32 %v2718, %v2726
    %v2728 = vadd.f32 %v2727, 1.1283791
    %v2729 = vmul.f32 %v2553, %v2728
    %v2730 = vmul.f32 %v2718, 3.8918573e-05
    %v2731 = vadd.f32 %v2730, 0.001143296
    %v2732 = vmul.f32 %v2718, %v2731
    %v2733 = vadd.f32 %v2732, 0.014752088
    %v2734 = vmul.f32 %v2718, %v2733
    %v2735 = vadd.f32 %v2734, 0.112945676
    %v2736 = vmul.f32 %v2718, %v2735
    %v2737 = vadd.f32 %v2736, 0.4994258
    %v2738 = vmul.f32 %v2718, %v2737
    %v2739 = vadd.f32 %v2738, 1.0
    %v2740 = vrcp.pop %v2739
    %v2741 = vmul.f32 %v2739, %v2740
    %v2742 = vsub.f32 1.0, %v2741
    %v2743 = vmul.f32 %v2740, %v2742
    %v2744 = vadd.f32 %v2740, %v2743
    %vm2745 = vweird.f32 %v2739
    %vm2746 = vweird.f32 %v2740
    %vm2747 = vmor %vm2745, %vm2746
    %v2748 = vsel %vm2747, %v2740, %v2744
    %v2749 = vand.u32 2147483647, %v2739
    %vm2750 = vcmp.eq.f32.partialorder %v2749, 8.507059e+37
    %v2751 = vand.u32 %v2739, 2147483648
    %v2752 = vor.u32 1.1754944e-38, %v2751
    %v2753 = vsel %vm2750, %v2752, %v2748
    %v2754 = vmul.f32 %v2729, %v2753
    %v2755 = vmin.f32 %v2754, 1.0
    %v2756 = vmax.f32 %v2755, -1.0
    %v2757 = vmul.f32 %v2554, %v2554
    %v2758 = vmin.f32 16.0, %v2757
    %v2759 = vmul.f32 %v2758, 2.1237322e-06
    %v2760 = vadd.f32 %v2759, 0.00028619796
    %v2761 = vmul.f32 %v2758, %v2760
    %v2762 = vadd.f32 %v2761, 0.0036580483
    %v2763 = vmul.f32 %v2758, %v2762
    %v2764 = vadd.f32 %v2763, 0.05243302
    %v2765 = vmul.f32 %v2758, %v2764
    %v2766 = vadd.f32 %v2765, 0.18741608
    %v2767 = vmul.f32 %v2758, %v2766
    %v2768 = vadd.f32 %v2767, 1.1283791
    %v2769 = vmul.f32 %v2554, %v2768
    %v2770 = vmul.f32 %v2758, 3.8918573e-05
    %v2771 = vadd.f32 %v2770, 0.001143296
    %v2772 = vmul.f32 %v2758, %v2771
    %v2773 = vadd.f32 %v2772, 0.014752088
    %v2774 = vmul.f32 %v2758, %v2773
    %v2775 = vadd.f32 %v2774, 0.112945676
    %v2776 = vmul.f32 %v2758, %v2775
    %v2777 = vadd.f32 %v2776, 0.4994258
    %v2778 = vmul.f32 %v2758, %v2777
    %v2779 = vadd.f32 %v2778, 1.0
    %v2780 = vrcp.pop %v2779
    %v2781 = vmul.f32 %v2779, %v2780
    %v2782 = vsub.f32 1.0, %v2781
    %v2783 = vmul.f32 %v2780, %v2782
    %v2784 = vadd.f32 %v2780, %v2783
    %vm2785 = vweird.f32 %v2779
    %vm2786 = vweird.f32 %v2780
    %vm2787 = vmor %vm2785, %vm2786
    %v2788 = vsel %vm2787, %v2780, %v2784
    %v2789 = vand.u32 2147483647, %v2779
    %vm2790 = vcmp.eq.f32.partialorder %v2789, 8.507059e+37
    %v2791 = vand.u32 %v2779, 2147483648
    %v2792 = vor.u32 1.1754944e-38, %v2791
    %v2793 = vsel %vm2790, %v2792, %v2788
    %v2794 = vmul.f32 %v2769, %v2793
    %v2795 = vmin.f32 %v2794, 1.0
    %v2796 = vmax.f32 %v2795, -1.0
    %v2797 = vmul.f32 %v2555, %v2555
    %v2798 = vmin.f32 16.0, %v2797
    %v2799 = vmul.f32 %v2798, 2.1237322e-06
    %v2800 = vadd.f32 %v2799, 0.00028619796
    %v2801 = vmul.f32 %v2798, %v2800
    %v2802 = vadd.f32 %v2801, 0.0036580483
    %v2803 = vmul.f32 %v2798, %v2802
    %v2804 = vadd.f32 %v2803, 0.05243302
    %v2805 = vmul.f32 %v2798, %v2804
    %v2806 = vadd.f32 %v2805, 0.18741608
    %v2807 = vmul.f32 %v2798, %v2806
    %v2808 = vadd.f32 %v2807, 1.1283791
    %v2809 = vmul.f32 %v2555, %v2808
    %v2810 = vmul.f32 %v2798, 3.8918573e-05
    %v2811 = vadd.f32 %v2810, 0.001143296
    %v2812 = vmul.f32 %v2798, %v2811
    %v2813 = vadd.f32 %v2812, 0.014752088
    %v2814 = vmul.f32 %v2798, %v2813
    %v2815 = vadd.f32 %v2814, 0.112945676
    %v2816 = vmul.f32 %v2798, %v2815
    %v2817 = vadd.f32 %v2816, 0.4994258
    %v2818 = vmul.f32 %v2798, %v2817
    %v2819 = vadd.f32 %v2818, 1.0
    %v2820 = vrcp.pop %v2819
    %v2821 = vmul.f32 %v2819, %v2820
    %v2822 = vsub.f32 1.0, %v2821
    %v2823 = vmul.f32 %v2820, %v2822
    %v2824 = vadd.f32 %v2820, %v2823
    %vm2825 = vweird.f32 %v2819
    %vm2826 = vweird.f32 %v2820
    %vm2827 = vmor %vm2825, %vm2826
    %v2828 = vsel %vm2827, %v2820, %v2824
    %v2829 = vand.u32 2147483647, %v2819
    %vm2830 = vcmp.eq.f32.partialorder %v2829, 8.507059e+37
    %v2831 = vand.u32 %v2819, 2147483648
    %v2832 = vor.u32 1.1754944e-38, %v2831
    %v2833 = vsel %vm2830, %v2832, %v2828
    %v2834 = vmul.f32 %v2809, %v2833
    %v2835 = vmin.f32 %v2834, 1.0
    %v2836 = vmax.f32 %v2835, -1.0
    %v2837 = vmul.f32 %v2556, %v2556
    %v2838 = vmin.f32 16.0, %v2837
    %v2839 = vmul.f32 %v2838, 2.1237322e-06
    %v2840 = vadd.f32 %v2839, 0.00028619796
    %v2841 = vmul.f32 %v2838, %v2840
    %v2842 = vadd.f32 %v2841, 0.0036580483
    %v2843 = vmul.f32 %v2838, %v2842
    %v2844 = vadd.f32 %v2843, 0.05243302
    %v2845 = vmul.f32 %v2838, %v2844
    %v2846 = vadd.f32 %v2845, 0.18741608
    %v2847 = vmul.f32 %v2838, %v2846
    %v2848 = vadd.f32 %v2847, 1.1283791
    %v2849 = vmul.f32 %v2556, %v2848
    %v2850 = vmul.f32 %v2838, 3.8918573e-05
    %v2851 = vadd.f32 %v2850, 0.001143296
    %v2852 = vmul.f32 %v2838, %v2851
    %v2853 = vadd.f32 %v2852, 0.014752088
    %v2854 = vmul.f32 %v2838, %v2853
    %v2855 = vadd.f32 %v2854, 0.112945676
    %v2856 = vmul.f32 %v2838, %v2855
    %v2857 = vadd.f32 %v2856, 0.4994258
    %v2858 = vmul.f32 %v2838, %v2857
    %v2859 = vadd.f32 %v2858, 1.0
    %v2860 = vrcp.pop %v2859
    %v2861 = vmul.f32 %v2859, %v2860
    %v2862 = vsub.f32 1.0, %v2861
    %v2863 = vmul.f32 %v2860, %v2862
    %v2864 = vadd.f32 %v2860, %v2863
    %vm2865 = vweird.f32 %v2859
    %vm2866 = vweird.f32 %v2860
    %vm2867 = vmor %vm2865, %vm2866
    %v2868 = vsel %vm2867, %v2860, %v2864
    %v2869 = vand.u32 2147483647, %v2859
    %vm2870 = vcmp.eq.f32.partialorder %v2869, 8.507059e+37
    %v2871 = vand.u32 %v2859, 2147483648
    %v2872 = vor.u32 1.1754944e-38, %v2871
    %v2873 = vsel %vm2870, %v2872, %v2868
    %v2874 = vmul.f32 %v2849, %v2873
    %v2875 = vmin.f32 %v2874, 1.0
    %v2876 = vmax.f32 %v2875, -1.0
    %v2877 = vadd.f32 %v2596, 1.0
    %v2878 = vadd.f32 %v2636, 1.0
    %v2879 = vadd.f32 %v2676, 1.0
    %v2880 = vadd.f32 %v2716, 1.0
    %v2881 = vadd.f32 %v2756, 1.0
    %v2882 = vadd.f32 %v2796, 1.0
    %v2883 = vadd.f32 %v2836, 1.0
    %v2884 = vadd.f32 %v2876, 1.0
    %v2885 = vmul.f32 %v2541, %v2877
    %v2886 = vmul.f32 %v2542, %v2878
    %v2887 = vmul.f32 %v2543, %v2879
    %v2888 = vmul.f32 %v2544, %v2880
    %v2889 = vmul.f32 %v2545, %v2881
    %v2890 = vmul.f32 %v2546, %v2882
    %v2891 = vmul.f32 %v2547, %v2883
    %v2892 = vmul.f32 %v2548, %v2884
    %v2893 = vpack.c.bf16 %v2887, %v2885
    %v2894 = vpack.c.bf16 %v2888, %v2886
    %v2895 = vpack.c.bf16 %v2891, %v2889
    %v2896 = vpack.c.bf16 %v2892, %v2890
    %v2897 = vld [vmem:[%s10] sm:$0xf]
    %v2898 = vld [vmem:[%s10 + $0x4] sm:$0xf]
    %v2899 = vld [vmem:[%s10 + $0x8] sm:$0xf]
    %v2900 = vld [vmem:[%s10 + $0xc] sm:$0xf]
    %v2901 = vld [vmem:[%s10 + $0x10] sm:$0xf]
    %v2902 = vld [vmem:[%s10 + $0x14] sm:$0xf]
    %v2903 = vld [vmem:[%s10 + $0x18] sm:$0xf]
    %v2904 = vld [vmem:[%s10 + $0x1c] sm:$0xf]
    %v2905 = vld [vmem:[%s10 + $0x20] sm:$0xf]
    %v2906 = vld [vmem:[%s10 + $0x24] sm:$0xf]
    %v2907 = vld [vmem:[%s10 + $0x28] sm:$0xf]
    %v2908 = vld [vmem:[%s10 + $0x2c] sm:$0xf]
    %v2909 = vld [vmem:[%s10 + $0x30] sm:$0xf]
    %v2910 = vld [vmem:[%s10 + $0x34] sm:$0xf]
    %v2911 = vld [vmem:[%s10 + $0x38] sm:$0xf]
    %v2912 = vld [vmem:[%s10 + $0x3c] sm:$0xf]
    %v2913 = vld [vmem:[%s10 + $0x40] sm:$0xf]
    %v2914 = vld [vmem:[%s10 + $0x44] sm:$0xf]
    %v2915 = vld [vmem:[%s10 + $0x48] sm:$0xf]
    %v2916 = vld [vmem:[%s10 + $0x4c] sm:$0xf]
    %v2917 = vld [vmem:[%s10 + $0x50] sm:$0xf]
    %v2918 = vld [vmem:[%s10 + $0x54] sm:$0xf]
    %v2919 = vld [vmem:[%s10 + $0x58] sm:$0xf]
    %v2920 = vld [vmem:[%s10 + $0x5c] sm:$0xf]
    %v2921 = vld [vmem:[%s10 + $0x60] sm:$0xf]
    %v2922 = vld [vmem:[%s10 + $0x64] sm:$0xf]
    %v2923 = vld [vmem:[%s10 + $0x68] sm:$0xf]
    %v2924 = vld [vmem:[%s10 + $0x6c] sm:$0xf]
    %v2925 = vld [vmem:[%s10 + $0x70] sm:$0xf]
    %v2926 = vld [vmem:[%s10 + $0x74] sm:$0xf]
    %v2927 = vld [vmem:[%s10 + $0x78] sm:$0xf]
    %v2928 = vld [vmem:[%s10 + $0x7c] sm:$0xf]
    %v2929 = vld [vmem:[%s11] sm:$0x1]
    %v2931 = vperm.slane %v2929, 0
    %v2965 = vunpack.c.l.b16 %v2897
    %v2966 = vunpack.c.l.b16 %v2898
    %v2967 = vunpack.c.l.b16 %v2899
    %v2968 = vunpack.c.l.b16 %v2900
    %v2969 = vunpack.c.l.b16 %v2901
    %v2970 = vunpack.c.l.b16 %v2902
    %v2971 = vunpack.c.l.b16 %v2903
    %v2972 = vunpack.c.l.b16 %v2904
    %v2973 = vunpack.c.l.b16 %v2905
    %v2974 = vunpack.c.l.b16 %v2906
    %v2975 = vunpack.c.l.b16 %v2907
    %v2976 = vunpack.c.l.b16 %v2908
    %v2977 = vunpack.c.l.b16 %v2909
    %v2978 = vunpack.c.l.b16 %v2910
    %v2979 = vunpack.c.l.b16 %v2911
    %v2980 = vunpack.c.l.b16 %v2912
    %v2981 = vunpack.c.l.b16 %v2913
    %v2982 = vunpack.c.l.b16 %v2914
    %v2983 = vunpack.c.l.b16 %v2915
    %v2984 = vunpack.c.l.b16 %v2916
    %v2985 = vunpack.c.l.b16 %v2917
    %v2986 = vunpack.c.l.b16 %v2918
    %v2987 = vunpack.c.l.b16 %v2919
    %v2988 = vunpack.c.l.b16 %v2920
    %v2989 = vunpack.c.l.b16 %v2921
    %v2990 = vunpack.c.l.b16 %v2922
    %v2991 = vunpack.c.l.b16 %v2923
    %v2992 = vunpack.c.l.b16 %v2924
    %v2993 = vunpack.c.l.b16 %v2925
    %v2994 = vunpack.c.l.b16 %v2926
    %v2995 = vunpack.c.l.b16 %v2927
    %v2996 = vunpack.c.l.b16 %v2928
    %v2997 = vpack.c.b16 %v2966, %v2965
    %v2998 = vpack.c.b16 %v2968, %v2967
    %v2999 = vpack.c.b16 %v2970, %v2969
    %v3000 = vpack.c.b16 %v2972, %v2971
    %v3001 = vpack.c.b16 %v2974, %v2973
    %v3002 = vpack.c.b16 %v2976, %v2975
    %v3003 = vpack.c.b16 %v2978, %v2977
    %v3004 = vpack.c.b16 %v2980, %v2979
    %v3005 = vpack.c.b16 %v2982, %v2981
    %v3006 = vpack.c.b16 %v2984, %v2983
    %v3007 = vpack.c.b16 %v2986, %v2985
    %v3008 = vpack.c.b16 %v2988, %v2987
    %v3009 = vpack.c.b16 %v2990, %v2989
    %v3010 = vpack.c.b16 %v2992, %v2991
    %v3011 = vpack.c.b16 %v2994, %v2993
    %v3012 = vpack.c.b16 %v2996, %v2995
    %3029 = vmatpush.bf16.msra.mxu0 %v3004
    %3030 = vmatpush.bf16.msra.mxu0 %v3003
    %3031 = vmatpush.bf16.msra.mxu0 %v3002
    %3032 = vmatpush.bf16.msra.mxu0 %v3001
    %3033 = vmatpush.bf16.msra.mxu0 %v3000
    %3034 = vmatpush.bf16.msra.mxu0 %v2999
    %3035 = vmatpush.bf16.msra.mxu0 %v2998
    %3036 = vmatpush.bf16.msra.mxu0 %v2997
    %3037 = vmatmul.bf16.gmra.mxu0 %v2893
    %v3038 = vpop.f32.mrf.mxu0
    %v3039 = vadd.f32 %v2931, %v3038
    %v3040 = vpop.f32.mrf.mxu0
    %v3041 = vadd.f32 %v2931, %v3040
    %3042 = vmatmul.bf16.gmra.mxu0 %v2895
    %v3043 = vpop.f32.mrf.mxu0
    %v3044 = vadd.f32 %v2931, %v3043
    %v3045 = vpop.f32.mrf.mxu0
    %v3046 = vadd.f32 %v2931, %v3045
    %3047 = vdwg.mxu0
    %3048 = vmatpush.bf16.msra.mxu0 %v3012
    %3049 = vmatpush.bf16.msra.mxu0 %v3011
    %3050 = vmatpush.bf16.msra.mxu0 %v3010
    %3051 = vmatpush.bf16.msra.mxu0 %v3009
    %3052 = vmatpush.bf16.msra.mxu0 %v3008
    %3053 = vmatpush.bf16.msra.mxu0 %v3007
    %3054 = vmatpush.bf16.msra.mxu0 %v3006
    %3055 = vmatpush.bf16.msra.mxu0 %v3005
    %3056 = vmatmul.bf16.gmra.mxu0 %v2894
    %v3057 = vpop.f32.mrf.mxu0
    %v3058 = vadd.f32 %v3039, %v3057
    %v3059 = vpop.f32.mrf.mxu0
    %v3060 = vadd.f32 %v3041, %v3059
    %3061 = vmatmul.bf16.gmra.mxu0 %v2896
    %v3062 = vpop.f32.mrf.mxu0
    %v3063 = vadd.f32 %v3044, %v3062
    %v3064 = vpop.f32.mrf.mxu0
    %v3065 = vadd.f32 %v3046, %v3064
    %3066 = vdwg.mxu0
    %v3067 = vadd.f32 %v2328, %v3058
    %v3068 = vadd.f32 %v2330, %v3060
    %v3069 = vadd.f32 %v2333, %v3063
    %v3070 = vadd.f32 %v2335, %v3065
    %3071 = vst.msk [vmem:[#allocation10] sm:$0xff] %vm107, %v3067
    %3072 = vst.msk [vmem:[#allocation10 + $0x8] sm:$0xff] %vm107, %v3068
    %3073 = vst.msk [vmem:[#allocation10 + $0x10] sm:$0xff] %vm107, %v3069
    %3074 = vst.msk [vmem:[#allocation10 + $0x18] sm:$0xff] %vm107, %v3070
    // Predicated region
    $region66: #{tpu_custom_call.1} parent=1 // pred_check
      _
    $region67: #{tpu_custom_call.1} parent=1 // pred_check_branch
      %3076 = sbr.rel (0) target = $region69
    $region68: #{tpu_custom_call.1} parent=1 // pred_region
      %3078 = vsyncadd [#allocation4], 0
      %s3079 = sshll.u32 [#allocation10], 4
      %s3080 = int_to_ptr.vmem [resolvable:$true] %s3079
      %s3081 = sshll.u32 %s12, 4
      %s3082 = int_to_ptr.hbm [resolvable:$true] %s3081
      %3087 = dma.vmem_to_hbm [thread:$0]  %s3080, 512, %s3082, [#allocation4], 128, 128, 8
    $region69: #{tpu_custom_call.1} parent=1 // pred_fallthru
      _
    // Predicated region
    $region70: #{tpu_custom_call.1} parent=1 // pred_check
      _
    $region71: #{tpu_custom_call.1} parent=1 // pred_check_branch
      %3089 = sbr.rel (0) target = $region73
    $region72: #{tpu_custom_call.1} parent=1 // pred_region
      %3091 = vsyncadd [#allocation12], 0
      %s3092 = sshll.u32 [#allocation11], 4
      %s3093 = int_to_ptr.vmem [resolvable:$true] %s3092
      %s3094 = sshll.u32 %s13, 4
      %s3095 = int_to_ptr.hbm [resolvable:$true] %s3094
      %3100 = dma.vmem_to_hbm [thread:$0]  %s3093, 512, %s3095, [#allocation12], 128, 128, 8
    $region73: #{tpu_custom_call.1} parent=1 // pred_fallthru
      _
    // Predicated region
    $region74: #{tpu_custom_call.1} parent=1 // pred_check
      _
    $region75: #{tpu_custom_call.1} parent=1 // pred_check_branch
      %3102 = sbr.rel (0) target = $region77
    $region76: #{tpu_custom_call.1} parent=1 // pred_region
      %3104 = dma.done [#allocation4], 512
    $region77: #{tpu_custom_call.1} parent=1 // pred_fallthru
      _
    // Predicated region
    $region78: #{tpu_custom_call.1} parent=1 // pred_check
      _
    $region79: #{tpu_custom_call.1} parent=1 // pred_check_branch
      %3106 = sbr.rel (0) target = $region81
    $region80: #{tpu_custom_call.1} parent=1 // pred_region
      %3108 = dma.done [#allocation12], 512
    $region81: #{tpu_custom_call.1} parent=1 // pred_fallthru
      _
    %3109 = vsyncpa [#allocation3], 1
    %3110 = vsyncpa [#allocation6], 1
    %3111 = vsyncpa [#allocation9], 1
    %3112 = vsyncpa [#allocation4], 1
    %3113 = vsyncpa [#allocation12], 1

</llo_original>
